<compile_context>
chip_gen: v5e
topology: v5e:2x2
jax: 0.10.0
libtpu: 0.0.40
codegen_flags: <defaults>
</compile_context>

<pallas_src>
import functools

import jax
import jax.numpy as jnp
from jax.experimental import pallas as pl
from jax.experimental.pallas import tpu as pltpu


VMEM_LIMIT_BYTES = 32 * 1024 * 1024   # explicit scoped-VMEM limit (safe on v5e/v6e/v7x)
COMPUTE_DTYPE = jnp.bfloat16          # MXU-native operand dtype (accumulation stays f32)


# ----------------------------------------------------------------------------
# Kernel 1: ConvTranspose2d(kernel=2, stride=2) as one MXU matmul per image.
# Output rows are ordered (co, kh, kw); the 2x2 sub-pixel interleave happens on
# the host in a single copy pass fused with the zero padding the next conv needs.
# ----------------------------------------------------------------------------
def _deconv2x2_kernel(x_ref, w_ref, b_ref, o_ref):
    # x_ref: (1, Cin, H*W) bf16 ; w_ref: (4*Cout, Cin) bf16 ; b_ref: (4*Cout, 1) f32
    y = jnp.dot(w_ref[...], x_ref[0], preferred_element_type=jnp.float32)
    y = y + b_ref[...]
    o_ref[0] = y.astype(o_ref.dtype)


def deconv2x2(x_flat, w_t, b_col):
    n, cin, hw = x_flat.shape
    r = w_t.shape[0]
    return pl.pallas_call(
        _deconv2x2_kernel,
        out_shape=jax.ShapeDtypeStruct((n, r, hw), COMPUTE_DTYPE),
        grid=(n,),
        in_specs=[
            pl.BlockSpec((1, cin, hw), lambda i: (i, 0, 0)),
            pl.BlockSpec((r, cin), lambda i: (0, 0)),
            pl.BlockSpec((r, 1), lambda i: (0, 0)),
        ],
        out_specs=pl.BlockSpec((1, r, hw), lambda i: (i, 0, 0)),
        compiler_params=pltpu.CompilerParams(
            dimension_semantics=("parallel",),
            vmem_limit_bytes=VMEM_LIMIT_BYTES),
    )(x_flat, w_t, b_col)


# ----------------------------------------------------------------------------
# Kernel 2: fused Conv2d(3x3, pad=1, stride=1) + folded-BN shift + ReLU.
# Works on flattened padded-CHW slabs x:(C, Lin); the 9 taps are lane-shifted
# static windows of the VMEM-resident slab (im2col fused in VMEM, never in HBM).
# Accepts several (x, w) pairs summed into one f32 accumulator, which implements
# the channel concat without materializing it.
# ----------------------------------------------------------------------------
def _conv3x3_kernel(*refs, wp, n_inputs, apply_relu):
    x_refs = refs[:n_inputs]
    w_refs = refs[n_inputs:2 * n_inputs]
    shift_ref, mask_ref, o_ref = refs[2 * n_inputs:]
    _, cout, lout = o_ref.shape
    g = wp + 1                                   # max |tap offset| in flat lane space
    acc = jnp.zeros((cout, lout), jnp.float32)
    for t in range(9):                           # statically unrolled: 9 (or 18) MXU dots
        kh, kw = t // 3, t % 3
        start = g + (kh - 1) * wp + (kw - 1)     # static lane offset for this tap
        for x_ref, w_ref in zip(x_refs, w_refs):
            acc = acc + jnp.dot(w_ref[t], x_ref[0, :, start:start + lout],
                                preferred_element_type=jnp.float32)
    y = acc + shift_ref[...]                     # folded BN shift (+ conv bias)
    if apply_relu:
        y = jnp.maximum(y, 0.0)
    y = y * mask_ref[...]                        # re-zero padding ring / lane margins
    o_ref[0] = y.astype(o_ref.dtype)


def conv3x3_bn_relu(xs, ws, shift, mask, *, wp, out_dtype, apply_relu=True):
    n = xs[0].shape[0]
    cout = ws[0].shape[1]
    lout = mask.shape[1]
    kernel = functools.partial(_conv3x3_kernel, wp=wp, n_inputs=len(xs),
                               apply_relu=apply_relu)
    in_specs = (
        [pl.BlockSpec((1,) + x.shape[1:], lambda i: (i, 0, 0)) for x in xs]
        + [pl.BlockSpec(w.shape, lambda i: (0, 0, 0)) for w in ws]
        + [pl.BlockSpec(shift.shape, lambda i: (0, 0)),
           pl.BlockSpec(mask.shape, lambda i: (0, 0))])
    return pl.pallas_call(
        kernel,
        out_shape=jax.ShapeDtypeStruct((n, cout, lout), out_dtype),
        grid=(n,),
        in_specs=in_specs,
        out_specs=pl.BlockSpec((1, cout, lout), lambda i: (i, 0, 0)),
        compiler_params=pltpu.CompilerParams(
            dimension_semantics=("parallel",),
            vmem_limit_bytes=VMEM_LIMIT_BYTES),
    )(*xs, *ws, shift, mask)


# ----------------------------------------------------------------------------
# Host-side glue (cheap, single-pass prep; no im2col, no concat).
# ----------------------------------------------------------------------------
def _pad_to_flat(x_nchw, pad_lanes, dtype):
    """NCHW -> zero-padded (H+2, W+2) grid, flattened on lanes, plus lane margins."""
    n, c, h, w = x_nchw.shape
    xp = jnp.pad(x_nchw.astype(dtype), ((0, 0), (0, 0), (1, 1), (1, 1)))
    xf = xp.reshape(n, c, (h + 2) * (w + 2))
    return jnp.pad(xf, ((0, 0), (0, 0), (pad_lanes, pad_lanes)))


def _interior_mask(hp, wp, lout, offset):
    """1.0 at lanes that map to interior pixels of the padded hp x wp grid, else 0."""
    j = jnp.arange(lout, dtype=jnp.int32)
    p = j - offset
    r = p // wp
    c = p % wp
    valid = (p >= 0) & (p < hp * wp) & (r >= 1) & (r <= hp - 2) & (c >= 1) & (c <= wp - 2)
    return valid.astype(jnp.float32).reshape(1, lout)


def _fold_bn(conv_w, conv_b, gamma, beta, rmean, rvar, eps=1e-5):
    """(Cout, Cin, 3, 3) -> (9, Cout, Cin) bf16 with BN scale folded in, plus f32 shift."""
    scale = gamma / jnp.sqrt(rvar + eps)
    w = jnp.transpose(conv_w, (2, 3, 0, 1)).reshape(9, conv_w.shape[0], conv_w.shape[1])
    w = (w * scale[None, :, None]).astype(COMPUTE_DTYPE)
    shift = ((conv_b - rmean) * scale + beta).reshape(-1, 1).astype(jnp.float32)
    return w, shift


# ----------------------------------------------------------------------------
# UpBlockForUNetWithResNet50 forward (upsampling_method='conv_transpose').
# Inputs/outputs NCHW (PyTorch convention).
# ----------------------------------------------------------------------------
def up_block_forward(params, up_x_nchw, down_x_nchw):
    n, cin_up, h, w = up_x_nchw.shape
    cup = params["up_w"].shape[1]                 # up-conv out channels
    oh, ow = 2 * h, 2 * w
    hp, wp = oh + 2, ow + 2                       # zero-padded conv grid
    l = hp * wp
    g = wp + 1

    # --- ConvTranspose2d(k=2, s=2): one Pallas matmul per image --------------
    w_t = jnp.transpose(params["up_w"], (1, 2, 3, 0)).reshape(4 * cup, cin_up)
    w_t = w_t.astype(COMPUTE_DTYPE)
    b_col = jnp.repeat(params["up_b"], 4).reshape(4 * cup, 1).astype(jnp.float32)
    x_flat = up_x_nchw.astype(COMPUTE_DTYPE).reshape(n, cin_up, h * w)
    y = deconv2x2(x_flat, w_t, b_col)             # (N, 4*Cup, H*W), rows (co, kh, kw)

    # --- sub-pixel interleave + zero pad into the wide flat-CHW layout -------
    # TODO(synk): the 2x2 pixel-shuffle interleave is one host-side XLA copy pass
    # (fused with the zero padding the next conv needs anyway); an in-kernel
    # strided-store scatter would remove it entirely.
    y = y.reshape(n, cup, 2, 2, h, w)
    y = jnp.transpose(y, (0, 1, 4, 2, 5, 3)).reshape(n, cup, oh, ow)
    up_wide = _pad_to_flat(y, 2 * g, COMPUTE_DTYPE)               # (N, Cup,   L + 4G)
    down_wide = _pad_to_flat(down_x_nchw, 2 * g, COMPUTE_DTYPE)   # (N, Cdown, L + 4G)

    # --- conv block 1: concat-free dual-input fused conv + BN + ReLU ---------
    w1, shift1 = _fold_bn(params["c1_w"], params["c1_b"], params["bn1_g"],
                          params["bn1_b"], params["bn1_m"], params["bn1_v"])
    w1_up, w1_dn = w1[:, :, :cup], w1[:, :, cup:]  # torch.cat([up, down], 1) channel split
    mask1 = _interior_mask(hp, wp, l + 2 * g, g)
    h1 = conv3x3_bn_relu([up_wide, down_wide], [w1_up, w1_dn], shift1, mask1,
                         wp=wp, out_dtype=COMPUTE_DTYPE)          # (N, Cout, L + 2G)

    # --- conv block 2 (h1 already carries the zero ring + lane margins) ------
    w2, shift2 = _fold_bn(params["c2_w"], params["c2_b"], params["bn2_g"],
                          params["bn2_b"], params["bn2_m"], params["bn2_v"])
    mask2 = _interior_mask(hp, wp, l, 0)
    h2 = conv3x3_bn_relu([h1], [w2], shift2, mask2,
                         wp=wp, out_dtype=jnp.float32)            # (N, Cout, L)

    # --- strip the padding ring -> NCHW output --------------------------------
    cout = params["c2_w"].shape[0]
    return h2.reshape(n, cout, hp, wp)[:, :, 1:oh + 1, 1:ow + 1]


def init_params(key, in_channels, out_channels, up_in, up_out):
    ks = jax.random.split(key, 10)
    s = 0.1
    return {
        # ConvTranspose2d(up_in, up_out, 2, 2): weight (Cin, Cout, 2, 2)
        "up_w": s * jax.random.normal(ks[0], (up_in, up_out, 2, 2), jnp.float32),
        "up_b": s * jax.random.normal(ks[1], (up_out,), jnp.float32),
        # ConvBlock 1: Conv2d(in_channels, out_channels, 3) + BN
        "c1_w": s * jax.random.normal(ks[2], (out_channels, in_channels, 3, 3), jnp.float32),
        "c1_b": s * jax.random.normal(ks[3], (out_channels,), jnp.float32),
        "bn1_g": 1.0 + s * jax.random.normal(ks[4], (out_channels,), jnp.float32),
        "bn1_b": s * jax.random.normal(ks[5], (out_channels,), jnp.float32),
        "bn1_m": jnp.zeros((out_channels,), jnp.float32),
        "bn1_v": jnp.ones((out_channels,), jnp.float32),
        # ConvBlock 2: Conv2d(out_channels, out_channels, 3) + BN
        "c2_w": s * jax.random.normal(ks[6], (out_channels, out_channels, 3, 3), jnp.float32),
        "c2_b": s * jax.random.normal(ks[7], (out_channels,), jnp.float32),
        "bn2_g": 1.0 + s * jax.random.normal(ks[8], (out_channels,), jnp.float32),
        "bn2_b": s * jax.random.normal(ks[9], (out_channels,), jnp.float32),
        "bn2_m": jnp.zeros((out_channels,), jnp.float32),
        "bn2_v": jnp.ones((out_channels,), jnp.float32),
    }


# ----------------------------------------------------------------------------
# Pure-JAX f32 reference (lax convs) for the correctness sanity check.
# ----------------------------------------------------------------------------
def reference_forward(params, up_x_nchw, down_x_nchw, eps=1e-5):
    up_x = jnp.transpose(up_x_nchw, (0, 2, 3, 1))
    down_x = jnp.transpose(down_x_nchw, (0, 2, 3, 1))
    N, H, W, Cin = up_x.shape
    Wt = params["up_w"]
    Cout_up = Wt.shape[1]
    y = jnp.einsum("nhwc,cokl->nhwokl", up_x, Wt) + params["up_b"][None, None, None, :, None, None]
    y = jnp.transpose(y, (0, 1, 4, 2, 5, 3)).reshape(N, 2 * H, 2 * W, Cout_up)
    x = jnp.concatenate([y, down_x], axis=-1)

    def cb(x, w, b, g, bt, rm, rv):
        z = jax.lax.conv_general_dilated(
            x, w, window_strides=(1, 1), padding=((1, 1), (1, 1)),
            dimension_numbers=("NHWC", "OIHW", "NHWC")) + b
        z = (z - rm) / jnp.sqrt(rv + eps) * g + bt
        return jnp.maximum(z, 0.0)

    x = cb(x, params["c1_w"], params["c1_b"], params["bn1_g"], params["bn1_b"],
           params["bn1_m"], params["bn1_v"])
    x = cb(x, params["c2_w"], params["c2_b"], params["bn2_g"], params["bn2_b"],
           params["bn2_m"], params["bn2_v"])
    return jnp.transpose(x, (0, 3, 1, 2))


if __name__ == "__main__":
    key = jax.random.PRNGKey(0)
    k_up, k_down, k_param = jax.random.split(key, 3)

    # in_channels = up_conv_out_channels + down_x channels (UNet skip-concat)
    in_channels = 32
    out_channels = 16
    down_channels = in_channels - out_channels           # 16
    up_in, up_out = in_channels, out_channels             # module defaults
    N, H, W = 2, 8, 8

    up_x = jax.random.normal(k_up, (N, in_channels, H, W), jnp.float32)
    down_x = jax.random.normal(k_down, (N, down_channels, 2 * H, 2 * W), jnp.float32)
    params = init_params(k_param, in_channels, out_channels, up_in, up_out)

    out = jax.jit(up_block_forward)(params, up_x, down_x)
    out = jax.block_until_ready(out)
    assert out.shape == (N, out_channels, 2 * H, 2 * W), out.shape

    ref = jax.block_until_ready(reference_forward(params, up_x, down_x))
    # bf16 operands / bf16 intermediates vs f32 reference -> loosened tolerance.
    if not jnp.allclose(out, ref, rtol=1e-1, atol=1e-1):
        raise AssertionError("Pallas kernel output mismatch vs reference")

    print("KERNEL_OK")
</pallas_src>

<mosaic_0001>
module attributes {stable_mosaic.version = 11 : i64} {
  func.func @_deconv2x2_kernel(%arg0: i32, %arg1: memref<1x32x64xbf16, #tpu.memory_space<vmem>>, %arg2: memref<64x32xbf16, #tpu.memory_space<vmem>>, %arg3: memref<64x1xf32, #tpu.memory_space<vmem>>, %arg4: memref<1x64x64xbf16, #tpu.memory_space<vmem>>) attributes {dimension_semantics = [#tpu.dimension_semantics<parallel>], iteration_bounds = array<i64: 2>, scalar_prefetch = 0 : i64, scratch_operands = 0 : i64, tpu.core_type = #tpu.core_type<tc>, window_params = [{transform_indices = @transform_0, window_bounds = array<i64: 1, 32, 64>}, {pipeline_mode = #tpu.pipeline_mode<synchronous>, transform_indices = @transform_1, window_bounds = array<i64: 64, 32>}, {pipeline_mode = #tpu.pipeline_mode<synchronous>, transform_indices = @transform_2, window_bounds = array<i64: 64, 1>}, {transform_indices = @transform_3, window_bounds = array<i64: 1, 64, 64>}]} {
    %c0 = arith.constant 0 : index
    %c0_0 = arith.constant 0 : index
    %0 = vector.load %arg2[%c0, %c0_0] : memref<64x32xbf16, #tpu.memory_space<vmem>>, vector<64x32xbf16>
    %c0_1 = arith.constant 0 : index
    %c0_2 = arith.constant 0 : index
    %c0_3 = arith.constant 0 : index
    %1 = vector.load %arg1[%c0_1, %c0_2, %c0_3] : memref<1x32x64xbf16, #tpu.memory_space<vmem>>, vector<1x32x64xbf16>
    %2 = vector.shape_cast %1 : vector<1x32x64xbf16> to vector<32x64xbf16>
    %cst = arith.constant dense<0.000000e+00> : vector<64x64xf32>
    %3 = tpu.matmul %0, %2, %cst {dimension_numbers = #tpu.dot_dimension_numbers<[1], [0], [0], [1], [0, 0, 1, 1], [], []>} : vector<64x32xbf16>, vector<32x64xbf16>, vector<64x64xf32> -> vector<64x64xf32>
    %c0_4 = arith.constant 0 : index
    %c0_5 = arith.constant 0 : index
    %4 = vector.load %arg3[%c0_4, %c0_5] : memref<64x1xf32, #tpu.memory_space<vmem>>, vector<64x1xf32>
    %5 = vector.broadcast %4 : vector<64x1xf32> to vector<64x64xf32>
    %6 = arith.addf %3, %5 : vector<64x64xf32>
    %7 = arith.truncf %6 : vector<64x64xf32> to vector<64x64xbf16>
    %c0_6 = arith.constant 0 : index
    %c0_7 = arith.constant 0 : index
    %c0_8 = arith.constant 0 : index
    %8 = vector.load %arg4[%c0_6, %c0_7, %c0_8] : memref<1x64x64xbf16, #tpu.memory_space<vmem>>, vector<1x64x64xbf16>
    %9 = vector.shape_cast %8 : vector<1x64x64xbf16> to vector<64x64xbf16>
    %10 = vector.shape_cast %7 : vector<64x64xbf16> to vector<1x64x64xbf16>
    tpu.vector_store %arg4[%c0_6, %c0_7, %c0_8], %10 {strides = array<i32>} : memref<1x64x64xbf16, #tpu.memory_space<vmem>>, vector<1x64x64xbf16>,
    return
  }
  func.func @transform_0(%arg0: i32) -> (i32, i32, i32) {
    %c0_i32 = arith.constant 0 : i32
    %c0_i32_0 = arith.constant 0 : i32
    %c0_i32_1 = arith.constant 0 : i32
    return %arg0, %c0_i32, %c0_i32_0 : i32, i32, i32
  }
  func.func @transform_1(%arg0: i32) -> (i32, i32) {
    %c0_i32 = arith.constant 0 : i32
    %c0_i32_0 = arith.constant 0 : i32
    %c0_i32_1 = arith.constant 0 : i32
    return %c0_i32, %c0_i32_0 : i32, i32
  }
  func.func @transform_2(%arg0: i32) -> (i32, i32) {
    %c0_i32 = arith.constant 0 : i32
    %c0_i32_0 = arith.constant 0 : i32
    %c0_i32_1 = arith.constant 0 : i32
    return %c0_i32, %c0_i32_0 : i32, i32
  }
  func.func @transform_3(%arg0: i32) -> (i32, i32, i32) {
    %c0_i32 = arith.constant 0 : i32
    %c0_i32_0 = arith.constant 0 : i32
    %c0_i32_1 = arith.constant 0 : i32
    return %arg0, %c0_i32, %c0_i32_0 : i32, i32, i32
  }
}

module attributes {stable_mosaic.version = 11 : i64} {
  func.func @_conv3x3_kernel(%arg0: i32, %arg1: memref<1x16x362xbf16, #tpu.memory_space<vmem>>, %arg2: memref<9x16x16xbf16, #tpu.memory_space<vmem>>, %arg3: memref<16x1xf32, #tpu.memory_space<vmem>>, %arg4: memref<1x324xf32, #tpu.memory_space<vmem>>, %arg5: memref<1x16x324xf32, #tpu.memory_space<vmem>>) attributes {dimension_semantics = [#tpu.dimension_semantics<parallel>], iteration_bounds = array<i64: 2>, scalar_prefetch = 0 : i64, scratch_operands = 0 : i64, tpu.core_type = #tpu.core_type<tc>, window_params = [{transform_indices = @transform_0, window_bounds = array<i64: 1, 16, 362>}, {pipeline_mode = #tpu.pipeline_mode<synchronous>, transform_indices = @transform_1, window_bounds = array<i64: 9, 16, 16>}, {pipeline_mode = #tpu.pipeline_mode<synchronous>, transform_indices = @transform_2, window_bounds = array<i64: 16, 1>}, {pipeline_mode = #tpu.pipeline_mode<synchronous>, transform_indices = @transform_3, window_bounds = array<i64: 1, 324>}, {transform_indices = @transform_4, window_bounds = array<i64: 1, 16, 324>}]} {
    %cst = arith.constant 0.000000e+00 : f32
    %0 = vector.broadcast %cst : f32 to vector<16x324xf32>
    %c0 = arith.constant 0 : index
    %c0_0 = arith.constant 0 : index
    %c0_1 = arith.constant 0 : index
    %1 = vector.load %arg2[%c0, %c0_0, %c0_1] : memref<9x16x16xbf16, #tpu.memory_space<vmem>>, vector<1x16x16xbf16>
    %2 = vector.shape_cast %1 : vector<1x16x16xbf16> to vector<16x16xbf16>
    %c0_2 = arith.constant 0 : index
    %c0_3 = arith.constant 0 : index
    %c0_4 = arith.constant 0 : index
    %3 = vector.load %arg1[%c0_2, %c0_3, %c0_4] : memref<1x16x362xbf16, #tpu.memory_space<vmem>>, vector<1x16x324xbf16>
    %4 = vector.shape_cast %3 : vector<1x16x324xbf16> to vector<16x324xbf16>
    %cst_5 = arith.constant dense<0.000000e+00> : vector<16x324xf32>
    %5 = tpu.matmul %2, %4, %cst_5 {dimension_numbers = #tpu.dot_dimension_numbers<[1], [0], [0], [1], [0, 0, 1, 1], [], []>} : vector<16x16xbf16>, vector<16x324xbf16>, vector<16x324xf32> -> vector<16x324xf32>
    %6 = arith.addf %0, %5 : vector<16x324xf32>
    %c1 = arith.constant 1 : index
    %c0_6 = arith.constant 0 : index
    %c0_7 = arith.constant 0 : index
    %7 = vector.load %arg2[%c1, %c0_6, %c0_7] : memref<9x16x16xbf16, #tpu.memory_space<vmem>>, vector<1x16x16xbf16>
    %8 = vector.shape_cast %7 : vector<1x16x16xbf16> to vector<16x16xbf16>
    %c0_8 = arith.constant 0 : index
    %c0_9 = arith.constant 0 : index
    %c1_10 = arith.constant 1 : index
    %9 = vector.load %arg1[%c0_8, %c0_9, %c1_10] : memref<1x16x362xbf16, #tpu.memory_space<vmem>>, vector<1x16x324xbf16>
    %10 = vector.shape_cast %9 : vector<1x16x324xbf16> to vector<16x324xbf16>
    %cst_11 = arith.constant dense<0.000000e+00> : vector<16x324xf32>
    %11 = tpu.matmul %8, %10, %cst_11 {dimension_numbers = #tpu.dot_dimension_numbers<[1], [0], [0], [1], [0, 0, 1, 1], [], []>} : vector<16x16xbf16>, vector<16x324xbf16>, vector<16x324xf32> -> vector<16x324xf32>
    %12 = arith.addf %6, %11 : vector<16x324xf32>
    %c2 = arith.constant 2 : index
    %c0_12 = arith.constant 0 : index
    %c0_13 = arith.constant 0 : index
    %13 = vector.load %arg2[%c2, %c0_12, %c0_13] : memref<9x16x16xbf16, #tpu.memory_space<vmem>>, vector<1x16x16xbf16>
    %14 = vector.shape_cast %13 : vector<1x16x16xbf16> to vector<16x16xbf16>
    %c0_14 = arith.constant 0 : index
    %c0_15 = arith.constant 0 : index
    %c2_16 = arith.constant 2 : index
    %15 = vector.load %arg1[%c0_14, %c0_15, %c2_16] : memref<1x16x362xbf16, #tpu.memory_space<vmem>>, vector<1x16x324xbf16>
    %16 = vector.shape_cast %15 : vector<1x16x324xbf16> to vector<16x324xbf16>
    %cst_17 = arith.constant dense<0.000000e+00> : vector<16x324xf32>
    %17 = tpu.matmul %14, %16, %cst_17 {dimension_numbers = #tpu.dot_dimension_numbers<[1], [0], [0], [1], [0, 0, 1, 1], [], []>} : vector<16x16xbf16>, vector<16x324xbf16>, vector<16x324xf32> -> vector<16x324xf32>
    %18 = arith.addf %12, %17 : vector<16x324xf32>
    %c3 = arith.constant 3 : index
    %c0_18 = arith.constant 0 : index
    %c0_19 = arith.constant 0 : index
    %19 = vector.load %arg2[%c3, %c0_18, %c0_19] : memref<9x16x16xbf16, #tpu.memory_space<vmem>>, vector<1x16x16xbf16>
    %20 = vector.shape_cast %19 : vector<1x16x16xbf16> to vector<16x16xbf16>
    %c0_20 = arith.constant 0 : index
    %c0_21 = arith.constant 0 : index
    %c18 = arith.constant 18 : index
    %21 = vector.load %arg1[%c0_20, %c0_21, %c18] : memref<1x16x362xbf16, #tpu.memory_space<vmem>>, vector<1x16x324xbf16>
    %22 = vector.shape_cast %21 : vector<1x16x324xbf16> to vector<16x324xbf16>
    %cst_22 = arith.constant dense<0.000000e+00> : vector<16x324xf32>
    %23 = tpu.matmul %20, %22, %cst_22 {dimension_numbers = #tpu.dot_dimension_numbers<[1], [0], [0], [1], [0, 0, 1, 1], [], []>} : vector<16x16xbf16>, vector<16x324xbf16>, vector<16x324xf32> -> vector<16x324xf32>
    %24 = arith.addf %18, %23 : vector<16x324xf32>
    %c4 = arith.constant 4 : index
    %c0_23 = arith.constant 0 : index
    %c0_24 = arith.constant 0 : index
    %25 = vector.load %arg2[%c4, %c0_23, %c0_24] : memref<9x16x16xbf16, #tpu.memory_space<vmem>>, vector<1x16x16xbf16>
    %26 = vector.shape_cast %25 : vector<1x16x16xbf16> to vector<16x16xbf16>
    %c0_25 = arith.constant 0 : index
    %c0_26 = arith.constant 0 : index
    %c19 = arith.constant 19 : index
    %27 = vector.load %arg1[%c0_25, %c0_26, %c19] : memref<1x16x362xbf16, #tpu.memory_space<vmem>>, vector<1x16x324xbf16>
    %28 = vector.shape_cast %27 : vector<1x16x324xbf16> to vector<16x324xbf16>
    %cst_27 = arith.constant dense<0.000000e+00> : vector<16x324xf32>
    %29 = tpu.matmul %26, %28, %cst_27 {dimension_numbers = #tpu.dot_dimension_numbers<[1], [0], [0], [1], [0, 0, 1, 1], [], []>} : vector<16x16xbf16>, vector<16x324xbf16>, vector<16x324xf32> -> vector<16x324xf32>
    %30 = arith.addf %24, %29 : vector<16x324xf32>
    %c5 = arith.constant 5 : index
    %c0_28 = arith.constant 0 : index
    %c0_29 = arith.constant 0 : index
    %31 = vector.load %arg2[%c5, %c0_28, %c0_29] : memref<9x16x16xbf16, #tpu.memory_space<vmem>>, vector<1x16x16xbf16>
    %32 = vector.shape_cast %31 : vector<1x16x16xbf16> to vector<16x16xbf16>
    %c0_30 = arith.constant 0 : index
    %c0_31 = arith.constant 0 : index
    %c20 = arith.constant 20 : index
    %33 = vector.load %arg1[%c0_30, %c0_31, %c20] : memref<1x16x362xbf16, #tpu.memory_space<vmem>>, vector<1x16x324xbf16>
    %34 = vector.shape_cast %33 : vector<1x16x324xbf16> to vector<16x324xbf16>
    %cst_32 = arith.constant dense<0.000000e+00> : vector<16x324xf32>
    %35 = tpu.matmul %32, %34, %cst_32 {dimension_numbers = #tpu.dot_dimension_numbers<[1], [0], [0], [1], [0, 0, 1, 1], [], []>} : vector<16x16xbf16>, vector<16x324xbf16>, vector<16x324xf32> -> vector<16x324xf32>
    %36 = arith.addf %30, %35 : vector<16x324xf32>
    %c6 = arith.constant 6 : index
    %c0_33 = arith.constant 0 : index
    %c0_34 = arith.constant 0 : index
    %37 = vector.load %arg2[%c6, %c0_33, %c0_34] : memref<9x16x16xbf16, #tpu.memory_space<vmem>>, vector<1x16x16xbf16>
    %38 = vector.shape_cast %37 : vector<1x16x16xbf16> to vector<16x16xbf16>
    %c0_35 = arith.constant 0 : index
    %c0_36 = arith.constant 0 : index
    %c36 = arith.constant 36 : index
    %39 = vector.load %arg1[%c0_35, %c0_36, %c36] : memref<1x16x362xbf16, #tpu.memory_space<vmem>>, vector<1x16x324xbf16>
    %40 = vector.shape_cast %39 : vector<1x16x324xbf16> to vector<16x324xbf16>
    %cst_37 = arith.constant dense<0.000000e+00> : vector<16x324xf32>
    %41 = tpu.matmul %38, %40, %cst_37 {dimension_numbers = #tpu.dot_dimension_numbers<[1], [0], [0], [1], [0, 0, 1, 1], [], []>} : vector<16x16xbf16>, vector<16x324xbf16>, vector<16x324xf32> -> vector<16x324xf32>
    %42 = arith.addf %36, %41 : vector<16x324xf32>
    %c7 = arith.constant 7 : index
    %c0_38 = arith.constant 0 : index
    %c0_39 = arith.constant 0 : index
    %43 = vector.load %arg2[%c7, %c0_38, %c0_39] : memref<9x16x16xbf16, #tpu.memory_space<vmem>>, vector<1x16x16xbf16>
    %44 = vector.shape_cast %43 : vector<1x16x16xbf16> to vector<16x16xbf16>
    %c0_40 = arith.constant 0 : index
    %c0_41 = arith.constant 0 : index
    %c37 = arith.constant 37 : index
    %45 = vector.load %arg1[%c0_40, %c0_41, %c37] : memref<1x16x362xbf16, #tpu.memory_space<vmem>>, vector<1x16x324xbf16>
    %46 = vector.shape_cast %45 : vector<1x16x324xbf16> to vector<16x324xbf16>
    %cst_42 = arith.constant dense<0.000000e+00> : vector<16x324xf32>
    %47 = tpu.matmul %44, %46, %cst_42 {dimension_numbers = #tpu.dot_dimension_numbers<[1], [0], [0], [1], [0, 0, 1, 1], [], []>} : vector<16x16xbf16>, vector<16x324xbf16>, vector<16x324xf32> -> vector<16x324xf32>
    %48 = arith.addf %42, %47 : vector<16x324xf32>
    %c8 = arith.constant 8 : index
    %c0_43 = arith.constant 0 : index
    %c0_44 = arith.constant 0 : index
    %49 = vector.load %arg2[%c8, %c0_43, %c0_44] : memref<9x16x16xbf16, #tpu.memory_space<vmem>>, vector<1x16x16xbf16>
    %50 = vector.shape_cast %49 : vector<1x16x16xbf16> to vector<16x16xbf16>
    %c0_45 = arith.constant 0 : index
    %c0_46 = arith.constant 0 : index
    %c38 = arith.constant 38 : index
    %51 = vector.load %arg1[%c0_45, %c0_46, %c38] : memref<1x16x362xbf16, #tpu.memory_space<vmem>>, vector<1x16x324xbf16>
    %52 = vector.shape_cast %51 : vector<1x16x324xbf16> to vector<16x324xbf16>
    %cst_47 = arith.constant dense<0.000000e+00> : vector<16x324xf32>
    %53 = tpu.matmul %50, %52, %cst_47 {dimension_numbers = #tpu.dot_dimension_numbers<[1], [0], [0], [1], [0, 0, 1, 1], [], []>} : vector<16x16xbf16>, vector<16x324xbf16>, vector<16x324xf32> -> vector<16x324xf32>
    %54 = arith.addf %48, %53 : vector<16x324xf32>
    %c0_48 = arith.constant 0 : index
    %c0_49 = arith.constant 0 : index
    %55 = vector.load %arg3[%c0_48, %c0_49] : memref<16x1xf32, #tpu.memory_space<vmem>>, vector<16x1xf32>
    %56 = vector.broadcast %55 : vector<16x1xf32> to vector<16x324xf32>
    %57 = arith.addf %54, %56 : vector<16x324xf32>
    %cst_50 = arith.constant 0.000000e+00 : f32
    %58 = vector.broadcast %cst_50 : f32 to vector<16x324xf32>
    %59 = arith.maximumf %57, %58 : vector<16x324xf32>
    %c0_51 = arith.constant 0 : index
    %c0_52 = arith.constant 0 : index
    %60 = vector.load %arg4[%c0_51, %c0_52] : memref<1x324xf32, #tpu.memory_space<vmem>>, vector<1x324xf32>
    %61 = vector.broadcast %60 : vector<1x324xf32> to vector<16x324xf32>
    %62 = arith.mulf %59, %61 : vector<16x324xf32>
    %c0_53 = arith.constant 0 : index
    %c0_54 = arith.constant 0 : index
    %c0_55 = arith.constant 0 : index
    %63 = vector.load %arg5[%c0_53, %c0_54, %c0_55] : memref<1x16x324xf32, #tpu.memory_space<vmem>>, vector<1x16x324xf32>
    %64 = vector.shape_cast %63 : vector<1x16x324xf32> to vector<16x324xf32>
    %65 = vector.shape_cast %62 : vector<16x324xf32> to vector<1x16x324xf32>
    tpu.vector_store %arg5[%c0_53, %c0_54, %c0_55], %65 {strides = array<i32>} : memref<1x16x324xf32, #tpu.memory_space<vmem>>, vector<1x16x324xf32>,
    return
  }
  func.func @transform_0(%arg0: i32) -> (i32, i32, i32) {
    %c0_i32 = arith.constant 0 : i32
    %c0_i32_0 = arith.constant 0 : i32
    %c0_i32_1 = arith.constant 0 : i32
    return %arg0, %c0_i32, %c0_i32_0 : i32, i32, i32
  }
  func.func @transform_1(%arg0: i32) -> (i32, i32, i32) {
    %c0_i32 = arith.constant 0 : i32
    %c0_i32_0 = arith.constant 0 : i32
    %c0_i32_1 = arith.constant 0 : i32
    %c0_i32_2 = arith.constant 0 : i32
    return %c0_i32, %c0_i32_0, %c0_i32_1 : i32, i32, i32
  }
  func.func @transform_2(%arg0: i32) -> (i32, i32) {
    %c0_i32 = arith.constant 0 : i32
    %c0_i32_0 = arith.constant 0 : i32
    %c0_i32_1 = arith.constant 0 : i32
    return %c0_i32, %c0_i32_0 : i32, i32
  }
  func.func @transform_3(%arg0: i32) -> (i32, i32) {
    %c0_i32 = arith.constant 0 : i32
    %c0_i32_0 = arith.constant 0 : i32
    %c0_i32_1 = arith.constant 0 : i32
    return %c0_i32, %c0_i32_0 : i32, i32
  }
  func.func @transform_4(%arg0: i32) -> (i32, i32, i32) {
    %c0_i32 = arith.constant 0 : i32
    %c0_i32_0 = arith.constant 0 : i32
    %c0_i32_1 = arith.constant 0 : i32
    return %arg0, %c0_i32, %c0_i32_0 : i32, i32, i32
  }
}

module attributes {stable_mosaic.version = 11 : i64} {
  func.func @_conv3x3_kernel(%arg0: i32, %arg1: memref<1x16x400xbf16, #tpu.memory_space<vmem>>, %arg2: memref<1x16x400xbf16, #tpu.memory_space<vmem>>, %arg3: memref<9x16x16xbf16, #tpu.memory_space<vmem>>, %arg4: memref<9x16x16xbf16, #tpu.memory_space<vmem>>, %arg5: memref<16x1xf32, #tpu.memory_space<vmem>>, %arg6: memref<1x362xf32, #tpu.memory_space<vmem>>, %arg7: memref<1x16x362xbf16, #tpu.memory_space<vmem>>) attributes {dimension_semantics = [#tpu.dimension_semantics<parallel>], iteration_bounds = array<i64: 2>, scalar_prefetch = 0 : i64, scratch_operands = 0 : i64, tpu.core_type = #tpu.core_type<tc>, window_params = [{transform_indices = @transform_0, window_bounds = array<i64: 1, 16, 400>}, {transform_indices = @transform_1, window_bounds = array<i64: 1, 16, 400>}, {pipeline_mode = #tpu.pipeline_mode<synchronous>, transform_indices = @transform_2, window_bounds = array<i64: 9, 16, 16>}, {pipeline_mode = #tpu.pipeline_mode<synchronous>, transform_indices = @transform_3, window_bounds = array<i64: 9, 16, 16>}, {pipeline_mode = #tpu.pipeline_mode<synchronous>, transform_indices = @transform_4, window_bounds = array<i64: 16, 1>}, {pipeline_mode = #tpu.pipeline_mode<synchronous>, transform_indices = @transform_5, window_bounds = array<i64: 1, 362>}, {transform_indices = @transform_6, window_bounds = array<i64: 1, 16, 362>}]} {
    %cst = arith.constant 0.000000e+00 : f32
    %0 = vector.broadcast %cst : f32 to vector<16x362xf32>
    %c0 = arith.constant 0 : index
    %c0_0 = arith.constant 0 : index
    %c0_1 = arith.constant 0 : index
    %1 = vector.load %arg3[%c0, %c0_0, %c0_1] : memref<9x16x16xbf16, #tpu.memory_space<vmem>>, vector<1x16x16xbf16>
    %2 = vector.shape_cast %1 : vector<1x16x16xbf16> to vector<16x16xbf16>
    %c0_2 = arith.constant 0 : index
    %c0_3 = arith.constant 0 : index
    %c0_4 = arith.constant 0 : index
    %3 = vector.load %arg1[%c0_2, %c0_3, %c0_4] : memref<1x16x400xbf16, #tpu.memory_space<vmem>>, vector<1x16x362xbf16>
    %4 = vector.shape_cast %3 : vector<1x16x362xbf16> to vector<16x362xbf16>
    %cst_5 = arith.constant dense<0.000000e+00> : vector<16x362xf32>
    %5 = tpu.matmul %2, %4, %cst_5 {dimension_numbers = #tpu.dot_dimension_numbers<[1], [0], [0], [1], [0, 0, 1, 1], [], []>} : vector<16x16xbf16>, vector<16x362xbf16>, vector<16x362xf32> -> vector<16x362xf32>
    %6 = arith.addf %0, %5 : vector<16x362xf32>
    %c0_6 = arith.constant 0 : index
    %c0_7 = arith.constant 0 : index
    %c0_8 = arith.constant 0 : index
    %7 = vector.load %arg4[%c0_6, %c0_7, %c0_8] : memref<9x16x16xbf16, #tpu.memory_space<vmem>>, vector<1x16x16xbf16>
    %8 = vector.shape_cast %7 : vector<1x16x16xbf16> to vector<16x16xbf16>
    %c0_9 = arith.constant 0 : index
    %c0_10 = arith.constant 0 : index
    %c0_11 = arith.constant 0 : index
    %9 = vector.load %arg2[%c0_9, %c0_10, %c0_11] : memref<1x16x400xbf16, #tpu.memory_space<vmem>>, vector<1x16x362xbf16>
    %10 = vector.shape_cast %9 : vector<1x16x362xbf16> to vector<16x362xbf16>
    %cst_12 = arith.constant dense<0.000000e+00> : vector<16x362xf32>
    %11 = tpu.matmul %8, %10, %cst_12 {dimension_numbers = #tpu.dot_dimension_numbers<[1], [0], [0], [1], [0, 0, 1, 1], [], []>} : vector<16x16xbf16>, vector<16x362xbf16>, vector<16x362xf32> -> vector<16x362xf32>
    %12 = arith.addf %6, %11 : vector<16x362xf32>
    %c1 = arith.constant 1 : index
    %c0_13 = arith.constant 0 : index
    %c0_14 = arith.constant 0 : index
    %13 = vector.load %arg3[%c1, %c0_13, %c0_14] : memref<9x16x16xbf16, #tpu.memory_space<vmem>>, vector<1x16x16xbf16>
    %14 = vector.shape_cast %13 : vector<1x16x16xbf16> to vector<16x16xbf16>
    %c0_15 = arith.constant 0 : index
    %c0_16 = arith.constant 0 : index
    %c1_17 = arith.constant 1 : index
    %15 = vector.load %arg1[%c0_15, %c0_16, %c1_17] : memref<1x16x400xbf16, #tpu.memory_space<vmem>>, vector<1x16x362xbf16>
    %16 = vector.shape_cast %15 : vector<1x16x362xbf16> to vector<16x362xbf16>
    %cst_18 = arith.constant dense<0.000000e+00> : vector<16x362xf32>
    %17 = tpu.matmul %14, %16, %cst_18 {dimension_numbers = #tpu.dot_dimension_numbers<[1], [0], [0], [1], [0, 0, 1, 1], [], []>} : vector<16x16xbf16>, vector<16x362xbf16>, vector<16x362xf32> -> vector<16x362xf32>
    %18 = arith.addf %12, %17 : vector<16x362xf32>
    %c1_19 = arith.constant 1 : index
    %c0_20 = arith.constant 0 : index
    %c0_21 = arith.constant 0 : index
    %19 = vector.load %arg4[%c1_19, %c0_20, %c0_21] : memref<9x16x16xbf16, #tpu.memory_space<vmem>>, vector<1x16x16xbf16>
    %20 = vector.shape_cast %19 : vector<1x16x16xbf16> to vector<16x16xbf16>
    %c0_22 = arith.constant 0 : index
    %c0_23 = arith.constant 0 : index
    %c1_24 = arith.constant 1 : index
    %21 = vector.load %arg2[%c0_22, %c0_23, %c1_24] : memref<1x16x400xbf16, #tpu.memory_space<vmem>>, vector<1x16x362xbf16>
    %22 = vector.shape_cast %21 : vector<1x16x362xbf16> to vector<16x362xbf16>
    %cst_25 = arith.constant dense<0.000000e+00> : vector<16x362xf32>
    %23 = tpu.matmul %20, %22, %cst_25 {dimension_numbers = #tpu.dot_dimension_numbers<[1], [0], [0], [1], [0, 0, 1, 1], [], []>} : vector<16x16xbf16>, vector<16x362xbf16>, vector<16x362xf32> -> vector<16x362xf32>
    %24 = arith.addf %18, %23 : vector<16x362xf32>
    %c2 = arith.constant 2 : index
    %c0_26 = arith.constant 0 : index
    %c0_27 = arith.constant 0 : index
    %25 = vector.load %arg3[%c2, %c0_26, %c0_27] : memref<9x16x16xbf16, #tpu.memory_space<vmem>>, vector<1x16x16xbf16>
    %26 = vector.shape_cast %25 : vector<1x16x16xbf16> to vector<16x16xbf16>
    %c0_28 = arith.constant 0 : index
    %c0_29 = arith.constant 0 : index
    %c2_30 = arith.constant 2 : index
    %27 = vector.load %arg1[%c0_28, %c0_29, %c2_30] : memref<1x16x400xbf16, #tpu.memory_space<vmem>>, vector<1x16x362xbf16>
    %28 = vector.shape_cast %27 : vector<1x16x362xbf16> to vector<16x362xbf16>
    %cst_31 = arith.constant dense<0.000000e+00> : vector<16x362xf32>
    %29 = tpu.matmul %26, %28, %cst_31 {dimension_numbers = #tpu.dot_dimension_numbers<[1], [0], [0], [1], [0, 0, 1, 1], [], []>} : vector<16x16xbf16>, vector<16x362xbf16>, vector<16x362xf32> -> vector<16x362xf32>
    %30 = arith.addf %24, %29 : vector<16x362xf32>
    %c2_32 = arith.constant 2 : index
    %c0_33 = arith.constant 0 : index
    %c0_34 = arith.constant 0 : index
    %31 = vector.load %arg4[%c2_32, %c0_33, %c0_34] : memref<9x16x16xbf16, #tpu.memory_space<vmem>>, vector<1x16x16xbf16>
    %32 = vector.shape_cast %31 : vector<1x16x16xbf16> to vector<16x16xbf16>
    %c0_35 = arith.constant 0 : index
    %c0_36 = arith.constant 0 : index
    %c2_37 = arith.constant 2 : index
    %33 = vector.load %arg2[%c0_35, %c0_36, %c2_37] : memref<1x16x400xbf16, #tpu.memory_space<vmem>>, vector<1x16x362xbf16>
    %34 = vector.shape_cast %33 : vector<1x16x362xbf16> to vector<16x362xbf16>
    %cst_38 = arith.constant dense<0.000000e+00> : vector<16x362xf32>
    %35 = tpu.matmul %32, %34, %cst_38 {dimension_numbers = #tpu.dot_dimension_numbers<[1], [0], [0], [1], [0, 0, 1, 1], [], []>} : vector<16x16xbf16>, vector<16x362xbf16>, vector<16x362xf32> -> vector<16x362xf32>
    %36 = arith.addf %30, %35 : vector<16x362xf32>
    %c3 = arith.constant 3 : index
    %c0_39 = arith.constant 0 : index
    %c0_40 = arith.constant 0 : index
    %37 = vector.load %arg3[%c3, %c0_39, %c0_40] : memref<9x16x16xbf16, #tpu.memory_space<vmem>>, vector<1x16x16xbf16>
    %38 = vector.shape_cast %37 : vector<1x16x16xbf16> to vector<16x16xbf16>
    %c0_41 = arith.constant 0 : index
    %c0_42 = arith.constant 0 : index
    %c18 = arith.constant 18 : index
    %39 = vector.load %arg1[%c0_41, %c0_42, %c18] : memref<1x16x400xbf16, #tpu.memory_space<vmem>>, vector<1x16x362xbf16>
    %40 = vector.shape_cast %39 : vector<1x16x362xbf16> to vector<16x362xbf16>
    %cst_43 = arith.constant dense<0.000000e+00> : vector<16x362xf32>
    %41 = tpu.matmul %38, %40, %cst_43 {dimension_numbers = #tpu.dot_dimension_numbers<[1], [0], [0], [1], [0, 0, 1, 1], [], []>} : vector<16x16xbf16>, vector<16x362xbf16>, vector<16x362xf32> -> vector<16x362xf32>
    %42 = arith.addf %36, %41 : vector<16x362xf32>
    %c3_44 = arith.constant 3 : index
    %c0_45 = arith.constant 0 : index
    %c0_46 = arith.constant 0 : index
    %43 = vector.load %arg4[%c3_44, %c0_45, %c0_46] : memref<9x16x16xbf16, #tpu.memory_space<vmem>>, vector<1x16x16xbf16>
    %44 = vector.shape_cast %43 : vector<1x16x16xbf16> to vector<16x16xbf16>
    %c0_47 = arith.constant 0 : index
    %c0_48 = arith.constant 0 : index
    %c18_49 = arith.constant 18 : index
    %45 = vector.load %arg2[%c0_47, %c0_48, %c18_49] : memref<1x16x400xbf16, #tpu.memory_space<vmem>>, vector<1x16x362xbf16>
    %46 = vector.shape_cast %45 : vector<1x16x362xbf16> to vector<16x362xbf16>
    %cst_50 = arith.constant dense<0.000000e+00> : vector<16x362xf32>
    %47 = tpu.matmul %44, %46, %cst_50 {dimension_numbers = #tpu.dot_dimension_numbers<[1], [0], [0], [1], [0, 0, 1, 1], [], []>} : vector<16x16xbf16>, vector<16x362xbf16>, vector<16x362xf32> -> vector<16x362xf32>
    %48 = arith.addf %42, %47 : vector<16x362xf32>
    %c4 = arith.constant 4 : index
    %c0_51 = arith.constant 0 : index
    %c0_52 = arith.constant 0 : index
    %49 = vector.load %arg3[%c4, %c0_51, %c0_52] : memref<9x16x16xbf16, #tpu.memory_space<vmem>>, vector<1x16x16xbf16>
    %50 = vector.shape_cast %49 : vector<1x16x16xbf16> to vector<16x16xbf16>
    %c0_53 = arith.constant 0 : index
    %c0_54 = arith.constant 0 : index
    %c19 = arith.constant 19 : index
    %51 = vector.load %arg1[%c0_53, %c0_54, %c19] : memref<1x16x400xbf16, #tpu.memory_space<vmem>>, vector<1x16x362xbf16>
    %52 = vector.shape_cast %51 : vector<1x16x362xbf16> to vector<16x362xbf16>
    %cst_55 = arith.constant dense<0.000000e+00> : vector<16x362xf32>
    %53 = tpu.matmul %50, %52, %cst_55 {dimension_numbers = #tpu.dot_dimension_numbers<[1], [0], [0], [1], [0, 0, 1, 1], [], []>} : vector<16x16xbf16>, vector<16x362xbf16>, vector<16x362xf32> -> vector<16x362xf32>
    %54 = arith.addf %48, %53 : vector<16x362xf32>
    %c4_56 = arith.constant 4 : index
    %c0_57 = arith.constant 0 : index
    %c0_58 = arith.constant 0 : index
    %55 = vector.load %arg4[%c4_56, %c0_57, %c0_58] : memref<9x16x16xbf16, #tpu.memory_space<vmem>>, vector<1x16x16xbf16>
    %56 = vector.shape_cast %55 : vector<1x16x16xbf16> to vector<16x16xbf16>
    %c0_59 = arith.constant 0 : index
    %c0_60 = arith.constant 0 : index
    %c19_61 = arith.constant 19 : index
    %57 = vector.load %arg2[%c0_59, %c0_60, %c19_61] : memref<1x16x400xbf16, #tpu.memory_space<vmem>>, vector<1x16x362xbf16>
    %58 = vector.shape_cast %57 : vector<1x16x362xbf16> to vector<16x362xbf16>
    %cst_62 = arith.constant dense<0.000000e+00> : vector<16x362xf32>
    %59 = tpu.matmul %56, %58, %cst_62 {dimension_numbers = #tpu.dot_dimension_numbers<[1], [0], [0], [1], [0, 0, 1, 1], [], []>} : vector<16x16xbf16>, vector<16x362xbf16>, vector<16x362xf32> -> vector<16x362xf32>
    %60 = arith.addf %54, %59 : vector<16x362xf32>
    %c5 = arith.constant 5 : index
    %c0_63 = arith.constant 0 : index
    %c0_64 = arith.constant 0 : index
    %61 = vector.load %arg3[%c5, %c0_63, %c0_64] : memref<9x16x16xbf16, #tpu.memory_space<vmem>>, vector<1x16x16xbf16>
    %62 = vector.shape_cast %61 : vector<1x16x16xbf16> to vector<16x16xbf16>
    %c0_65 = arith.constant 0 : index
    %c0_66 = arith.constant 0 : index
    %c20 = arith.constant 20 : index
    %63 = vector.load %arg1[%c0_65, %c0_66, %c20] : memref<1x16x400xbf16, #tpu.memory_space<vmem>>, vector<1x16x362xbf16>
    %64 = vector.shape_cast %63 : vector<1x16x362xbf16> to vector<16x362xbf16>
    %cst_67 = arith.constant dense<0.000000e+00> : vector<16x362xf32>
    %65 = tpu.matmul %62, %64, %cst_67 {dimension_numbers = #tpu.dot_dimension_numbers<[1], [0], [0], [1], [0, 0, 1, 1], [], []>} : vector<16x16xbf16>, vector<16x362xbf16>, vector<16x362xf32> -> vector<16x362xf32>
    %66 = arith.addf %60, %65 : vector<16x362xf32>
    %c5_68 = arith.constant 5 : index
    %c0_69 = arith.constant 0 : index
    %c0_70 = arith.constant 0 : index
    %67 = vector.load %arg4[%c5_68, %c0_69, %c0_70] : memref<9x16x16xbf16, #tpu.memory_space<vmem>>, vector<1x16x16xbf16>
    %68 = vector.shape_cast %67 : vector<1x16x16xbf16> to vector<16x16xbf16>
    %c0_71 = arith.constant 0 : index
    %c0_72 = arith.constant 0 : index
    %c20_73 = arith.constant 20 : index
    %69 = vector.load %arg2[%c0_71, %c0_72, %c20_73] : memref<1x16x400xbf16, #tpu.memory_space<vmem>>, vector<1x16x362xbf16>
    %70 = vector.shape_cast %69 : vector<1x16x362xbf16> to vector<16x362xbf16>
    %cst_74 = arith.constant dense<0.000000e+00> : vector<16x362xf32>
    %71 = tpu.matmul %68, %70, %cst_74 {dimension_numbers = #tpu.dot_dimension_numbers<[1], [0], [0], [1], [0, 0, 1, 1], [], []>} : vector<16x16xbf16>, vector<16x362xbf16>, vector<16x362xf32> -> vector<16x362xf32>
    %72 = arith.addf %66, %71 : vector<16x362xf32>
    %c6 = arith.constant 6 : index
    %c0_75 = arith.constant 0 : index
    %c0_76 = arith.constant 0 : index
    %73 = vector.load %arg3[%c6, %c0_75, %c0_76] : memref<9x16x16xbf16, #tpu.memory_space<vmem>>, vector<1x16x16xbf16>
    %74 = vector.shape_cast %73 : vector<1x16x16xbf16> to vector<16x16xbf16>
    %c0_77 = arith.constant 0 : index
    %c0_78 = arith.constant 0 : index
    %c36 = arith.constant 36 : index
    %75 = vector.load %arg1[%c0_77, %c0_78, %c36] : memref<1x16x400xbf16, #tpu.memory_space<vmem>>, vector<1x16x362xbf16>
    %76 = vector.shape_cast %75 : vector<1x16x362xbf16> to vector<16x362xbf16>
    %cst_79 = arith.constant dense<0.000000e+00> : vector<16x362xf32>
    %77 = tpu.matmul %74, %76, %cst_79 {dimension_numbers = #tpu.dot_dimension_numbers<[1], [0], [0], [1], [0, 0, 1, 1], [], []>} : vector<16x16xbf16>, vector<16x362xbf16>, vector<16x362xf32> -> vector<16x362xf32>
    %78 = arith.addf %72, %77 : vector<16x362xf32>
    %c6_80 = arith.constant 6 : index
    %c0_81 = arith.constant 0 : index
    %c0_82 = arith.constant 0 : index
    %79 = vector.load %arg4[%c6_80, %c0_81, %c0_82] : memref<9x16x16xbf16, #tpu.memory_space<vmem>>, vector<1x16x16xbf16>
    %80 = vector.shape_cast %79 : vector<1x16x16xbf16> to vector<16x16xbf16>
    %c0_83 = arith.constant 0 : index
    %c0_84 = arith.constant 0 : index
    %c36_85 = arith.constant 36 : index
    %81 = vector.load %arg2[%c0_83, %c0_84, %c36_85] : memref<1x16x400xbf16, #tpu.memory_space<vmem>>, vector<1x16x362xbf16>
    %82 = vector.shape_cast %81 : vector<1x16x362xbf16> to vector<16x362xbf16>
    %cst_86 = arith.constant dense<0.000000e+00> : vector<16x362xf32>
    %83 = tpu.matmul %80, %82, %cst_86 {dimension_numbers = #tpu.dot_dimension_numbers<[1], [0], [0], [1], [0, 0, 1, 1], [], []>} : vector<16x16xbf16>, vector<16x362xbf16>, vector<16x362xf32> -> vector<16x362xf32>
    %84 = arith.addf %78, %83 : vector<16x362xf32>
    %c7 = arith.constant 7 : index
    %c0_87 = arith.constant 0 : index
    %c0_88 = arith.constant 0 : index
    %85 = vector.load %arg3[%c7, %c0_87, %c0_88] : memref<9x16x16xbf16, #tpu.memory_space<vmem>>, vector<1x16x16xbf16>
    %86 = vector.shape_cast %85 : vector<1x16x16xbf16> to vector<16x16xbf16>
    %c0_89 = arith.constant 0 : index
    %c0_90 = arith.constant 0 : index
    %c37 = arith.constant 37 : index
    %87 = vector.load %arg1[%c0_89, %c0_90, %c37] : memref<1x16x400xbf16, #tpu.memory_space<vmem>>, vector<1x16x362xbf16>
    %88 = vector.shape_cast %87 : vector<1x16x362xbf16> to vector<16x362xbf16>
    %cst_91 = arith.constant dense<0.000000e+00> : vector<16x362xf32>
    %89 = tpu.matmul %86, %88, %cst_91 {dimension_numbers = #tpu.dot_dimension_numbers<[1], [0], [0], [1], [0, 0, 1, 1], [], []>} : vector<16x16xbf16>, vector<16x362xbf16>, vector<16x362xf32> -> vector<16x362xf32>
    %90 = arith.addf %84, %89 : vector<16x362xf32>
    %c7_92 = arith.constant 7 : index
    %c0_93 = arith.constant 0 : index
    %c0_94 = arith.constant 0 : index
    %91 = vector.load %arg4[%c7_92, %c0_93, %c0_94] : memref<9x16x16xbf16, #tpu.memory_space<vmem>>, vector<1x16x16xbf16>
    %92 = vector.shape_cast %91 : vector<1x16x16xbf16> to vector<16x16xbf16>
    %c0_95 = arith.constant 0 : index
    %c0_96 = arith.constant 0 : index
    %c37_97 = arith.constant 37 : index
    %93 = vector.load %arg2[%c0_95, %c0_96, %c37_97] : memref<1x16x400xbf16, #tpu.memory_space<vmem>>, vector<1x16x362xbf16>
    %94 = vector.shape_cast %93 : vector<1x16x362xbf16> to vector<16x362xbf16>
    %cst_98 = arith.constant dense<0.000000e+00> : vector<16x362xf32>
    %95 = tpu.matmul %92, %94, %cst_98 {dimension_numbers = #tpu.dot_dimension_numbers<[1], [0], [0], [1], [0, 0, 1, 1], [], []>} : vector<16x16xbf16>, vector<16x362xbf16>, vector<16x362xf32> -> vector<16x362xf32>
    %96 = arith.addf %90, %95 : vector<16x362xf32>
    %c8 = arith.constant 8 : index
    %c0_99 = arith.constant 0 : index
    %c0_100 = arith.constant 0 : index
    %97 = vector.load %arg3[%c8, %c0_99, %c0_100] : memref<9x16x16xbf16, #tpu.memory_space<vmem>>, vector<1x16x16xbf16>
    %98 = vector.shape_cast %97 : vector<1x16x16xbf16> to vector<16x16xbf16>
    %c0_101 = arith.constant 0 : index
    %c0_102 = arith.constant 0 : index
    %c38 = arith.constant 38 : index
    %99 = vector.load %arg1[%c0_101, %c0_102, %c38] : memref<1x16x400xbf16, #tpu.memory_space<vmem>>, vector<1x16x362xbf16>
    %100 = vector.shape_cast %99 : vector<1x16x362xbf16> to vector<16x362xbf16>
    %cst_103 = arith.constant dense<0.000000e+00> : vector<16x362xf32>
    %101 = tpu.matmul %98, %100, %cst_103 {dimension_numbers = #tpu.dot_dimension_numbers<[1], [0], [0], [1], [0, 0, 1, 1], [], []>} : vector<16x16xbf16>, vector<16x362xbf16>, vector<16x362xf32> -> vector<16x362xf32>
    %102 = arith.addf %96, %101 : vector<16x362xf32>
    %c8_104 = arith.constant 8 : index
    %c0_105 = arith.constant 0 : index
    %c0_106 = arith.constant 0 : index
    %103 = vector.load %arg4[%c8_104, %c0_105, %c0_106] : memref<9x16x16xbf16, #tpu.memory_space<vmem>>, vector<1x16x16xbf16>
    %104 = vector.shape_cast %103 : vector<1x16x16xbf16> to vector<16x16xbf16>
    %c0_107 = arith.constant 0 : index
    %c0_108 = arith.constant 0 : index
    %c38_109 = arith.constant 38 : index
    %105 = vector.load %arg2[%c0_107, %c0_108, %c38_109] : memref<1x16x400xbf16, #tpu.memory_space<vmem>>, vector<1x16x362xbf16>
    %106 = vector.shape_cast %105 : vector<1x16x362xbf16> to vector<16x362xbf16>
    %cst_110 = arith.constant dense<0.000000e+00> : vector<16x362xf32>
    %107 = tpu.matmul %104, %106, %cst_110 {dimension_numbers = #tpu.dot_dimension_numbers<[1], [0], [0], [1], [0, 0, 1, 1], [], []>} : vector<16x16xbf16>, vector<16x362xbf16>, vector<16x362xf32> -> vector<16x362xf32>
    %108 = arith.addf %102, %107 : vector<16x362xf32>
    %c0_111 = arith.constant 0 : index
    %c0_112 = arith.constant 0 : index
    %109 = vector.load %arg5[%c0_111, %c0_112] : memref<16x1xf32, #tpu.memory_space<vmem>>, vector<16x1xf32>
    %110 = vector.broadcast %109 : vector<16x1xf32> to vector<16x362xf32>
    %111 = arith.addf %108, %110 : vector<16x362xf32>
    %cst_113 = arith.constant 0.000000e+00 : f32
    %112 = vector.broadcast %cst_113 : f32 to vector<16x362xf32>
    %113 = arith.maximumf %111, %112 : vector<16x362xf32>
    %c0_114 = arith.constant 0 : index
    %c0_115 = arith.constant 0 : index
    %114 = vector.load %arg6[%c0_114, %c0_115] : memref<1x362xf32, #tpu.memory_space<vmem>>, vector<1x362xf32>
    %115 = vector.broadcast %114 : vector<1x362xf32> to vector<16x362xf32>
    %116 = arith.mulf %113, %115 : vector<16x362xf32>
    %117 = arith.truncf %116 : vector<16x362xf32> to vector<16x362xbf16>
    %c0_116 = arith.constant 0 : index
    %c0_117 = arith.constant 0 : index
    %c0_118 = arith.constant 0 : index
    %118 = vector.load %arg7[%c0_116, %c0_117, %c0_118] : memref<1x16x362xbf16, #tpu.memory_space<vmem>>, vector<1x16x362xbf16>
    %119 = vector.shape_cast %118 : vector<1x16x362xbf16> to vector<16x362xbf16>
    %120 = vector.shape_cast %117 : vector<16x362xbf16> to vector<1x16x362xbf16>
    tpu.vector_store %arg7[%c0_116, %c0_117, %c0_118], %120 {strides = array<i32>} : memref<1x16x362xbf16, #tpu.memory_space<vmem>>, vector<1x16x362xbf16>,
    return
  }
  func.func @transform_0(%arg0: i32) -> (i32, i32, i32) {
    %c0_i32 = arith.constant 0 : i32
    %c0_i32_0 = arith.constant 0 : i32
    %c0_i32_1 = arith.constant 0 : i32
    return %arg0, %c0_i32, %c0_i32_0 : i32, i32, i32
  }
  func.func @transform_1(%arg0: i32) -> (i32, i32, i32) {
    %c0_i32 = arith.constant 0 : i32
    %c0_i32_0 = arith.constant 0 : i32
    %c0_i32_1 = arith.constant 0 : i32
    return %arg0, %c0_i32, %c0_i32_0 : i32, i32, i32
  }
  func.func @transform_2(%arg0: i32) -> (i32, i32, i32) {
    %c0_i32 = arith.constant 0 : i32
    %c0_i32_0 = arith.constant 0 : i32
    %c0_i32_1 = arith.constant 0 : i32
    %c0_i32_2 = arith.constant 0 : i32
    return %c0_i32, %c0_i32_0, %c0_i32_1 : i32, i32, i32
  }
  func.func @transform_3(%arg0: i32) -> (i32, i32, i32) {
    %c0_i32 = arith.constant 0 : i32
    %c0_i32_0 = arith.constant 0 : i32
    %c0_i32_1 = arith.constant 0 : i32
    %c0_i32_2 = arith.constant 0 : i32
    return %c0_i32, %c0_i32_0, %c0_i32_1 : i32, i32, i32
  }
  func.func @transform_4(%arg0: i32) -> (i32, i32) {
    %c0_i32 = arith.constant 0 : i32
    %c0_i32_0 = arith.constant 0 : i32
    %c0_i32_1 = arith.constant 0 : i32
    return %c0_i32, %c0_i32_0 : i32, i32
  }
  func.func @transform_5(%arg0: i32) -> (i32, i32) {
    %c0_i32 = arith.constant 0 : i32
    %c0_i32_0 = arith.constant 0 : i32
    %c0_i32_1 = arith.constant 0 : i32
    return %c0_i32, %c0_i32_0 : i32, i32
  }
  func.func @transform_6(%arg0: i32) -> (i32, i32, i32) {
    %c0_i32 = arith.constant 0 : i32
    %c0_i32_0 = arith.constant 0 : i32
    %c0_i32_1 = arith.constant 0 : i32
    return %arg0, %c0_i32, %c0_i32_0 : i32, i32, i32
  }
}

</mosaic_0001>

<llo_original>
// kernel: up_block_forward.3
$region0: #{up_block_forward.3}
  #allocation0 [shape = 'u32[]', space=smem, size = 0x4, offset = 0x4, fixed_abs, tag = 'smem constant byte address 0x4 - core index']
  #allocation1 [shape = 'u32[72,128]{1,0:T(1,128)}', space=vmem, size = 0x9000, scoped, tag = 'internal scratch']
  %s0 = inlined_call_operand.vmem [shape: bf16[2,32,64], index: 0, kind: input, shape index: {}]
  %s1 = inlined_call_operand.vmem [shape: bf16[64,32], index: 1, kind: input, shape index: {}]
  %s2 = inlined_call_operand.vmem [shape: f32[64,1], index: 2, kind: input, shape index: {}]
  %s3 = inlined_call_operand.vmem [shape: bf16[2,64,64], index: 3, kind: output, shape index: {}]
  %s4 = sld [smem:[#allocation0]]
  $region45: #{up_block_forward.3} parent=0
    _
  %s6 = ssub.s32 1, %s4
  %s7 = scalar_select 0, %s6, %s4
  loop: start=0, step=1, limit=4
  $region2: #{up_block_forward.3} parent=0 // loop_pre_header
    _
  $region3: #{up_block_forward.3} parent=0 // loop_header
    %s9 = sphi 0, %s13
    %p10 = scmp.ge.s32.totalorder %s9, 4
    %s19 = sphi 0, %s21
    %s22 = sphi 0, %s19
    %s23 = sphi 0, %s22
    %s39 = sphi 0, %s23
    %s43 = sphi 0, %s43
    %s45 = sphi 0, %s43
    %s46 = sphi 0, %s45
    %s60 = sphi 0, %s46
    %s64 = sphi 0, %s64
    %s66 = sphi 0, %s64
    %s67 = sphi 0, %s66
    %s81 = sphi 0, %s67
    %s87 = sphi 0, %s89
    %s90 = sphi 0, %s87
    %s91 = sphi 0, %s90
    %s107 = sphi 0, %s91
  $region4: #{up_block_forward.3} parent=0 // loop_header_branch
    %12 = sbr.rel (%p10) target = $region8
  $region5: #{up_block_forward.3} parent=0 // loop_body
    %s14 = ssub.s32 %s9, 1
    %s15 = ssub.s32 %s9, 2
    %s16 = sadd.s32 %s9, 1
    %s17 = ssub.s32 %s9, %s16
    %p18 = scmp.eq.s32.totalorder %s17, 0
    %s20 = sadd.s32 %s19, 1
    %s21 = scalar_select %p18, %s19, %s20
    %p24 = pneg %p18
    %p25 = scmp.eq.s32.totalorder %s9, 1
    %p26 = por %p24, %p25
    %p27 = scmp.ne.s32.totalorder %s19, %s22
    %p28 = scmp.eq.s32.totalorder %s9, 0
    %p29 = por %p27, %p28
    %p30 = scmp.ne.s32.totalorder %s19, %s22
    %p31 = scmp.eq.s32.totalorder %s14, 1
    %p32 = por %p30, %p31
    %p33 = scmp.ne.s32.totalorder %s22, %s23
    %p34 = scmp.eq.s32.totalorder %s14, 0
    %p35 = por %p33, %p34
    %p36 = scmp.ne.s32.totalorder %s22, %s23
    %p37 = scmp.eq.s32.totalorder %s15, 1
    %p38 = por %p36, %p37
    %p40 = scmp.ne.s32.totalorder %s23, %s39
    %p41 = scmp.eq.s32.totalorder %s15, 0
    %p42 = por %p40, %p41
    %s44 = sadd.s32 %s43, 1
    %p47 = scmp.eq.s32.totalorder %s9, 1
    %p48 = scmp.ne.s32.totalorder %s43, %s45
    %p49 = scmp.eq.s32.totalorder %s9, 0
    %p50 = por %p48, %p49
    %p51 = scmp.ne.s32.totalorder %s43, %s45
    %p52 = scmp.eq.s32.totalorder %s14, 1
    %p53 = por %p51, %p52
    %p54 = scmp.ne.s32.totalorder %s45, %s46
    %p55 = scmp.eq.s32.totalorder %s14, 0
    %p56 = por %p54, %p55
    %p57 = scmp.ne.s32.totalorder %s45, %s46
    %p58 = scmp.eq.s32.totalorder %s15, 1
    %p59 = por %p57, %p58
    %p61 = scmp.ne.s32.totalorder %s46, %s60
    %p62 = scmp.eq.s32.totalorder %s15, 0
    %p63 = por %p61, %p62
    %s65 = sadd.s32 %s64, 1
    %p68 = scmp.eq.s32.totalorder %s9, 1
    %p69 = scmp.ne.s32.totalorder %s64, %s66
    %p70 = scmp.eq.s32.totalorder %s9, 0
    %p71 = por %p69, %p70
    %p72 = scmp.ne.s32.totalorder %s64, %s66
    %p73 = scmp.eq.s32.totalorder %s14, 1
    %p74 = por %p72, %p73
    %p75 = scmp.ne.s32.totalorder %s66, %s67
    %p76 = scmp.eq.s32.totalorder %s14, 0
    %p77 = por %p75, %p76
    %p78 = scmp.ne.s32.totalorder %s66, %s67
    %p79 = scmp.eq.s32.totalorder %s15, 1
    %p80 = por %p78, %p79
    %p82 = scmp.ne.s32.totalorder %s67, %s81
    %p83 = scmp.eq.s32.totalorder %s15, 0
    %p84 = por %p82, %p83
    %s85 = ssub.s32 %s9, %s16
    %p86 = scmp.eq.s32.totalorder %s85, 0
    %s88 = sadd.s32 %s87, 1
    %s89 = scalar_select %p86, %s87, %s88
    %p92 = pneg %p86
    %p93 = scmp.eq.s32.totalorder %s9, 1
    %p94 = por %p92, %p93
    %p95 = scmp.ne.s32.totalorder %s87, %s90
    %p96 = scmp.eq.s32.totalorder %s9, 0
    %p97 = por %p95, %p96
    %p98 = scmp.ne.s32.totalorder %s87, %s90
    %p99 = scmp.eq.s32.totalorder %s14, 1
    %p100 = por %p98, %p99
    %p101 = scmp.ne.s32.totalorder %s90, %s91
    %p102 = scmp.eq.s32.totalorder %s14, 0
    %p103 = por %p101, %p102
    %p104 = scmp.ne.s32.totalorder %s90, %s91
    %p105 = scmp.eq.s32.totalorder %s15, 1
    %p106 = por %p104, %p105
    %p108 = scmp.ne.s32.totalorder %s91, %s107
    %p109 = scmp.eq.s32.totalorder %s15, 0
    %p110 = por %p108, %p109
    %p111 = scmp.le.s32.totalorder 1, %s9
    %p112 = scmp.lt.s32.totalorder %s9, 3
    %p113 = pnand %p111, %p112
    %p114 = pneg %p113
    // Predicated region
    $region9: #{up_block_forward.3} parent=5 // pred_check
      _
    $region10: #{up_block_forward.3} parent=5 // pred_check_branch
      %116 = sbr.rel (%p113) target = $region12
    $region11: #{up_block_forward.3} parent=5 // pred_region
      %s117 = ssub.s32 %s9, 1
      // Predicated region
      $region13: #{up_block_forward.3} parent=11 // pred_check
        %p118 = pneg %p56
      $region14: #{up_block_forward.3} parent=11 // pred_check_branch
        %120 = sbr.rel (%p118) target = $region16
      $region15: #{up_block_forward.3} parent=11 // pred_region
        _
      $region16: #{up_block_forward.3} parent=11 // pred_fallthru
        _
      // Predicated region
      $region17: #{up_block_forward.3} parent=11 // pred_check
        %p121 = pneg %p77
      $region18: #{up_block_forward.3} parent=11 // pred_check_branch
        %123 = sbr.rel (%p121) target = $region20
      $region19: #{up_block_forward.3} parent=11 // pred_region
        _
      $region20: #{up_block_forward.3} parent=11 // pred_fallthru
        _
    $region12: #{up_block_forward.3} parent=5 // pred_fallthru
      _
    %p124 = scmp.lt.s32.totalorder %s9, 2
    // Predicated region
    $region21: #{up_block_forward.3} parent=5 // pred_check
      %p125 = pneg %p124
    $region22: #{up_block_forward.3} parent=5 // pred_check_branch
      %127 = sbr.rel (%p125) target = $region24
    $region23: #{up_block_forward.3} parent=5 // pred_region
      // Predicated region
      $region25: #{up_block_forward.3} parent=23 // pred_check
        %p128 = pneg %p29
      $region26: #{up_block_forward.3} parent=23 // pred_check_branch
        %130 = sbr.rel (%p128) target = $region28
      $region27: #{up_block_forward.3} parent=23 // pred_region
        %p131 = scmp.lt.s32.totalorder %s9, 1
        %s132 = scalar_select %p131, %s9, 1
        %s133 = smul.addr %s132, 4
        %s134 = smul.addr %s133, 4
        %s135 = scalar_lea.vmem %s0, %s134
      $region28: #{up_block_forward.3} parent=23 // pred_fallthru
        _
    $region24: #{up_block_forward.3} parent=5 // pred_fallthru
      _
    %p136 = scmp.le.s32.totalorder 1, %s9
    %p137 = scmp.lt.s32.totalorder %s9, 3
    %p138 = pnand %p136, %p137
    %p139 = pneg %p138
    // Predicated region
    $region29: #{up_block_forward.3} parent=5 // pred_check
      _
    $region30: #{up_block_forward.3} parent=5 // pred_check_branch
      %141 = sbr.rel (%p138) target = $region32
    $region31: #{up_block_forward.3} parent=5 // pred_region
      %s142 = ssub.s32 %s9, 1
      %p143 = scmp.lt.s32.totalorder %s14, 1
      %s144 = scalar_select %p143, %s14, 1
      %s145 = smul.addr %s144, 4
      %s146 = smul.addr %s145, 4
      %s147 = scalar_lea.vmem %s0, %s146
      %p148 = pneg %p35
      %p149 = pneg %p32
      %p150 = pneg %p56
      %p151 = pneg %p53
      %p152 = pneg %p77
      %p153 = pneg %p74
      %p154 = pneg %p103
      %p155 = pneg %p100
      %p156 = scmp.lt.s32.totalorder %s14, 1
      %s157 = scalar_select %p156, %s14, 1
      %s158 = smul.addr %s157, 8
      %s159 = smul.addr %s158, 4
      %s160 = scalar_lea.vmem %s3, %s159
      %p161 = scmp.lt.s32.totalorder %s14, 1
      %s162 = scalar_select %p161, %s14, 1
      %s163 = smul.addr %s162, 4
      %s164 = smul.addr %s163, 4
      %s165 = scalar_lea.vmem %s0, %s164
      %p166 = scmp.lt.s32.totalorder %s14, 1
      %s167 = scalar_select %p166, %s14, 1
      %s168 = smul.addr %s167, 8
      %s169 = smul.addr %s168, 4
      %s170 = scalar_lea.vmem %s3, %s169
      %v172 = vld [vmem:[%s1] sm:$0xf]
      %v173 = vld [vmem:[%s1 + $0x4] sm:$0xf]
      %v174 = vld [vmem:[%s1 + $0x8] sm:$0xf]
      %v175 = vld [vmem:[%s1 + $0xc] sm:$0xf]
      %v176 = vld [vmem:[%s1 + $0x10] sm:$0xf]
      %v177 = vld [vmem:[%s1 + $0x14] sm:$0xf]
      %v178 = vld [vmem:[%s1 + $0x18] sm:$0xf]
      %v179 = vld [vmem:[%s1 + $0x1c] sm:$0xf]
      %v180 = vld [vmem:[%s165] sm:$0xf]
      %v181 = vld [vmem:[%s165 + $0x4] sm:$0xf]
      %v182 = vld [vmem:[%s165 + $0x8] sm:$0xf]
      %v183 = vld [vmem:[%s165 + $0xc] sm:$0xf]
      %v184 = vld [vmem:[%s2] sm:$0xff]
      %v185 = vld [vmem:[%s2 + $0x8] sm:$0xff]
      %v186 = vld [vmem:[%s2 + $0x10] sm:$0xff]
      %v187 = vld [vmem:[%s2 + $0x18] sm:$0xff]
      %v188 = vld [vmem:[%s2 + $0x20] sm:$0xff]
      %v189 = vld [vmem:[%s2 + $0x28] sm:$0xff]
      %v190 = vld [vmem:[%s2 + $0x30] sm:$0xff]
      %v191 = vld [vmem:[%s2 + $0x38] sm:$0xff]
      %193 = vset.pattern.permute.xlu0 0
      %194 = vperm.xlu0 %193, %v184
      %v195 = vpop.permute.xlu0 %194
      %198 = vset.pattern.permute.xlu0 0
      %199 = vperm.xlu0 %198, %v185
      %v200 = vpop.permute.xlu0 %199
      %203 = vset.pattern.permute.xlu0 0
      %204 = vperm.xlu0 %203, %v186
      %v205 = vpop.permute.xlu0 %204
      %208 = vset.pattern.permute.xlu0 0
      %209 = vperm.xlu0 %208, %v187
      %v210 = vpop.permute.xlu0 %209
      %213 = vset.pattern.permute.xlu0 0
      %214 = vperm.xlu0 %213, %v188
      %v215 = vpop.permute.xlu0 %214
      %218 = vset.pattern.permute.xlu0 0
      %219 = vperm.xlu0 %218, %v189
      %v220 = vpop.permute.xlu0 %219
      %223 = vset.pattern.permute.xlu0 0
      %224 = vperm.xlu0 %223, %v190
      %v225 = vpop.permute.xlu0 %224
      %228 = vset.pattern.permute.xlu0 0
      %229 = vperm.xlu0 %228, %v191
      %v230 = vpop.permute.xlu0 %229
      %v240 = vunpack.c.l.b16 %v172
      %v241 = vunpack.c.l.b16 %v173
      %v242 = vunpack.c.l.b16 %v174
      %v243 = vunpack.c.l.b16 %v175
      %v244 = vunpack.c.l.b16 %v176
      %v245 = vunpack.c.l.b16 %v177
      %v246 = vunpack.c.l.b16 %v178
      %v247 = vunpack.c.l.b16 %v179
      %v248 = vpack.c.b16 %v241, %v240
      %v249 = vpack.c.b16 %v243, %v242
      %v250 = vpack.c.b16 %v245, %v244
      %v251 = vpack.c.b16 %v247, %v246
      %v256 = vunpack.c.l.b16 %v180
      %v257 = vunpack.c.l.b16 %v181
      %v258 = vunpack.c.l.b16 %v182
      %v259 = vunpack.c.l.b16 %v183
      %v260 = vpack.c.b16 %v257, %v256
      %v261 = vpack.c.b16 %v259, %v258
      %vm264 = vcmask 261120
      %v266 = vsel %vm264, %v248, 0
      %v269 = vsel %vm264, %v249, 0
      %v272 = vsel %vm264, %v250, 0
      %v275 = vsel %vm264, %v251, 0
      %277 = vmatpush.bf16.msra.mxu0 0
      %278 = vmatpush.bf16.msra.mxu0 0
      %279 = vmatpush.bf16.msra.mxu0 0
      %280 = vmatpush.bf16.msra.mxu0 0
      %281 = vmatpush.bf16.msra.mxu0 0
      %282 = vmatpush.bf16.msra.mxu0 0
      %283 = vmatpush.bf16.msra.mxu0 %v261
      %284 = vmatpush.bf16.msra.mxu0 %v260
      %285 = vmatmul.bf16.gmra.mxu0 %v266
      %v286 = vpop.f32.mrf.mxu0
      %v287 = vadd.f32 %v195, %v286
      %v288 = vpop.f32.mrf.mxu0
      %v289 = vadd.f32 %v200, %v288
      %290 = vmatmul.bf16.gmra.mxu0 %v269
      %v291 = vpop.f32.mrf.mxu0
      %v292 = vadd.f32 %v205, %v291
      %v293 = vpop.f32.mrf.mxu0
      %v294 = vadd.f32 %v210, %v293
      %295 = vmatmul.bf16.gmra.mxu0 %v272
      %v296 = vpop.f32.mrf.mxu0
      %v297 = vadd.f32 %v215, %v296
      %v298 = vpop.f32.mrf.mxu0
      %v299 = vadd.f32 %v220, %v298
      %300 = vmatmul.bf16.gmra.mxu0 %v275
      %v301 = vpop.f32.mrf.mxu0
      %v302 = vadd.f32 %v225, %v301
      %v303 = vpop.f32.mrf.mxu0
      %v304 = vadd.f32 %v230, %v303
      %305 = vdwg.mxu0
      %v306 = vpack.c.bf16 %v287, %v287
      %v307 = vpack.c.bf16 %v289, %v289
      %v308 = vpack.c.bf16 %v292, %v292
      %v309 = vpack.c.bf16 %v294, %v294
      %v310 = vpack.c.bf16 %v297, %v297
      %v311 = vpack.c.bf16 %v299, %v299
      %v312 = vpack.c.bf16 %v302, %v302
      %v313 = vpack.c.bf16 %v304, %v304
      %vm314 = vcmask 519168
      %315 = vst.msk [vmem:[%s170] sm:$0xf] %vm314, %v306
      %316 = vst.msk [vmem:[%s170 + $0x4] sm:$0xf] %vm314, %v307
      %317 = vst.msk [vmem:[%s170 + $0x8] sm:$0xf] %vm314, %v308
      %318 = vst.msk [vmem:[%s170 + $0xc] sm:$0xf] %vm314, %v309
      %319 = vst.msk [vmem:[%s170 + $0x10] sm:$0xf] %vm314, %v310
      %320 = vst.msk [vmem:[%s170 + $0x14] sm:$0xf] %vm314, %v311
      %321 = vst.msk [vmem:[%s170 + $0x18] sm:$0xf] %vm314, %v312
      %322 = vst.msk [vmem:[%s170 + $0x1c] sm:$0xf] %vm314, %v313
      %p323 = scmp.lt.s32.totalorder %s14, 1
      %s324 = scalar_select %p323, %s14, 1
      %s325 = smul.addr %s324, 8
      %s326 = smul.addr %s325, 4
      %s327 = scalar_lea.vmem %s3, %s326
      // Predicated region
      $region33: #{up_block_forward.3} parent=31 // pred_check
        %p328 = pneg %p100
      $region34: #{up_block_forward.3} parent=31 // pred_check_branch
        %330 = sbr.rel (%p328) target = $region36
      $region35: #{up_block_forward.3} parent=31 // pred_region
        _
      $region36: #{up_block_forward.3} parent=31 // pred_fallthru
        _
    $region32: #{up_block_forward.3} parent=5 // pred_fallthru
      _
    %p331 = scmp.le.s32.totalorder 2, %s9
    // Predicated region
    $region37: #{up_block_forward.3} parent=5 // pred_check
      %p332 = pneg %p331
    $region38: #{up_block_forward.3} parent=5 // pred_check_branch
      %334 = sbr.rel (%p332) target = $region40
    $region39: #{up_block_forward.3} parent=5 // pred_region
      %s335 = ssub.s32 %s9, 2
      // Predicated region
      $region41: #{up_block_forward.3} parent=39 // pred_check
        %p336 = pneg %p106
      $region42: #{up_block_forward.3} parent=39 // pred_check_branch
        %338 = sbr.rel (%p336) target = $region44
      $region43: #{up_block_forward.3} parent=39 // pred_region
        %p339 = scmp.lt.s32.totalorder %s15, 1
        %s340 = scalar_select %p339, %s15, 1
        %s341 = smul.addr %s340, 8
        %s342 = smul.addr %s341, 4
        %s343 = scalar_lea.vmem %s3, %s342
      $region44: #{up_block_forward.3} parent=39 // pred_fallthru
        _
    $region40: #{up_block_forward.3} parent=5 // pred_fallthru
      _
  $region6: #{up_block_forward.3} parent=0 // loop_footer
    %s13 = sadd.s32 1, %s9
  $region7: #{up_block_forward.3} parent=0 // loop_footer_branch
    %8 = sbr.rel target = $region3
  $region8: #{up_block_forward.3} parent=0 // loop_exit
    _

// kernel: up_block_forward.5
$region0: #{up_block_forward.5}
  #allocation0 [shape = 'u32[]', space=smem, size = 0x4, offset = 0x4, fixed_abs, tag = 'smem constant byte address 0x4 - core index']
  #allocation1 [shape = 'u32[72,128]{1,0:T(1,128)}', space=vmem, size = 0x9000, scoped, tag = 'internal scratch']
  %s0 = inlined_call_operand.vmem [shape: bf16[2,16,362], index: 0, kind: input, shape index: {}]
  %s1 = inlined_call_operand.vmem [shape: bf16[9,16,16], index: 1, kind: input, shape index: {}]
  %s2 = inlined_call_operand.vmem [shape: f32[16,1], index: 2, kind: input, shape index: {}]
  %s3 = inlined_call_operand.vmem [shape: f32[1,324], index: 3, kind: input, shape index: {}]
  %s4 = inlined_call_operand.vmem [shape: f32[2,16,324], index: 4, kind: output, shape index: {}]
  %s5 = sld [smem:[#allocation0]]
  $region49: #{up_block_forward.5} parent=0
    _
  %s7 = ssub.s32 1, %s5
  %s8 = scalar_select 0, %s7, %s5
  loop: start=0, step=1, limit=4
  $region2: #{up_block_forward.5} parent=0 // loop_pre_header
    _
  $region3: #{up_block_forward.5} parent=0 // loop_header
    %s10 = sphi 0, %s14
    %p11 = scmp.ge.s32.totalorder %s10, 4
    %s20 = sphi 0, %s22
    %s23 = sphi 0, %s20
    %s24 = sphi 0, %s23
    %s40 = sphi 0, %s24
    %s44 = sphi 0, %s44
    %s46 = sphi 0, %s44
    %s47 = sphi 0, %s46
    %s61 = sphi 0, %s47
    %s65 = sphi 0, %s65
    %s67 = sphi 0, %s65
    %s68 = sphi 0, %s67
    %s82 = sphi 0, %s68
    %s86 = sphi 0, %s86
    %s88 = sphi 0, %s86
    %s89 = sphi 0, %s88
    %s103 = sphi 0, %s89
    %s109 = sphi 0, %s111
    %s112 = sphi 0, %s109
    %s113 = sphi 0, %s112
    %s129 = sphi 0, %s113
  $region4: #{up_block_forward.5} parent=0 // loop_header_branch
    %13 = sbr.rel (%p11) target = $region8
  $region5: #{up_block_forward.5} parent=0 // loop_body
    %s15 = ssub.s32 %s10, 1
    %s16 = ssub.s32 %s10, 2
    %s17 = sadd.s32 %s10, 1
    %s18 = ssub.s32 %s10, %s17
    %p19 = scmp.eq.s32.totalorder %s18, 0
    %s21 = sadd.s32 %s20, 1
    %s22 = scalar_select %p19, %s20, %s21
    %p25 = pneg %p19
    %p26 = scmp.eq.s32.totalorder %s10, 1
    %p27 = por %p25, %p26
    %p28 = scmp.ne.s32.totalorder %s20, %s23
    %p29 = scmp.eq.s32.totalorder %s10, 0
    %p30 = por %p28, %p29
    %p31 = scmp.ne.s32.totalorder %s20, %s23
    %p32 = scmp.eq.s32.totalorder %s15, 1
    %p33 = por %p31, %p32
    %p34 = scmp.ne.s32.totalorder %s23, %s24
    %p35 = scmp.eq.s32.totalorder %s15, 0
    %p36 = por %p34, %p35
    %p37 = scmp.ne.s32.totalorder %s23, %s24
    %p38 = scmp.eq.s32.totalorder %s16, 1
    %p39 = por %p37, %p38
    %p41 = scmp.ne.s32.totalorder %s24, %s40
    %p42 = scmp.eq.s32.totalorder %s16, 0
    %p43 = por %p41, %p42
    %s45 = sadd.s32 %s44, 1
    %p48 = scmp.eq.s32.totalorder %s10, 1
    %p49 = scmp.ne.s32.totalorder %s44, %s46
    %p50 = scmp.eq.s32.totalorder %s10, 0
    %p51 = por %p49, %p50
    %p52 = scmp.ne.s32.totalorder %s44, %s46
    %p53 = scmp.eq.s32.totalorder %s15, 1
    %p54 = por %p52, %p53
    %p55 = scmp.ne.s32.totalorder %s46, %s47
    %p56 = scmp.eq.s32.totalorder %s15, 0
    %p57 = por %p55, %p56
    %p58 = scmp.ne.s32.totalorder %s46, %s47
    %p59 = scmp.eq.s32.totalorder %s16, 1
    %p60 = por %p58, %p59
    %p62 = scmp.ne.s32.totalorder %s47, %s61
    %p63 = scmp.eq.s32.totalorder %s16, 0
    %p64 = por %p62, %p63
    %s66 = sadd.s32 %s65, 1
    %p69 = scmp.eq.s32.totalorder %s10, 1
    %p70 = scmp.ne.s32.totalorder %s65, %s67
    %p71 = scmp.eq.s32.totalorder %s10, 0
    %p72 = por %p70, %p71
    %p73 = scmp.ne.s32.totalorder %s65, %s67
    %p74 = scmp.eq.s32.totalorder %s15, 1
    %p75 = por %p73, %p74
    %p76 = scmp.ne.s32.totalorder %s67, %s68
    %p77 = scmp.eq.s32.totalorder %s15, 0
    %p78 = por %p76, %p77
    %p79 = scmp.ne.s32.totalorder %s67, %s68
    %p80 = scmp.eq.s32.totalorder %s16, 1
    %p81 = por %p79, %p80
    %p83 = scmp.ne.s32.totalorder %s68, %s82
    %p84 = scmp.eq.s32.totalorder %s16, 0
    %p85 = por %p83, %p84
    %s87 = sadd.s32 %s86, 1
    %p90 = scmp.eq.s32.totalorder %s10, 1
    %p91 = scmp.ne.s32.totalorder %s86, %s88
    %p92 = scmp.eq.s32.totalorder %s10, 0
    %p93 = por %p91, %p92
    %p94 = scmp.ne.s32.totalorder %s86, %s88
    %p95 = scmp.eq.s32.totalorder %s15, 1
    %p96 = por %p94, %p95
    %p97 = scmp.ne.s32.totalorder %s88, %s89
    %p98 = scmp.eq.s32.totalorder %s15, 0
    %p99 = por %p97, %p98
    %p100 = scmp.ne.s32.totalorder %s88, %s89
    %p101 = scmp.eq.s32.totalorder %s16, 1
    %p102 = por %p100, %p101
    %p104 = scmp.ne.s32.totalorder %s89, %s103
    %p105 = scmp.eq.s32.totalorder %s16, 0
    %p106 = por %p104, %p105
    %s107 = ssub.s32 %s10, %s17
    %p108 = scmp.eq.s32.totalorder %s107, 0
    %s110 = sadd.s32 %s109, 1
    %s111 = scalar_select %p108, %s109, %s110
    %p114 = pneg %p108
    %p115 = scmp.eq.s32.totalorder %s10, 1
    %p116 = por %p114, %p115
    %p117 = scmp.ne.s32.totalorder %s109, %s112
    %p118 = scmp.eq.s32.totalorder %s10, 0
    %p119 = por %p117, %p118
    %p120 = scmp.ne.s32.totalorder %s109, %s112
    %p121 = scmp.eq.s32.totalorder %s15, 1
    %p122 = por %p120, %p121
    %p123 = scmp.ne.s32.totalorder %s112, %s113
    %p124 = scmp.eq.s32.totalorder %s15, 0
    %p125 = por %p123, %p124
    %p126 = scmp.ne.s32.totalorder %s112, %s113
    %p127 = scmp.eq.s32.totalorder %s16, 1
    %p128 = por %p126, %p127
    %p130 = scmp.ne.s32.totalorder %s113, %s129
    %p131 = scmp.eq.s32.totalorder %s16, 0
    %p132 = por %p130, %p131
    %p133 = scmp.le.s32.totalorder 1, %s10
    %p134 = scmp.lt.s32.totalorder %s10, 3
    %p135 = pnand %p133, %p134
    %p136 = pneg %p135
    // Predicated region
    $region9: #{up_block_forward.5} parent=5 // pred_check
      _
    $region10: #{up_block_forward.5} parent=5 // pred_check_branch
      %138 = sbr.rel (%p135) target = $region12
    $region11: #{up_block_forward.5} parent=5 // pred_region
      %s139 = ssub.s32 %s10, 1
      // Predicated region
      $region13: #{up_block_forward.5} parent=11 // pred_check
        %p140 = pneg %p57
      $region14: #{up_block_forward.5} parent=11 // pred_check_branch
        %142 = sbr.rel (%p140) target = $region16
      $region15: #{up_block_forward.5} parent=11 // pred_region
        _
      $region16: #{up_block_forward.5} parent=11 // pred_fallthru
        _
      // Predicated region
      $region17: #{up_block_forward.5} parent=11 // pred_check
        %p143 = pneg %p78
      $region18: #{up_block_forward.5} parent=11 // pred_check_branch
        %145 = sbr.rel (%p143) target = $region20
      $region19: #{up_block_forward.5} parent=11 // pred_region
        _
      $region20: #{up_block_forward.5} parent=11 // pred_fallthru
        _
      // Predicated region
      $region21: #{up_block_forward.5} parent=11 // pred_check
        %p146 = pneg %p99
      $region22: #{up_block_forward.5} parent=11 // pred_check_branch
        %148 = sbr.rel (%p146) target = $region24
      $region23: #{up_block_forward.5} parent=11 // pred_region
        _
      $region24: #{up_block_forward.5} parent=11 // pred_fallthru
        _
    $region12: #{up_block_forward.5} parent=5 // pred_fallthru
      _
    %p149 = scmp.lt.s32.totalorder %s10, 2
    // Predicated region
    $region25: #{up_block_forward.5} parent=5 // pred_check
      %p150 = pneg %p149
    $region26: #{up_block_forward.5} parent=5 // pred_check_branch
      %152 = sbr.rel (%p150) target = $region28
    $region27: #{up_block_forward.5} parent=5 // pred_region
      // Predicated region
      $region29: #{up_block_forward.5} parent=27 // pred_check
        %p153 = pneg %p30
      $region30: #{up_block_forward.5} parent=27 // pred_check_branch
        %155 = sbr.rel (%p153) target = $region32
      $region31: #{up_block_forward.5} parent=27 // pred_region
        %p156 = scmp.lt.s32.totalorder %s10, 1
        %s157 = scalar_select %p156, %s10, 1
        %s158 = smul.addr %s157, 6
        %s159 = smul.addr %s158, 4
        %s160 = scalar_lea.vmem %s0, %s159
      $region32: #{up_block_forward.5} parent=27 // pred_fallthru
        _
    $region28: #{up_block_forward.5} parent=5 // pred_fallthru
      _
    %p161 = scmp.le.s32.totalorder 1, %s10
    %p162 = scmp.lt.s32.totalorder %s10, 3
    %p163 = pnand %p161, %p162
    %p164 = pneg %p163
    // Predicated region
    $region33: #{up_block_forward.5} parent=5 // pred_check
      _
    $region34: #{up_block_forward.5} parent=5 // pred_check_branch
      %166 = sbr.rel (%p163) target = $region36
    $region35: #{up_block_forward.5} parent=5 // pred_region
      %s167 = ssub.s32 %s10, 1
      %p168 = scmp.lt.s32.totalorder %s15, 1
      %s169 = scalar_select %p168, %s15, 1
      %s170 = smul.addr %s169, 6
      %s171 = smul.addr %s170, 4
      %s172 = scalar_lea.vmem %s0, %s171
      %p173 = pneg %p36
      %p174 = pneg %p33
      %p175 = pneg %p57
      %p176 = pneg %p54
      %p177 = pneg %p78
      %p178 = pneg %p75
      %p179 = pneg %p99
      %p180 = pneg %p96
      %p181 = pneg %p125
      %p182 = pneg %p122
      %p183 = scmp.lt.s32.totalorder %s15, 1
      %s184 = scalar_select %p183, %s15, 1
      %s185 = smul.addr %s184, 6
      %s186 = smul.addr %s185, 8
      %s187 = scalar_lea.vmem %s4, %s186
      %p188 = scmp.lt.s32.totalorder %s15, 1
      %s189 = scalar_select %p188, %s15, 1
      %s190 = smul.addr %s189, 6
      %s191 = smul.addr %s190, 4
      %s192 = scalar_lea.vmem %s0, %s191
      %p193 = scmp.lt.s32.totalorder %s15, 1
      %s194 = scalar_select %p193, %s15, 1
      %s195 = smul.addr %s194, 6
      %s196 = smul.addr %s195, 8
      %s197 = scalar_lea.vmem %s4, %s196
      %v199 = vld [vmem:[%s1] sm:$0xf]
      %v200 = vld [vmem:[%s1 + $0x4] sm:$0xf]
      %v201 = vld [vmem:[%s192] sm:$0xff]
      %v202 = vld [vmem:[%s192 + $0x8] sm:$0xf]
      %v203 = vld [vmem:[%s192 + $0xc] sm:$0xff]
      %v204 = vld [vmem:[%s192 + $0x14] sm:$0xf]
      %s205 = scalar_lea.vmem %s1, 8
      %v206 = vld [vmem:[%s205] sm:$0xf]
      %v207 = vld [vmem:[%s205 + $0x4] sm:$0xf]
      %v210 = vunpack.c.l.b16 %v206
      %v211 = vunpack.c.l.b16 %v207
      %v212 = vpack.c.b16 %v211, %v210
      %v217 = vunpack.c.l.b16 %v201
      %v218 = vunpack.c.h.b16 %v201
      %v219 = vunpack.c.l.b16 %v202
      %v220 = vunpack.c.l.b16 %v203
      %v221 = vunpack.c.h.b16 %v203
      %v222 = vunpack.c.l.b16 %v204
      %v223 = vpack.c.b16 %v220, %v217
      %v224 = vpack.c.b16 %v221, %v218
      %v225 = vpack.c.b16 %v222, %v219
      %226 = vrot.lane.b32.xlu0 %v223, 127
      %v227 = vpop.permute.xlu0 %226
      %228 = vrot.lane.b32.xlu0 %v224, 127
      %v229 = vpop.permute.xlu0 %228
      %230 = vrot.lane.b32.xlu0 %v225, 127
      %v231 = vpop.permute.xlu0 %230
      %vm232 = vcmask 1039360
      %v233 = vsel %vm232, %v227, %v229
      %v234 = vsel %vm232, %v229, %v231
      %vm238 = vcmask 130048
      %v240 = vsel %vm238, %v212, 0
      %242 = vmatpush.bf16.msra.mxu0 0
      %243 = vmatpush.bf16.msra.mxu0 0
      %244 = vmatpush.bf16.msra.mxu0 0
      %245 = vmatpush.bf16.msra.mxu0 0
      %246 = vmatpush.bf16.msra.mxu0 0
      %247 = vmatpush.bf16.msra.mxu0 0
      %248 = vmatpush.bf16.msra.mxu0 0
      %249 = vmatpush.bf16.msra.mxu0 %v233
      %250 = vmatmul.bf16.gmra.mxu0 %v240
      %v251 = vpop.f32.mrf.mxu0
      %v252 = vadd.f32 0.0, %v251
      %v253 = vpop.f32.mrf.mxu0
      %v254 = vadd.f32 0.0, %v253
      %255 = vdwg.mxu0
      %256 = vmatpush.bf16.msra.mxu0 0
      %257 = vmatpush.bf16.msra.mxu0 0
      %258 = vmatpush.bf16.msra.mxu0 0
      %259 = vmatpush.bf16.msra.mxu0 0
      %260 = vmatpush.bf16.msra.mxu0 0
      %261 = vmatpush.bf16.msra.mxu0 0
      %262 = vmatpush.bf16.msra.mxu0 0
      %263 = vmatpush.bf16.msra.mxu0 %v234
      %264 = vmatmul.bf16.gmra.mxu0 %v240
      %v265 = vpop.f32.mrf.mxu0
      %v266 = vadd.f32 0.0, %v265
      %v267 = vpop.f32.mrf.mxu0
      %v268 = vadd.f32 0.0, %v267
      %269 = vdwg.mxu0
      %270 = vmatpush.bf16.msra.mxu0 0
      %271 = vmatpush.bf16.msra.mxu0 0
      %272 = vmatpush.bf16.msra.mxu0 0
      %273 = vmatpush.bf16.msra.mxu0 0
      %274 = vmatpush.bf16.msra.mxu0 0
      %275 = vmatpush.bf16.msra.mxu0 0
      %276 = vmatpush.bf16.msra.mxu0 0
      %277 = vmatpush.bf16.msra.mxu0 %v231
      %278 = vmatmul.bf16.gmra.mxu0 %v240
      %v279 = vpop.f32.mrf.mxu0
      %v280 = vadd.f32 0.0, %v279
      %v281 = vpop.f32.mrf.mxu0
      %v282 = vadd.f32 0.0, %v281
      %283 = vdwg.mxu0
      %v286 = vunpack.c.l.b16 %v199
      %v287 = vunpack.c.l.b16 %v200
      %v288 = vpack.c.b16 %v287, %v286
      %v293 = vsel %vm238, %v288, 0
      %295 = vmatpush.bf16.msra.mxu0 0
      %296 = vmatpush.bf16.msra.mxu0 0
      %297 = vmatpush.bf16.msra.mxu0 0
      %298 = vmatpush.bf16.msra.mxu0 0
      %299 = vmatpush.bf16.msra.mxu0 0
      %300 = vmatpush.bf16.msra.mxu0 0
      %301 = vmatpush.bf16.msra.mxu0 0
      %302 = vmatpush.bf16.msra.mxu0 %v223
      %303 = vmatmul.bf16.gmra.mxu0 %v293
      %v304 = vpop.f32.mrf.mxu0
      %v305 = vadd.f32 %v252, %v304
      %v306 = vpop.f32.mrf.mxu0
      %v307 = vadd.f32 %v254, %v306
      %308 = vdwg.mxu0
      %309 = vmatpush.bf16.msra.mxu0 0
      %310 = vmatpush.bf16.msra.mxu0 0
      %311 = vmatpush.bf16.msra.mxu0 0
      %312 = vmatpush.bf16.msra.mxu0 0
      %313 = vmatpush.bf16.msra.mxu0 0
      %314 = vmatpush.bf16.msra.mxu0 0
      %315 = vmatpush.bf16.msra.mxu0 0
      %316 = vmatpush.bf16.msra.mxu0 %v224
      %317 = vmatmul.bf16.gmra.mxu0 %v293
      %v318 = vpop.f32.mrf.mxu0
      %v319 = vadd.f32 %v266, %v318
      %v320 = vpop.f32.mrf.mxu0
      %v321 = vadd.f32 %v268, %v320
      %322 = vdwg.mxu0
      %323 = vmatpush.bf16.msra.mxu0 0
      %324 = vmatpush.bf16.msra.mxu0 0
      %325 = vmatpush.bf16.msra.mxu0 0
      %326 = vmatpush.bf16.msra.mxu0 0
      %327 = vmatpush.bf16.msra.mxu0 0
      %328 = vmatpush.bf16.msra.mxu0 0
      %329 = vmatpush.bf16.msra.mxu0 0
      %330 = vmatpush.bf16.msra.mxu0 %v225
      %331 = vmatmul.bf16.gmra.mxu0 %v293
      %v332 = vpop.f32.mrf.mxu0
      %v333 = vadd.f32 %v280, %v332
      %v334 = vpop.f32.mrf.mxu0
      %v335 = vadd.f32 %v282, %v334
      %336 = vdwg.mxu0
      %s337 = scalar_lea.vmem %s1, 16
      %v338 = vld [vmem:[%s337] sm:$0xf]
      %v339 = vld [vmem:[%s337 + $0x4] sm:$0xf]
      %v342 = vunpack.c.l.b16 %v338
      %v343 = vunpack.c.l.b16 %v339
      %v344 = vpack.c.b16 %v343, %v342
      %345 = vrot.lane.b32.xlu0 %v223, 126
      %v346 = vpop.permute.xlu0 %345
      %347 = vrot.lane.b32.xlu0 %v224, 126
      %v348 = vpop.permute.xlu0 %347
      %349 = vrot.lane.b32.xlu0 %v225, 126
      %v350 = vpop.permute.xlu0 %349
      %vm351 = vcmask 1031168
      %v352 = vsel %vm351, %v346, %v348
      %v353 = vsel %vm351, %v348, %v350
      %v358 = vsel %vm238, %v344, 0
      %360 = vmatpush.bf16.msra.mxu0 0
      %361 = vmatpush.bf16.msra.mxu0 0
      %362 = vmatpush.bf16.msra.mxu0 0
      %363 = vmatpush.bf16.msra.mxu0 0
      %364 = vmatpush.bf16.msra.mxu0 0
      %365 = vmatpush.bf16.msra.mxu0 0
      %366 = vmatpush.bf16.msra.mxu0 0
      %367 = vmatpush.bf16.msra.mxu0 %v352
      %368 = vmatmul.bf16.gmra.mxu0 %v358
      %v369 = vpop.f32.mrf.mxu0
      %v370 = vadd.f32 0.0, %v369
      %v371 = vpop.f32.mrf.mxu0
      %v372 = vadd.f32 0.0, %v371
      %373 = vdwg.mxu0
      %374 = vmatpush.bf16.msra.mxu0 0
      %375 = vmatpush.bf16.msra.mxu0 0
      %376 = vmatpush.bf16.msra.mxu0 0
      %377 = vmatpush.bf16.msra.mxu0 0
      %378 = vmatpush.bf16.msra.mxu0 0
      %379 = vmatpush.bf16.msra.mxu0 0
      %380 = vmatpush.bf16.msra.mxu0 0
      %381 = vmatpush.bf16.msra.mxu0 %v353
      %382 = vmatmul.bf16.gmra.mxu0 %v358
      %v383 = vpop.f32.mrf.mxu0
      %v384 = vadd.f32 0.0, %v383
      %v385 = vpop.f32.mrf.mxu0
      %v386 = vadd.f32 0.0, %v385
      %387 = vdwg.mxu0
      %388 = vmatpush.bf16.msra.mxu0 0
      %389 = vmatpush.bf16.msra.mxu0 0
      %390 = vmatpush.bf16.msra.mxu0 0
      %391 = vmatpush.bf16.msra.mxu0 0
      %392 = vmatpush.bf16.msra.mxu0 0
      %393 = vmatpush.bf16.msra.mxu0 0
      %394 = vmatpush.bf16.msra.mxu0 0
      %395 = vmatpush.bf16.msra.mxu0 %v350
      %396 = vmatmul.bf16.gmra.mxu0 %v358
      %v397 = vpop.f32.mrf.mxu0
      %v398 = vadd.f32 0.0, %v397
      %v399 = vpop.f32.mrf.mxu0
      %v400 = vadd.f32 0.0, %v399
      %401 = vdwg.mxu0
      %v402 = vadd.f32 %v305, %v370
      %v403 = vadd.f32 %v319, %v384
      %v404 = vadd.f32 %v333, %v398
      %v405 = vadd.f32 %v307, %v372
      %v406 = vadd.f32 %v321, %v386
      %v407 = vadd.f32 %v335, %v400
      %s408 = scalar_lea.vmem %s1, 24
      %v409 = vld [vmem:[%s408] sm:$0xf]
      %v410 = vld [vmem:[%s408 + $0x4] sm:$0xf]
      %v413 = vunpack.c.l.b16 %v409
      %v414 = vunpack.c.l.b16 %v410
      %v415 = vpack.c.b16 %v414, %v413
      %416 = vrot.lane.b32.xlu0 %v223, 110
      %v417 = vpop.permute.xlu0 %416
      %418 = vrot.lane.b32.xlu0 %v224, 110
      %v419 = vpop.permute.xlu0 %418
      %420 = vrot.lane.b32.xlu0 %v225, 110
      %v421 = vpop.permute.xlu0 %420
      %vm422 = vcmask 900096
      %v423 = vsel %vm422, %v417, %v419
      %v424 = vsel %vm422, %v419, %v421
      %v429 = vsel %vm238, %v415, 0
      %431 = vmatpush.bf16.msra.mxu0 0
      %432 = vmatpush.bf16.msra.mxu0 0
      %433 = vmatpush.bf16.msra.mxu0 0
      %434 = vmatpush.bf16.msra.mxu0 0
      %435 = vmatpush.bf16.msra.mxu0 0
      %436 = vmatpush.bf16.msra.mxu0 0
      %437 = vmatpush.bf16.msra.mxu0 0
      %438 = vmatpush.bf16.msra.mxu0 %v423
      %439 = vmatmul.bf16.gmra.mxu0 %v429
      %v440 = vpop.f32.mrf.mxu0
      %v441 = vadd.f32 0.0, %v440
      %v442 = vpop.f32.mrf.mxu0
      %v443 = vadd.f32 0.0, %v442
      %444 = vdwg.mxu0
      %445 = vmatpush.bf16.msra.mxu0 0
      %446 = vmatpush.bf16.msra.mxu0 0
      %447 = vmatpush.bf16.msra.mxu0 0
      %448 = vmatpush.bf16.msra.mxu0 0
      %449 = vmatpush.bf16.msra.mxu0 0
      %450 = vmatpush.bf16.msra.mxu0 0
      %451 = vmatpush.bf16.msra.mxu0 0
      %452 = vmatpush.bf16.msra.mxu0 %v424
      %453 = vmatmul.bf16.gmra.mxu0 %v429
      %v454 = vpop.f32.mrf.mxu0
      %v455 = vadd.f32 0.0, %v454
      %v456 = vpop.f32.mrf.mxu0
      %v457 = vadd.f32 0.0, %v456
      %458 = vdwg.mxu0
      %459 = vmatpush.bf16.msra.mxu0 0
      %460 = vmatpush.bf16.msra.mxu0 0
      %461 = vmatpush.bf16.msra.mxu0 0
      %462 = vmatpush.bf16.msra.mxu0 0
      %463 = vmatpush.bf16.msra.mxu0 0
      %464 = vmatpush.bf16.msra.mxu0 0
      %465 = vmatpush.bf16.msra.mxu0 0
      %466 = vmatpush.bf16.msra.mxu0 %v421
      %467 = vmatmul.bf16.gmra.mxu0 %v429
      %v468 = vpop.f32.mrf.mxu0
      %v469 = vadd.f32 0.0, %v468
      %v470 = vpop.f32.mrf.mxu0
      %v471 = vadd.f32 0.0, %v470
      %472 = vdwg.mxu0
      %v473 = vadd.f32 %v402, %v441
      %v474 = vadd.f32 %v403, %v455
      %v475 = vadd.f32 %v404, %v469
      %v476 = vadd.f32 %v405, %v443
      %v477 = vadd.f32 %v406, %v457
      %v478 = vadd.f32 %v407, %v471
      %s479 = scalar_lea.vmem %s1, 32
      %v480 = vld [vmem:[%s479] sm:$0xf]
      %v481 = vld [vmem:[%s479 + $0x4] sm:$0xf]
      %v484 = vunpack.c.l.b16 %v480
      %v485 = vunpack.c.l.b16 %v481
      %v486 = vpack.c.b16 %v485, %v484
      %487 = vrot.lane.b32.xlu0 %v223, 109
      %v488 = vpop.permute.xlu0 %487
      %489 = vrot.lane.b32.xlu0 %v224, 109
      %v490 = vpop.permute.xlu0 %489
      %491 = vrot.lane.b32.xlu0 %v225, 109
      %v492 = vpop.permute.xlu0 %491
      %vm493 = vcmask 891904
      %v494 = vsel %vm493, %v488, %v490
      %v495 = vsel %vm493, %v490, %v492
      %v500 = vsel %vm238, %v486, 0
      %502 = vmatpush.bf16.msra.mxu0 0
      %503 = vmatpush.bf16.msra.mxu0 0
      %504 = vmatpush.bf16.msra.mxu0 0
      %505 = vmatpush.bf16.msra.mxu0 0
      %506 = vmatpush.bf16.msra.mxu0 0
      %507 = vmatpush.bf16.msra.mxu0 0
      %508 = vmatpush.bf16.msra.mxu0 0
      %509 = vmatpush.bf16.msra.mxu0 %v494
      %510 = vmatmul.bf16.gmra.mxu0 %v500
      %v511 = vpop.f32.mrf.mxu0
      %v512 = vadd.f32 0.0, %v511
      %v513 = vpop.f32.mrf.mxu0
      %v514 = vadd.f32 0.0, %v513
      %515 = vdwg.mxu0
      %516 = vmatpush.bf16.msra.mxu0 0
      %517 = vmatpush.bf16.msra.mxu0 0
      %518 = vmatpush.bf16.msra.mxu0 0
      %519 = vmatpush.bf16.msra.mxu0 0
      %520 = vmatpush.bf16.msra.mxu0 0
      %521 = vmatpush.bf16.msra.mxu0 0
      %522 = vmatpush.bf16.msra.mxu0 0
      %523 = vmatpush.bf16.msra.mxu0 %v495
      %524 = vmatmul.bf16.gmra.mxu0 %v500
      %v525 = vpop.f32.mrf.mxu0
      %v526 = vadd.f32 0.0, %v525
      %v527 = vpop.f32.mrf.mxu0
      %v528 = vadd.f32 0.0, %v527
      %529 = vdwg.mxu0
      %530 = vmatpush.bf16.msra.mxu0 0
      %531 = vmatpush.bf16.msra.mxu0 0
      %532 = vmatpush.bf16.msra.mxu0 0
      %533 = vmatpush.bf16.msra.mxu0 0
      %534 = vmatpush.bf16.msra.mxu0 0
      %535 = vmatpush.bf16.msra.mxu0 0
      %536 = vmatpush.bf16.msra.mxu0 0
      %537 = vmatpush.bf16.msra.mxu0 %v492
      %538 = vmatmul.bf16.gmra.mxu0 %v500
      %v539 = vpop.f32.mrf.mxu0
      %v540 = vadd.f32 0.0, %v539
      %v541 = vpop.f32.mrf.mxu0
      %v542 = vadd.f32 0.0, %v541
      %543 = vdwg.mxu0
      %v544 = vadd.f32 %v473, %v512
      %v545 = vadd.f32 %v474, %v526
      %v546 = vadd.f32 %v475, %v540
      %v547 = vadd.f32 %v476, %v514
      %v548 = vadd.f32 %v477, %v528
      %v549 = vadd.f32 %v478, %v542
      %s550 = scalar_lea.vmem %s1, 40
      %v551 = vld [vmem:[%s550] sm:$0xf]
      %v552 = vld [vmem:[%s550 + $0x4] sm:$0xf]
      %v555 = vunpack.c.l.b16 %v551
      %v556 = vunpack.c.l.b16 %v552
      %v557 = vpack.c.b16 %v556, %v555
      %558 = vrot.lane.b32.xlu0 %v223, 108
      %v559 = vpop.permute.xlu0 %558
      %560 = vrot.lane.b32.xlu0 %v224, 108
      %v561 = vpop.permute.xlu0 %560
      %562 = vrot.lane.b32.xlu0 %v225, 108
      %v563 = vpop.permute.xlu0 %562
      %vm564 = vcmask 883712
      %v565 = vsel %vm564, %v559, %v561
      %v566 = vsel %vm564, %v561, %v563
      %v571 = vsel %vm238, %v557, 0
      %573 = vmatpush.bf16.msra.mxu0 0
      %574 = vmatpush.bf16.msra.mxu0 0
      %575 = vmatpush.bf16.msra.mxu0 0
      %576 = vmatpush.bf16.msra.mxu0 0
      %577 = vmatpush.bf16.msra.mxu0 0
      %578 = vmatpush.bf16.msra.mxu0 0
      %579 = vmatpush.bf16.msra.mxu0 0
      %580 = vmatpush.bf16.msra.mxu0 %v565
      %581 = vmatmul.bf16.gmra.mxu0 %v571
      %v582 = vpop.f32.mrf.mxu0
      %v583 = vadd.f32 0.0, %v582
      %v584 = vpop.f32.mrf.mxu0
      %v585 = vadd.f32 0.0, %v584
      %586 = vdwg.mxu0
      %587 = vmatpush.bf16.msra.mxu0 0
      %588 = vmatpush.bf16.msra.mxu0 0
      %589 = vmatpush.bf16.msra.mxu0 0
      %590 = vmatpush.bf16.msra.mxu0 0
      %591 = vmatpush.bf16.msra.mxu0 0
      %592 = vmatpush.bf16.msra.mxu0 0
      %593 = vmatpush.bf16.msra.mxu0 0
      %594 = vmatpush.bf16.msra.mxu0 %v566
      %595 = vmatmul.bf16.gmra.mxu0 %v571
      %v596 = vpop.f32.mrf.mxu0
      %v597 = vadd.f32 0.0, %v596
      %v598 = vpop.f32.mrf.mxu0
      %v599 = vadd.f32 0.0, %v598
      %600 = vdwg.mxu0
      %601 = vmatpush.bf16.msra.mxu0 0
      %602 = vmatpush.bf16.msra.mxu0 0
      %603 = vmatpush.bf16.msra.mxu0 0
      %604 = vmatpush.bf16.msra.mxu0 0
      %605 = vmatpush.bf16.msra.mxu0 0
      %606 = vmatpush.bf16.msra.mxu0 0
      %607 = vmatpush.bf16.msra.mxu0 0
      %608 = vmatpush.bf16.msra.mxu0 %v563
      %609 = vmatmul.bf16.gmra.mxu0 %v571
      %v610 = vpop.f32.mrf.mxu0
      %v611 = vadd.f32 0.0, %v610
      %v612 = vpop.f32.mrf.mxu0
      %v613 = vadd.f32 0.0, %v612
      %614 = vdwg.mxu0
      %v615 = vadd.f32 %v544, %v583
      %v616 = vadd.f32 %v545, %v597
      %v617 = vadd.f32 %v546, %v611
      %v618 = vadd.f32 %v547, %v585
      %v619 = vadd.f32 %v548, %v599
      %v620 = vadd.f32 %v549, %v613
      %s621 = scalar_lea.vmem %s1, 48
      %v622 = vld [vmem:[%s621] sm:$0xf]
      %v623 = vld [vmem:[%s621 + $0x4] sm:$0xf]
      %v626 = vunpack.c.l.b16 %v622
      %v627 = vunpack.c.l.b16 %v623
      %v628 = vpack.c.b16 %v627, %v626
      %629 = vrot.lane.b32.xlu0 %v223, 92
      %v630 = vpop.permute.xlu0 %629
      %631 = vrot.lane.b32.xlu0 %v224, 92
      %v632 = vpop.permute.xlu0 %631
      %633 = vrot.lane.b32.xlu0 %v225, 92
      %v634 = vpop.permute.xlu0 %633
      %vm635 = vcmask 752640
      %v636 = vsel %vm635, %v630, %v632
      %v637 = vsel %vm635, %v632, %v634
      %v642 = vsel %vm238, %v628, 0
      %644 = vmatpush.bf16.msra.mxu0 0
      %645 = vmatpush.bf16.msra.mxu0 0
      %646 = vmatpush.bf16.msra.mxu0 0
      %647 = vmatpush.bf16.msra.mxu0 0
      %648 = vmatpush.bf16.msra.mxu0 0
      %649 = vmatpush.bf16.msra.mxu0 0
      %650 = vmatpush.bf16.msra.mxu0 0
      %651 = vmatpush.bf16.msra.mxu0 %v636
      %652 = vmatmul.bf16.gmra.mxu0 %v642
      %v653 = vpop.f32.mrf.mxu0
      %v654 = vadd.f32 0.0, %v653
      %v655 = vpop.f32.mrf.mxu0
      %v656 = vadd.f32 0.0, %v655
      %657 = vdwg.mxu0
      %658 = vmatpush.bf16.msra.mxu0 0
      %659 = vmatpush.bf16.msra.mxu0 0
      %660 = vmatpush.bf16.msra.mxu0 0
      %661 = vmatpush.bf16.msra.mxu0 0
      %662 = vmatpush.bf16.msra.mxu0 0
      %663 = vmatpush.bf16.msra.mxu0 0
      %664 = vmatpush.bf16.msra.mxu0 0
      %665 = vmatpush.bf16.msra.mxu0 %v637
      %666 = vmatmul.bf16.gmra.mxu0 %v642
      %v667 = vpop.f32.mrf.mxu0
      %v668 = vadd.f32 0.0, %v667
      %v669 = vpop.f32.mrf.mxu0
      %v670 = vadd.f32 0.0, %v669
      %671 = vdwg.mxu0
      %672 = vmatpush.bf16.msra.mxu0 0
      %673 = vmatpush.bf16.msra.mxu0 0
      %674 = vmatpush.bf16.msra.mxu0 0
      %675 = vmatpush.bf16.msra.mxu0 0
      %676 = vmatpush.bf16.msra.mxu0 0
      %677 = vmatpush.bf16.msra.mxu0 0
      %678 = vmatpush.bf16.msra.mxu0 0
      %679 = vmatpush.bf16.msra.mxu0 %v634
      %680 = vmatmul.bf16.gmra.mxu0 %v642
      %v681 = vpop.f32.mrf.mxu0
      %v682 = vadd.f32 0.0, %v681
      %v683 = vpop.f32.mrf.mxu0
      %v684 = vadd.f32 0.0, %v683
      %685 = vdwg.mxu0
      %v686 = vadd.f32 %v615, %v654
      %v687 = vadd.f32 %v616, %v668
      %v688 = vadd.f32 %v617, %v682
      %v689 = vadd.f32 %v618, %v656
      %v690 = vadd.f32 %v619, %v670
      %v691 = vadd.f32 %v620, %v684
      %s692 = scalar_lea.vmem %s1, 56
      %v693 = vld [vmem:[%s692] sm:$0xf]
      %v694 = vld [vmem:[%s692 + $0x4] sm:$0xf]
      %v697 = vunpack.c.l.b16 %v693
      %v698 = vunpack.c.l.b16 %v694
      %v699 = vpack.c.b16 %v698, %v697
      %700 = vrot.lane.b32.xlu0 %v223, 91
      %v701 = vpop.permute.xlu0 %700
      %702 = vrot.lane.b32.xlu0 %v224, 91
      %v703 = vpop.permute.xlu0 %702
      %704 = vrot.lane.b32.xlu0 %v225, 91
      %v705 = vpop.permute.xlu0 %704
      %vm706 = vcmask 744448
      %v707 = vsel %vm706, %v701, %v703
      %v708 = vsel %vm706, %v703, %v705
      %v713 = vsel %vm238, %v699, 0
      %715 = vmatpush.bf16.msra.mxu0 0
      %716 = vmatpush.bf16.msra.mxu0 0
      %717 = vmatpush.bf16.msra.mxu0 0
      %718 = vmatpush.bf16.msra.mxu0 0
      %719 = vmatpush.bf16.msra.mxu0 0
      %720 = vmatpush.bf16.msra.mxu0 0
      %721 = vmatpush.bf16.msra.mxu0 0
      %722 = vmatpush.bf16.msra.mxu0 %v707
      %723 = vmatmul.bf16.gmra.mxu0 %v713
      %v724 = vpop.f32.mrf.mxu0
      %v725 = vadd.f32 0.0, %v724
      %v726 = vpop.f32.mrf.mxu0
      %v727 = vadd.f32 0.0, %v726
      %728 = vdwg.mxu0
      %729 = vmatpush.bf16.msra.mxu0 0
      %730 = vmatpush.bf16.msra.mxu0 0
      %731 = vmatpush.bf16.msra.mxu0 0
      %732 = vmatpush.bf16.msra.mxu0 0
      %733 = vmatpush.bf16.msra.mxu0 0
      %734 = vmatpush.bf16.msra.mxu0 0
      %735 = vmatpush.bf16.msra.mxu0 0
      %736 = vmatpush.bf16.msra.mxu0 %v708
      %737 = vmatmul.bf16.gmra.mxu0 %v713
      %v738 = vpop.f32.mrf.mxu0
      %v739 = vadd.f32 0.0, %v738
      %v740 = vpop.f32.mrf.mxu0
      %v741 = vadd.f32 0.0, %v740
      %742 = vdwg.mxu0
      %743 = vmatpush.bf16.msra.mxu0 0
      %744 = vmatpush.bf16.msra.mxu0 0
      %745 = vmatpush.bf16.msra.mxu0 0
      %746 = vmatpush.bf16.msra.mxu0 0
      %747 = vmatpush.bf16.msra.mxu0 0
      %748 = vmatpush.bf16.msra.mxu0 0
      %749 = vmatpush.bf16.msra.mxu0 0
      %750 = vmatpush.bf16.msra.mxu0 %v705
      %751 = vmatmul.bf16.gmra.mxu0 %v713
      %v752 = vpop.f32.mrf.mxu0
      %v753 = vadd.f32 0.0, %v752
      %v754 = vpop.f32.mrf.mxu0
      %v755 = vadd.f32 0.0, %v754
      %756 = vdwg.mxu0
      %v757 = vadd.f32 %v686, %v725
      %v758 = vadd.f32 %v687, %v739
      %v759 = vadd.f32 %v688, %v753
      %v760 = vadd.f32 %v689, %v727
      %v761 = vadd.f32 %v690, %v741
      %v762 = vadd.f32 %v691, %v755
      %s763 = scalar_lea.vmem %s1, 64
      %v764 = vld [vmem:[%s763] sm:$0xf]
      %v765 = vld [vmem:[%s763 + $0x4] sm:$0xf]
      %v768 = vunpack.c.l.b16 %v764
      %v769 = vunpack.c.l.b16 %v765
      %v770 = vpack.c.b16 %v769, %v768
      %771 = vrot.lane.b32.xlu0 %v223, 90
      %v772 = vpop.permute.xlu0 %771
      %773 = vrot.lane.b32.xlu0 %v224, 90
      %v774 = vpop.permute.xlu0 %773
      %775 = vrot.lane.b32.xlu0 %v225, 90
      %v776 = vpop.permute.xlu0 %775
      %vm777 = vcmask 736256
      %v778 = vsel %vm777, %v772, %v774
      %v779 = vsel %vm777, %v774, %v776
      %v784 = vsel %vm238, %v770, 0
      %786 = vmatpush.bf16.msra.mxu0 0
      %787 = vmatpush.bf16.msra.mxu0 0
      %788 = vmatpush.bf16.msra.mxu0 0
      %789 = vmatpush.bf16.msra.mxu0 0
      %790 = vmatpush.bf16.msra.mxu0 0
      %791 = vmatpush.bf16.msra.mxu0 0
      %792 = vmatpush.bf16.msra.mxu0 0
      %793 = vmatpush.bf16.msra.mxu0 %v778
      %794 = vmatmul.bf16.gmra.mxu0 %v784
      %v795 = vpop.f32.mrf.mxu0
      %v796 = vadd.f32 0.0, %v795
      %v797 = vpop.f32.mrf.mxu0
      %v798 = vadd.f32 0.0, %v797
      %799 = vdwg.mxu0
      %800 = vmatpush.bf16.msra.mxu0 0
      %801 = vmatpush.bf16.msra.mxu0 0
      %802 = vmatpush.bf16.msra.mxu0 0
      %803 = vmatpush.bf16.msra.mxu0 0
      %804 = vmatpush.bf16.msra.mxu0 0
      %805 = vmatpush.bf16.msra.mxu0 0
      %806 = vmatpush.bf16.msra.mxu0 0
      %807 = vmatpush.bf16.msra.mxu0 %v779
      %808 = vmatmul.bf16.gmra.mxu0 %v784
      %v809 = vpop.f32.mrf.mxu0
      %v810 = vadd.f32 0.0, %v809
      %v811 = vpop.f32.mrf.mxu0
      %v812 = vadd.f32 0.0, %v811
      %813 = vdwg.mxu0
      %814 = vmatpush.bf16.msra.mxu0 0
      %815 = vmatpush.bf16.msra.mxu0 0
      %816 = vmatpush.bf16.msra.mxu0 0
      %817 = vmatpush.bf16.msra.mxu0 0
      %818 = vmatpush.bf16.msra.mxu0 0
      %819 = vmatpush.bf16.msra.mxu0 0
      %820 = vmatpush.bf16.msra.mxu0 0
      %821 = vmatpush.bf16.msra.mxu0 %v776
      %822 = vmatmul.bf16.gmra.mxu0 %v784
      %v823 = vpop.f32.mrf.mxu0
      %v824 = vadd.f32 0.0, %v823
      %v825 = vpop.f32.mrf.mxu0
      %v826 = vadd.f32 0.0, %v825
      %827 = vdwg.mxu0
      %v828 = vadd.f32 %v757, %v796
      %v829 = vadd.f32 %v758, %v810
      %v830 = vadd.f32 %v759, %v824
      %v831 = vadd.f32 %v760, %v798
      %v832 = vadd.f32 %v761, %v812
      %v833 = vadd.f32 %v762, %v826
      %v834 = vld [vmem:[%s2] sm:$0xff]
      %v835 = vld [vmem:[%s2 + $0x8] sm:$0xff]
      %837 = vset.pattern.permute.xlu0 0
      %838 = vperm.xlu0 %837, %v834
      %v839 = vpop.permute.xlu0 %838
      %842 = vset.pattern.permute.xlu0 0
      %843 = vperm.xlu0 %842, %v835
      %v844 = vpop.permute.xlu0 %843
      %v846 = vadd.f32 %v828, %v839
      %v847 = vadd.f32 %v829, %v839
      %v848 = vadd.f32 %v830, %v839
      %v849 = vadd.f32 %v831, %v844
      %v850 = vadd.f32 %v832, %v844
      %v851 = vadd.f32 %v833, %v844
      %v852 = vmax.f32 %v846, 0.0
      %v853 = vmax.f32 %v847, 0.0
      %v854 = vmax.f32 %v848, 0.0
      %v855 = vmax.f32 %v849, 0.0
      %v856 = vmax.f32 %v850, 0.0
      %v857 = vmax.f32 %v851, 0.0
      %v858 = vld [vmem:[%s3] sm:$0x7]
      %v860 = vperm.slane %v858, 0
      %v861 = vperm.slane %v858, 1
      %v862 = vperm.slane %v858, 2
      %v866 = vmul.f32 %v852, %v860
      %v867 = vmul.f32 %v853, %v861
      %v868 = vmul.f32 %v854, %v862
      %v869 = vmul.f32 %v855, %v860
      %v870 = vmul.f32 %v856, %v861
      %v871 = vmul.f32 %v857, %v862
      %872 = vst [vmem:[%s197] sm:$0xff] %v866
      %873 = vst [vmem:[%s197 + $0x8] sm:$0xff] %v867
      %vm874 = vcmask 556032
      %875 = vst.msk [vmem:[%s197 + $0x10] sm:$0xff] %vm874, %v868
      %876 = vst [vmem:[%s197 + $0x18] sm:$0xff] %v869
      %877 = vst [vmem:[%s197 + $0x20] sm:$0xff] %v870
      %878 = vst.msk [vmem:[%s197 + $0x28] sm:$0xff] %vm874, %v871
      %p879 = scmp.lt.s32.totalorder %s15, 1
      %s880 = scalar_select %p879, %s15, 1
      %s881 = smul.addr %s880, 6
      %s882 = smul.addr %s881, 8
      %s883 = scalar_lea.vmem %s4, %s882
      // Predicated region
      $region37: #{up_block_forward.5} parent=35 // pred_check
        %p884 = pneg %p122
      $region38: #{up_block_forward.5} parent=35 // pred_check_branch
        %886 = sbr.rel (%p884) target = $region40
      $region39: #{up_block_forward.5} parent=35 // pred_region
        _
      $region40: #{up_block_forward.5} parent=35 // pred_fallthru
        _
    $region36: #{up_block_forward.5} parent=5 // pred_fallthru
      _
    %p887 = scmp.le.s32.totalorder 2, %s10
    // Predicated region
    $region41: #{up_block_forward.5} parent=5 // pred_check
      %p888 = pneg %p887
    $region42: #{up_block_forward.5} parent=5 // pred_check_branch
      %890 = sbr.rel (%p888) target = $region44
    $region43: #{up_block_forward.5} parent=5 // pred_region
      %s891 = ssub.s32 %s10, 2
      // Predicated region
      $region45: #{up_block_forward.5} parent=43 // pred_check
        %p892 = pneg %p128
      $region46: #{up_block_forward.5} parent=43 // pred_check_branch
        %894 = sbr.rel (%p892) target = $region48
      $region47: #{up_block_forward.5} parent=43 // pred_region
        %p895 = scmp.lt.s32.totalorder %s16, 1
        %s896 = scalar_select %p895, %s16, 1
        %s897 = smul.addr %s896, 6
        %s898 = smul.addr %s897, 8
        %s899 = scalar_lea.vmem %s4, %s898
      $region48: #{up_block_forward.5} parent=43 // pred_fallthru
        _
    $region44: #{up_block_forward.5} parent=5 // pred_fallthru
      _
  $region6: #{up_block_forward.5} parent=0 // loop_footer
    %s14 = sadd.s32 1, %s10
  $region7: #{up_block_forward.5} parent=0 // loop_footer_branch
    %9 = sbr.rel target = $region3
  $region8: #{up_block_forward.5} parent=0 // loop_exit
    _

// kernel: up_block_forward.4
$region0: #{up_block_forward.4}
  #allocation0 [shape = 'u32[]', space=smem, size = 0x4, offset = 0x4, fixed_abs, tag = 'smem constant byte address 0x4 - core index']
  #allocation1 [shape = 'u32[72,128]{1,0:T(1,128)}', space=vmem, size = 0x9000, scoped, tag = 'internal scratch']
  %s0 = inlined_call_operand.vmem [shape: bf16[2,16,400], index: 0, kind: input, shape index: {}]
  %s1 = inlined_call_operand.vmem [shape: bf16[2,16,400], index: 1, kind: input, shape index: {}]
  %s2 = inlined_call_operand.vmem [shape: bf16[9,16,16], index: 2, kind: input, shape index: {}]
  %s3 = inlined_call_operand.vmem [shape: bf16[9,16,16], index: 3, kind: input, shape index: {}]
  %s4 = inlined_call_operand.vmem [shape: f32[16,1], index: 4, kind: input, shape index: {}]
  %s5 = inlined_call_operand.vmem [shape: f32[1,362], index: 5, kind: input, shape index: {}]
  %s6 = inlined_call_operand.vmem [shape: bf16[2,16,362], index: 6, kind: output, shape index: {}]
  %s7 = sld [smem:[#allocation0]]
  $region57: #{up_block_forward.4} parent=0
    _
  %s9 = ssub.s32 1, %s7
  %s10 = scalar_select 0, %s9, %s7
  loop: start=0, step=1, limit=4
  $region2: #{up_block_forward.4} parent=0 // loop_pre_header
    _
  $region3: #{up_block_forward.4} parent=0 // loop_header
    %s12 = sphi 0, %s16
    %p13 = scmp.ge.s32.totalorder %s12, 4
    %s22 = sphi 0, %s24
    %s25 = sphi 0, %s22
    %s26 = sphi 0, %s25
    %s42 = sphi 0, %s26
    %s48 = sphi 0, %s50
    %s51 = sphi 0, %s48
    %s52 = sphi 0, %s51
    %s68 = sphi 0, %s52
    %s72 = sphi 0, %s72
    %s74 = sphi 0, %s72
    %s75 = sphi 0, %s74
    %s89 = sphi 0, %s75
    %s93 = sphi 0, %s93
    %s95 = sphi 0, %s93
    %s96 = sphi 0, %s95
    %s110 = sphi 0, %s96
    %s114 = sphi 0, %s114
    %s116 = sphi 0, %s114
    %s117 = sphi 0, %s116
    %s131 = sphi 0, %s117
    %s135 = sphi 0, %s135
    %s137 = sphi 0, %s135
    %s138 = sphi 0, %s137
    %s152 = sphi 0, %s138
    %s158 = sphi 0, %s160
    %s161 = sphi 0, %s158
    %s162 = sphi 0, %s161
    %s178 = sphi 0, %s162
  $region4: #{up_block_forward.4} parent=0 // loop_header_branch
    %15 = sbr.rel (%p13) target = $region8
  $region5: #{up_block_forward.4} parent=0 // loop_body
    %s17 = ssub.s32 %s12, 1
    %s18 = ssub.s32 %s12, 2
    %s19 = sadd.s32 %s12, 1
    %s20 = ssub.s32 %s12, %s19
    %p21 = scmp.eq.s32.totalorder %s20, 0
    %s23 = sadd.s32 %s22, 1
    %s24 = scalar_select %p21, %s22, %s23
    %p27 = pneg %p21
    %p28 = scmp.eq.s32.totalorder %s12, 1
    %p29 = por %p27, %p28
    %p30 = scmp.ne.s32.totalorder %s22, %s25
    %p31 = scmp.eq.s32.totalorder %s12, 0
    %p32 = por %p30, %p31
    %p33 = scmp.ne.s32.totalorder %s22, %s25
    %p34 = scmp.eq.s32.totalorder %s17, 1
    %p35 = por %p33, %p34
    %p36 = scmp.ne.s32.totalorder %s25, %s26
    %p37 = scmp.eq.s32.totalorder %s17, 0
    %p38 = por %p36, %p37
    %p39 = scmp.ne.s32.totalorder %s25, %s26
    %p40 = scmp.eq.s32.totalorder %s18, 1
    %p41 = por %p39, %p40
    %p43 = scmp.ne.s32.totalorder %s26, %s42
    %p44 = scmp.eq.s32.totalorder %s18, 0
    %p45 = por %p43, %p44
    %s46 = ssub.s32 %s12, %s19
    %p47 = scmp.eq.s32.totalorder %s46, 0
    %s49 = sadd.s32 %s48, 1
    %s50 = scalar_select %p47, %s48, %s49
    %p53 = pneg %p47
    %p54 = scmp.eq.s32.totalorder %s12, 1
    %p55 = por %p53, %p54
    %p56 = scmp.ne.s32.totalorder %s48, %s51
    %p57 = scmp.eq.s32.totalorder %s12, 0
    %p58 = por %p56, %p57
    %p59 = scmp.ne.s32.totalorder %s48, %s51
    %p60 = scmp.eq.s32.totalorder %s17, 1
    %p61 = por %p59, %p60
    %p62 = scmp.ne.s32.totalorder %s51, %s52
    %p63 = scmp.eq.s32.totalorder %s17, 0
    %p64 = por %p62, %p63
    %p65 = scmp.ne.s32.totalorder %s51, %s52
    %p66 = scmp.eq.s32.totalorder %s18, 1
    %p67 = por %p65, %p66
    %p69 = scmp.ne.s32.totalorder %s52, %s68
    %p70 = scmp.eq.s32.totalorder %s18, 0
    %p71 = por %p69, %p70
    %s73 = sadd.s32 %s72, 1
    %p76 = scmp.eq.s32.totalorder %s12, 1
    %p77 = scmp.ne.s32.totalorder %s72, %s74
    %p78 = scmp.eq.s32.totalorder %s12, 0
    %p79 = por %p77, %p78
    %p80 = scmp.ne.s32.totalorder %s72, %s74
    %p81 = scmp.eq.s32.totalorder %s17, 1
    %p82 = por %p80, %p81
    %p83 = scmp.ne.s32.totalorder %s74, %s75
    %p84 = scmp.eq.s32.totalorder %s17, 0
    %p85 = por %p83, %p84
    %p86 = scmp.ne.s32.totalorder %s74, %s75
    %p87 = scmp.eq.s32.totalorder %s18, 1
    %p88 = por %p86, %p87
    %p90 = scmp.ne.s32.totalorder %s75, %s89
    %p91 = scmp.eq.s32.totalorder %s18, 0
    %p92 = por %p90, %p91
    %s94 = sadd.s32 %s93, 1
    %p97 = scmp.eq.s32.totalorder %s12, 1
    %p98 = scmp.ne.s32.totalorder %s93, %s95
    %p99 = scmp.eq.s32.totalorder %s12, 0
    %p100 = por %p98, %p99
    %p101 = scmp.ne.s32.totalorder %s93, %s95
    %p102 = scmp.eq.s32.totalorder %s17, 1
    %p103 = por %p101, %p102
    %p104 = scmp.ne.s32.totalorder %s95, %s96
    %p105 = scmp.eq.s32.totalorder %s17, 0
    %p106 = por %p104, %p105
    %p107 = scmp.ne.s32.totalorder %s95, %s96
    %p108 = scmp.eq.s32.totalorder %s18, 1
    %p109 = por %p107, %p108
    %p111 = scmp.ne.s32.totalorder %s96, %s110
    %p112 = scmp.eq.s32.totalorder %s18, 0
    %p113 = por %p111, %p112
    %s115 = sadd.s32 %s114, 1
    %p118 = scmp.eq.s32.totalorder %s12, 1
    %p119 = scmp.ne.s32.totalorder %s114, %s116
    %p120 = scmp.eq.s32.totalorder %s12, 0
    %p121 = por %p119, %p120
    %p122 = scmp.ne.s32.totalorder %s114, %s116
    %p123 = scmp.eq.s32.totalorder %s17, 1
    %p124 = por %p122, %p123
    %p125 = scmp.ne.s32.totalorder %s116, %s117
    %p126 = scmp.eq.s32.totalorder %s17, 0
    %p127 = por %p125, %p126
    %p128 = scmp.ne.s32.totalorder %s116, %s117
    %p129 = scmp.eq.s32.totalorder %s18, 1
    %p130 = por %p128, %p129
    %p132 = scmp.ne.s32.totalorder %s117, %s131
    %p133 = scmp.eq.s32.totalorder %s18, 0
    %p134 = por %p132, %p133
    %s136 = sadd.s32 %s135, 1
    %p139 = scmp.eq.s32.totalorder %s12, 1
    %p140 = scmp.ne.s32.totalorder %s135, %s137
    %p141 = scmp.eq.s32.totalorder %s12, 0
    %p142 = por %p140, %p141
    %p143 = scmp.ne.s32.totalorder %s135, %s137
    %p144 = scmp.eq.s32.totalorder %s17, 1
    %p145 = por %p143, %p144
    %p146 = scmp.ne.s32.totalorder %s137, %s138
    %p147 = scmp.eq.s32.totalorder %s17, 0
    %p148 = por %p146, %p147
    %p149 = scmp.ne.s32.totalorder %s137, %s138
    %p150 = scmp.eq.s32.totalorder %s18, 1
    %p151 = por %p149, %p150
    %p153 = scmp.ne.s32.totalorder %s138, %s152
    %p154 = scmp.eq.s32.totalorder %s18, 0
    %p155 = por %p153, %p154
    %s156 = ssub.s32 %s12, %s19
    %p157 = scmp.eq.s32.totalorder %s156, 0
    %s159 = sadd.s32 %s158, 1
    %s160 = scalar_select %p157, %s158, %s159
    %p163 = pneg %p157
    %p164 = scmp.eq.s32.totalorder %s12, 1
    %p165 = por %p163, %p164
    %p166 = scmp.ne.s32.totalorder %s158, %s161
    %p167 = scmp.eq.s32.totalorder %s12, 0
    %p168 = por %p166, %p167
    %p169 = scmp.ne.s32.totalorder %s158, %s161
    %p170 = scmp.eq.s32.totalorder %s17, 1
    %p171 = por %p169, %p170
    %p172 = scmp.ne.s32.totalorder %s161, %s162
    %p173 = scmp.eq.s32.totalorder %s17, 0
    %p174 = por %p172, %p173
    %p175 = scmp.ne.s32.totalorder %s161, %s162
    %p176 = scmp.eq.s32.totalorder %s18, 1
    %p177 = por %p175, %p176
    %p179 = scmp.ne.s32.totalorder %s162, %s178
    %p180 = scmp.eq.s32.totalorder %s18, 0
    %p181 = por %p179, %p180
    %p182 = scmp.le.s32.totalorder 1, %s12
    %p183 = scmp.lt.s32.totalorder %s12, 3
    %p184 = pnand %p182, %p183
    %p185 = pneg %p184
    // Predicated region
    $region9: #{up_block_forward.4} parent=5 // pred_check
      _
    $region10: #{up_block_forward.4} parent=5 // pred_check_branch
      %187 = sbr.rel (%p184) target = $region12
    $region11: #{up_block_forward.4} parent=5 // pred_region
      %s188 = ssub.s32 %s12, 1
      // Predicated region
      $region13: #{up_block_forward.4} parent=11 // pred_check
        %p189 = pneg %p85
      $region14: #{up_block_forward.4} parent=11 // pred_check_branch
        %191 = sbr.rel (%p189) target = $region16
      $region15: #{up_block_forward.4} parent=11 // pred_region
        _
      $region16: #{up_block_forward.4} parent=11 // pred_fallthru
        _
      // Predicated region
      $region17: #{up_block_forward.4} parent=11 // pred_check
        %p192 = pneg %p106
      $region18: #{up_block_forward.4} parent=11 // pred_check_branch
        %194 = sbr.rel (%p192) target = $region20
      $region19: #{up_block_forward.4} parent=11 // pred_region
        _
      $region20: #{up_block_forward.4} parent=11 // pred_fallthru
        _
      // Predicated region
      $region21: #{up_block_forward.4} parent=11 // pred_check
        %p195 = pneg %p127
      $region22: #{up_block_forward.4} parent=11 // pred_check_branch
        %197 = sbr.rel (%p195) target = $region24
      $region23: #{up_block_forward.4} parent=11 // pred_region
        _
      $region24: #{up_block_forward.4} parent=11 // pred_fallthru
        _
      // Predicated region
      $region25: #{up_block_forward.4} parent=11 // pred_check
        %p198 = pneg %p148
      $region26: #{up_block_forward.4} parent=11 // pred_check_branch
        %200 = sbr.rel (%p198) target = $region28
      $region27: #{up_block_forward.4} parent=11 // pred_region
        _
      $region28: #{up_block_forward.4} parent=11 // pred_fallthru
        _
    $region12: #{up_block_forward.4} parent=5 // pred_fallthru
      _
    %p201 = scmp.lt.s32.totalorder %s12, 2
    // Predicated region
    $region29: #{up_block_forward.4} parent=5 // pred_check
      %p202 = pneg %p201
    $region30: #{up_block_forward.4} parent=5 // pred_check_branch
      %204 = sbr.rel (%p202) target = $region32
    $region31: #{up_block_forward.4} parent=5 // pred_region
      // Predicated region
      $region33: #{up_block_forward.4} parent=31 // pred_check
        %p205 = pneg %p32
      $region34: #{up_block_forward.4} parent=31 // pred_check_branch
        %207 = sbr.rel (%p205) target = $region36
      $region35: #{up_block_forward.4} parent=31 // pred_region
        %p208 = scmp.lt.s32.totalorder %s12, 1
        %s209 = scalar_select %p208, %s12, 1
        %s210 = smul.addr %s209, 8
        %s211 = smul.addr %s210, 4
        %s212 = scalar_lea.vmem %s0, %s211
      $region36: #{up_block_forward.4} parent=31 // pred_fallthru
        _
      // Predicated region
      $region37: #{up_block_forward.4} parent=31 // pred_check
        %p213 = pneg %p58
      $region38: #{up_block_forward.4} parent=31 // pred_check_branch
        %215 = sbr.rel (%p213) target = $region40
      $region39: #{up_block_forward.4} parent=31 // pred_region
        %p216 = scmp.lt.s32.totalorder %s12, 1
        %s217 = scalar_select %p216, %s12, 1
        %s218 = smul.addr %s217, 8
        %s219 = smul.addr %s218, 4
        %s220 = scalar_lea.vmem %s1, %s219
      $region40: #{up_block_forward.4} parent=31 // pred_fallthru
        _
    $region32: #{up_block_forward.4} parent=5 // pred_fallthru
      _
    %p221 = scmp.le.s32.totalorder 1, %s12
    %p222 = scmp.lt.s32.totalorder %s12, 3
    %p223 = pnand %p221, %p222
    %p224 = pneg %p223
    // Predicated region
    $region41: #{up_block_forward.4} parent=5 // pred_check
      _
    $region42: #{up_block_forward.4} parent=5 // pred_check_branch
      %226 = sbr.rel (%p223) target = $region44
    $region43: #{up_block_forward.4} parent=5 // pred_region
      %s227 = ssub.s32 %s12, 1
      %p228 = scmp.lt.s32.totalorder %s17, 1
      %s229 = scalar_select %p228, %s17, 1
      %s230 = smul.addr %s229, 8
      %s231 = smul.addr %s230, 4
      %s232 = scalar_lea.vmem %s0, %s231
      %p233 = pneg %p38
      %p234 = pneg %p35
      %p235 = scmp.lt.s32.totalorder %s17, 1
      %s236 = scalar_select %p235, %s17, 1
      %s237 = smul.addr %s236, 8
      %s238 = smul.addr %s237, 4
      %s239 = scalar_lea.vmem %s1, %s238
      %p240 = pneg %p64
      %p241 = pneg %p61
      %p242 = pneg %p85
      %p243 = pneg %p82
      %p244 = pneg %p106
      %p245 = pneg %p103
      %p246 = pneg %p127
      %p247 = pneg %p124
      %p248 = pneg %p148
      %p249 = pneg %p145
      %p250 = pneg %p174
      %p251 = pneg %p171
      %p252 = scmp.lt.s32.totalorder %s17, 1
      %s253 = scalar_select %p252, %s17, 1
      %s254 = smul.addr %s253, 6
      %s255 = smul.addr %s254, 4
      %s256 = scalar_lea.vmem %s6, %s255
      %p257 = scmp.lt.s32.totalorder %s17, 1
      %s258 = scalar_select %p257, %s17, 1
      %s259 = smul.addr %s258, 8
      %s260 = smul.addr %s259, 4
      %s261 = scalar_lea.vmem %s0, %s260
      %p262 = scmp.lt.s32.totalorder %s17, 1
      %s263 = scalar_select %p262, %s17, 1
      %s264 = smul.addr %s263, 8
      %s265 = smul.addr %s264, 4
      %s266 = scalar_lea.vmem %s1, %s265
      %p267 = scmp.lt.s32.totalorder %s17, 1
      %s268 = scalar_select %p267, %s17, 1
      %s269 = smul.addr %s268, 6
      %s270 = smul.addr %s269, 4
      %s271 = scalar_lea.vmem %s6, %s270
      %v273 = vld [vmem:[%s2] sm:$0xf]
      %v274 = vld [vmem:[%s2 + $0x4] sm:$0xf]
      %v275 = vld [vmem:[%s261] sm:$0xff]
      %v276 = vld [vmem:[%s261 + $0x8] sm:$0xf]
      %v277 = vld [vmem:[%s261 + $0x10] sm:$0xff]
      %v278 = vld [vmem:[%s261 + $0x18] sm:$0xf]
      %v279 = vld [vmem:[%s3] sm:$0xf]
      %v280 = vld [vmem:[%s3 + $0x4] sm:$0xf]
      %v281 = vld [vmem:[%s266] sm:$0xff]
      %v282 = vld [vmem:[%s266 + $0x8] sm:$0xf]
      %v283 = vld [vmem:[%s266 + $0x10] sm:$0xff]
      %v284 = vld [vmem:[%s266 + $0x18] sm:$0xf]
      %v287 = vunpack.c.l.b16 %v279
      %v288 = vunpack.c.l.b16 %v280
      %v289 = vpack.c.b16 %v288, %v287
      %v294 = vunpack.c.l.b16 %v281
      %v295 = vunpack.c.h.b16 %v281
      %v296 = vunpack.c.l.b16 %v282
      %v297 = vunpack.c.l.b16 %v283
      %v298 = vunpack.c.h.b16 %v283
      %v299 = vunpack.c.l.b16 %v284
      %v300 = vpack.c.b16 %v297, %v294
      %v301 = vpack.c.b16 %v298, %v295
      %v302 = vpack.c.b16 %v299, %v296
      %vm306 = vcmask 130048
      %v308 = vsel %vm306, %v289, 0
      %310 = vmatpush.bf16.msra.mxu0 0
      %311 = vmatpush.bf16.msra.mxu0 0
      %312 = vmatpush.bf16.msra.mxu0 0
      %313 = vmatpush.bf16.msra.mxu0 0
      %314 = vmatpush.bf16.msra.mxu0 0
      %315 = vmatpush.bf16.msra.mxu0 0
      %316 = vmatpush.bf16.msra.mxu0 0
      %317 = vmatpush.bf16.msra.mxu0 %v300
      %318 = vmatmul.bf16.gmra.mxu0 %v308
      %v319 = vpop.f32.mrf.mxu0
      %v320 = vadd.f32 0.0, %v319
      %v321 = vpop.f32.mrf.mxu0
      %v322 = vadd.f32 0.0, %v321
      %323 = vdwg.mxu0
      %324 = vmatpush.bf16.msra.mxu0 0
      %325 = vmatpush.bf16.msra.mxu0 0
      %326 = vmatpush.bf16.msra.mxu0 0
      %327 = vmatpush.bf16.msra.mxu0 0
      %328 = vmatpush.bf16.msra.mxu0 0
      %329 = vmatpush.bf16.msra.mxu0 0
      %330 = vmatpush.bf16.msra.mxu0 0
      %331 = vmatpush.bf16.msra.mxu0 %v301
      %332 = vmatmul.bf16.gmra.mxu0 %v308
      %v333 = vpop.f32.mrf.mxu0
      %v334 = vadd.f32 0.0, %v333
      %v335 = vpop.f32.mrf.mxu0
      %v336 = vadd.f32 0.0, %v335
      %337 = vdwg.mxu0
      %338 = vmatpush.bf16.msra.mxu0 0
      %339 = vmatpush.bf16.msra.mxu0 0
      %340 = vmatpush.bf16.msra.mxu0 0
      %341 = vmatpush.bf16.msra.mxu0 0
      %342 = vmatpush.bf16.msra.mxu0 0
      %343 = vmatpush.bf16.msra.mxu0 0
      %344 = vmatpush.bf16.msra.mxu0 0
      %345 = vmatpush.bf16.msra.mxu0 %v302
      %346 = vmatmul.bf16.gmra.mxu0 %v308
      %v347 = vpop.f32.mrf.mxu0
      %v348 = vadd.f32 0.0, %v347
      %v349 = vpop.f32.mrf.mxu0
      %v350 = vadd.f32 0.0, %v349
      %351 = vdwg.mxu0
      %v354 = vunpack.c.l.b16 %v273
      %v355 = vunpack.c.l.b16 %v274
      %v356 = vpack.c.b16 %v355, %v354
      %v361 = vunpack.c.l.b16 %v275
      %v362 = vunpack.c.h.b16 %v275
      %v363 = vunpack.c.l.b16 %v276
      %v364 = vunpack.c.l.b16 %v277
      %v365 = vunpack.c.h.b16 %v277
      %v366 = vunpack.c.l.b16 %v278
      %v367 = vpack.c.b16 %v364, %v361
      %v368 = vpack.c.b16 %v365, %v362
      %v369 = vpack.c.b16 %v366, %v363
      %v374 = vsel %vm306, %v356, 0
      %376 = vmatpush.bf16.msra.mxu0 0
      %377 = vmatpush.bf16.msra.mxu0 0
      %378 = vmatpush.bf16.msra.mxu0 0
      %379 = vmatpush.bf16.msra.mxu0 0
      %380 = vmatpush.bf16.msra.mxu0 0
      %381 = vmatpush.bf16.msra.mxu0 0
      %382 = vmatpush.bf16.msra.mxu0 0
      %383 = vmatpush.bf16.msra.mxu0 %v367
      %384 = vmatmul.bf16.gmra.mxu0 %v374
      %v385 = vpop.f32.mrf.mxu0
      %v386 = vadd.f32 %v320, %v385
      %v387 = vpop.f32.mrf.mxu0
      %v388 = vadd.f32 %v322, %v387
      %389 = vdwg.mxu0
      %390 = vmatpush.bf16.msra.mxu0 0
      %391 = vmatpush.bf16.msra.mxu0 0
      %392 = vmatpush.bf16.msra.mxu0 0
      %393 = vmatpush.bf16.msra.mxu0 0
      %394 = vmatpush.bf16.msra.mxu0 0
      %395 = vmatpush.bf16.msra.mxu0 0
      %396 = vmatpush.bf16.msra.mxu0 0
      %397 = vmatpush.bf16.msra.mxu0 %v368
      %398 = vmatmul.bf16.gmra.mxu0 %v374
      %v399 = vpop.f32.mrf.mxu0
      %v400 = vadd.f32 %v334, %v399
      %v401 = vpop.f32.mrf.mxu0
      %v402 = vadd.f32 %v336, %v401
      %403 = vdwg.mxu0
      %404 = vmatpush.bf16.msra.mxu0 0
      %405 = vmatpush.bf16.msra.mxu0 0
      %406 = vmatpush.bf16.msra.mxu0 0
      %407 = vmatpush.bf16.msra.mxu0 0
      %408 = vmatpush.bf16.msra.mxu0 0
      %409 = vmatpush.bf16.msra.mxu0 0
      %410 = vmatpush.bf16.msra.mxu0 0
      %411 = vmatpush.bf16.msra.mxu0 %v369
      %412 = vmatmul.bf16.gmra.mxu0 %v374
      %v413 = vpop.f32.mrf.mxu0
      %v414 = vadd.f32 %v348, %v413
      %v415 = vpop.f32.mrf.mxu0
      %v416 = vadd.f32 %v350, %v415
      %417 = vdwg.mxu0
      %s418 = scalar_lea.vmem %s2, 8
      %v419 = vld [vmem:[%s418] sm:$0xf]
      %v420 = vld [vmem:[%s418 + $0x4] sm:$0xf]
      %v423 = vunpack.c.l.b16 %v419
      %v424 = vunpack.c.l.b16 %v420
      %v425 = vpack.c.b16 %v424, %v423
      %426 = vrot.lane.b32.xlu0 %v367, 127
      %v427 = vpop.permute.xlu0 %426
      %428 = vrot.lane.b32.xlu0 %v368, 127
      %v429 = vpop.permute.xlu0 %428
      %430 = vrot.lane.b32.xlu0 %v369, 127
      %v431 = vpop.permute.xlu0 %430
      %vm432 = vcmask 1039360
      %v433 = vsel %vm432, %v427, %v429
      %v434 = vsel %vm432, %v429, %v431
      %v439 = vsel %vm306, %v425, 0
      %441 = vmatpush.bf16.msra.mxu0 0
      %442 = vmatpush.bf16.msra.mxu0 0
      %443 = vmatpush.bf16.msra.mxu0 0
      %444 = vmatpush.bf16.msra.mxu0 0
      %445 = vmatpush.bf16.msra.mxu0 0
      %446 = vmatpush.bf16.msra.mxu0 0
      %447 = vmatpush.bf16.msra.mxu0 0
      %448 = vmatpush.bf16.msra.mxu0 %v433
      %449 = vmatmul.bf16.gmra.mxu0 %v439
      %v450 = vpop.f32.mrf.mxu0
      %v451 = vadd.f32 0.0, %v450
      %v452 = vpop.f32.mrf.mxu0
      %v453 = vadd.f32 0.0, %v452
      %454 = vdwg.mxu0
      %455 = vmatpush.bf16.msra.mxu0 0
      %456 = vmatpush.bf16.msra.mxu0 0
      %457 = vmatpush.bf16.msra.mxu0 0
      %458 = vmatpush.bf16.msra.mxu0 0
      %459 = vmatpush.bf16.msra.mxu0 0
      %460 = vmatpush.bf16.msra.mxu0 0
      %461 = vmatpush.bf16.msra.mxu0 0
      %462 = vmatpush.bf16.msra.mxu0 %v434
      %463 = vmatmul.bf16.gmra.mxu0 %v439
      %v464 = vpop.f32.mrf.mxu0
      %v465 = vadd.f32 0.0, %v464
      %v466 = vpop.f32.mrf.mxu0
      %v467 = vadd.f32 0.0, %v466
      %468 = vdwg.mxu0
      %469 = vmatpush.bf16.msra.mxu0 0
      %470 = vmatpush.bf16.msra.mxu0 0
      %471 = vmatpush.bf16.msra.mxu0 0
      %472 = vmatpush.bf16.msra.mxu0 0
      %473 = vmatpush.bf16.msra.mxu0 0
      %474 = vmatpush.bf16.msra.mxu0 0
      %475 = vmatpush.bf16.msra.mxu0 0
      %476 = vmatpush.bf16.msra.mxu0 %v431
      %477 = vmatmul.bf16.gmra.mxu0 %v439
      %v478 = vpop.f32.mrf.mxu0
      %v479 = vadd.f32 0.0, %v478
      %v480 = vpop.f32.mrf.mxu0
      %v481 = vadd.f32 0.0, %v480
      %482 = vdwg.mxu0
      %v483 = vadd.f32 %v386, %v451
      %v484 = vadd.f32 %v400, %v465
      %v485 = vadd.f32 %v414, %v479
      %v486 = vadd.f32 %v388, %v453
      %v487 = vadd.f32 %v402, %v467
      %v488 = vadd.f32 %v416, %v481
      %s489 = scalar_lea.vmem %s3, 8
      %v490 = vld [vmem:[%s489] sm:$0xf]
      %v491 = vld [vmem:[%s489 + $0x4] sm:$0xf]
      %v494 = vunpack.c.l.b16 %v490
      %v495 = vunpack.c.l.b16 %v491
      %v496 = vpack.c.b16 %v495, %v494
      %497 = vrot.lane.b32.xlu0 %v300, 127
      %v498 = vpop.permute.xlu0 %497
      %499 = vrot.lane.b32.xlu0 %v301, 127
      %v500 = vpop.permute.xlu0 %499
      %501 = vrot.lane.b32.xlu0 %v302, 127
      %v502 = vpop.permute.xlu0 %501
      %v503 = vsel %vm432, %v498, %v500
      %v504 = vsel %vm432, %v500, %v502
      %v509 = vsel %vm306, %v496, 0
      %511 = vmatpush.bf16.msra.mxu0 0
      %512 = vmatpush.bf16.msra.mxu0 0
      %513 = vmatpush.bf16.msra.mxu0 0
      %514 = vmatpush.bf16.msra.mxu0 0
      %515 = vmatpush.bf16.msra.mxu0 0
      %516 = vmatpush.bf16.msra.mxu0 0
      %517 = vmatpush.bf16.msra.mxu0 0
      %518 = vmatpush.bf16.msra.mxu0 %v503
      %519 = vmatmul.bf16.gmra.mxu0 %v509
      %v520 = vpop.f32.mrf.mxu0
      %v521 = vadd.f32 0.0, %v520
      %v522 = vpop.f32.mrf.mxu0
      %v523 = vadd.f32 0.0, %v522
      %524 = vdwg.mxu0
      %525 = vmatpush.bf16.msra.mxu0 0
      %526 = vmatpush.bf16.msra.mxu0 0
      %527 = vmatpush.bf16.msra.mxu0 0
      %528 = vmatpush.bf16.msra.mxu0 0
      %529 = vmatpush.bf16.msra.mxu0 0
      %530 = vmatpush.bf16.msra.mxu0 0
      %531 = vmatpush.bf16.msra.mxu0 0
      %532 = vmatpush.bf16.msra.mxu0 %v504
      %533 = vmatmul.bf16.gmra.mxu0 %v509
      %v534 = vpop.f32.mrf.mxu0
      %v535 = vadd.f32 0.0, %v534
      %v536 = vpop.f32.mrf.mxu0
      %v537 = vadd.f32 0.0, %v536
      %538 = vdwg.mxu0
      %539 = vmatpush.bf16.msra.mxu0 0
      %540 = vmatpush.bf16.msra.mxu0 0
      %541 = vmatpush.bf16.msra.mxu0 0
      %542 = vmatpush.bf16.msra.mxu0 0
      %543 = vmatpush.bf16.msra.mxu0 0
      %544 = vmatpush.bf16.msra.mxu0 0
      %545 = vmatpush.bf16.msra.mxu0 0
      %546 = vmatpush.bf16.msra.mxu0 %v502
      %547 = vmatmul.bf16.gmra.mxu0 %v509
      %v548 = vpop.f32.mrf.mxu0
      %v549 = vadd.f32 0.0, %v548
      %v550 = vpop.f32.mrf.mxu0
      %v551 = vadd.f32 0.0, %v550
      %552 = vdwg.mxu0
      %v553 = vadd.f32 %v483, %v521
      %v554 = vadd.f32 %v484, %v535
      %v555 = vadd.f32 %v485, %v549
      %v556 = vadd.f32 %v486, %v523
      %v557 = vadd.f32 %v487, %v537
      %v558 = vadd.f32 %v488, %v551
      %s559 = scalar_lea.vmem %s2, 16
      %v560 = vld [vmem:[%s559] sm:$0xf]
      %v561 = vld [vmem:[%s559 + $0x4] sm:$0xf]
      %v564 = vunpack.c.l.b16 %v560
      %v565 = vunpack.c.l.b16 %v561
      %v566 = vpack.c.b16 %v565, %v564
      %567 = vrot.lane.b32.xlu0 %v367, 126
      %v568 = vpop.permute.xlu0 %567
      %569 = vrot.lane.b32.xlu0 %v368, 126
      %v570 = vpop.permute.xlu0 %569
      %571 = vrot.lane.b32.xlu0 %v369, 126
      %v572 = vpop.permute.xlu0 %571
      %vm573 = vcmask 1031168
      %v574 = vsel %vm573, %v568, %v570
      %v575 = vsel %vm573, %v570, %v572
      %v580 = vsel %vm306, %v566, 0
      %582 = vmatpush.bf16.msra.mxu0 0
      %583 = vmatpush.bf16.msra.mxu0 0
      %584 = vmatpush.bf16.msra.mxu0 0
      %585 = vmatpush.bf16.msra.mxu0 0
      %586 = vmatpush.bf16.msra.mxu0 0
      %587 = vmatpush.bf16.msra.mxu0 0
      %588 = vmatpush.bf16.msra.mxu0 0
      %589 = vmatpush.bf16.msra.mxu0 %v574
      %590 = vmatmul.bf16.gmra.mxu0 %v580
      %v591 = vpop.f32.mrf.mxu0
      %v592 = vadd.f32 0.0, %v591
      %v593 = vpop.f32.mrf.mxu0
      %v594 = vadd.f32 0.0, %v593
      %595 = vdwg.mxu0
      %596 = vmatpush.bf16.msra.mxu0 0
      %597 = vmatpush.bf16.msra.mxu0 0
      %598 = vmatpush.bf16.msra.mxu0 0
      %599 = vmatpush.bf16.msra.mxu0 0
      %600 = vmatpush.bf16.msra.mxu0 0
      %601 = vmatpush.bf16.msra.mxu0 0
      %602 = vmatpush.bf16.msra.mxu0 0
      %603 = vmatpush.bf16.msra.mxu0 %v575
      %604 = vmatmul.bf16.gmra.mxu0 %v580
      %v605 = vpop.f32.mrf.mxu0
      %v606 = vadd.f32 0.0, %v605
      %v607 = vpop.f32.mrf.mxu0
      %v608 = vadd.f32 0.0, %v607
      %609 = vdwg.mxu0
      %610 = vmatpush.bf16.msra.mxu0 0
      %611 = vmatpush.bf16.msra.mxu0 0
      %612 = vmatpush.bf16.msra.mxu0 0
      %613 = vmatpush.bf16.msra.mxu0 0
      %614 = vmatpush.bf16.msra.mxu0 0
      %615 = vmatpush.bf16.msra.mxu0 0
      %616 = vmatpush.bf16.msra.mxu0 0
      %617 = vmatpush.bf16.msra.mxu0 %v572
      %618 = vmatmul.bf16.gmra.mxu0 %v580
      %v619 = vpop.f32.mrf.mxu0
      %v620 = vadd.f32 0.0, %v619
      %v621 = vpop.f32.mrf.mxu0
      %v622 = vadd.f32 0.0, %v621
      %623 = vdwg.mxu0
      %v624 = vadd.f32 %v553, %v592
      %v625 = vadd.f32 %v554, %v606
      %v626 = vadd.f32 %v555, %v620
      %v627 = vadd.f32 %v556, %v594
      %v628 = vadd.f32 %v557, %v608
      %v629 = vadd.f32 %v558, %v622
      %s630 = scalar_lea.vmem %s3, 16
      %v631 = vld [vmem:[%s630] sm:$0xf]
      %v632 = vld [vmem:[%s630 + $0x4] sm:$0xf]
      %v635 = vunpack.c.l.b16 %v631
      %v636 = vunpack.c.l.b16 %v632
      %v637 = vpack.c.b16 %v636, %v635
      %638 = vrot.lane.b32.xlu0 %v300, 126
      %v639 = vpop.permute.xlu0 %638
      %640 = vrot.lane.b32.xlu0 %v301, 126
      %v641 = vpop.permute.xlu0 %640
      %642 = vrot.lane.b32.xlu0 %v302, 126
      %v643 = vpop.permute.xlu0 %642
      %v644 = vsel %vm573, %v639, %v641
      %v645 = vsel %vm573, %v641, %v643
      %v650 = vsel %vm306, %v637, 0
      %652 = vmatpush.bf16.msra.mxu0 0
      %653 = vmatpush.bf16.msra.mxu0 0
      %654 = vmatpush.bf16.msra.mxu0 0
      %655 = vmatpush.bf16.msra.mxu0 0
      %656 = vmatpush.bf16.msra.mxu0 0
      %657 = vmatpush.bf16.msra.mxu0 0
      %658 = vmatpush.bf16.msra.mxu0 0
      %659 = vmatpush.bf16.msra.mxu0 %v644
      %660 = vmatmul.bf16.gmra.mxu0 %v650
      %v661 = vpop.f32.mrf.mxu0
      %v662 = vadd.f32 0.0, %v661
      %v663 = vpop.f32.mrf.mxu0
      %v664 = vadd.f32 0.0, %v663
      %665 = vdwg.mxu0
      %666 = vmatpush.bf16.msra.mxu0 0
      %667 = vmatpush.bf16.msra.mxu0 0
      %668 = vmatpush.bf16.msra.mxu0 0
      %669 = vmatpush.bf16.msra.mxu0 0
      %670 = vmatpush.bf16.msra.mxu0 0
      %671 = vmatpush.bf16.msra.mxu0 0
      %672 = vmatpush.bf16.msra.mxu0 0
      %673 = vmatpush.bf16.msra.mxu0 %v645
      %674 = vmatmul.bf16.gmra.mxu0 %v650
      %v675 = vpop.f32.mrf.mxu0
      %v676 = vadd.f32 0.0, %v675
      %v677 = vpop.f32.mrf.mxu0
      %v678 = vadd.f32 0.0, %v677
      %679 = vdwg.mxu0
      %680 = vmatpush.bf16.msra.mxu0 0
      %681 = vmatpush.bf16.msra.mxu0 0
      %682 = vmatpush.bf16.msra.mxu0 0
      %683 = vmatpush.bf16.msra.mxu0 0
      %684 = vmatpush.bf16.msra.mxu0 0
      %685 = vmatpush.bf16.msra.mxu0 0
      %686 = vmatpush.bf16.msra.mxu0 0
      %687 = vmatpush.bf16.msra.mxu0 %v643
      %688 = vmatmul.bf16.gmra.mxu0 %v650
      %v689 = vpop.f32.mrf.mxu0
      %v690 = vadd.f32 0.0, %v689
      %v691 = vpop.f32.mrf.mxu0
      %v692 = vadd.f32 0.0, %v691
      %693 = vdwg.mxu0
      %v694 = vadd.f32 %v624, %v662
      %v695 = vadd.f32 %v625, %v676
      %v696 = vadd.f32 %v626, %v690
      %v697 = vadd.f32 %v627, %v664
      %v698 = vadd.f32 %v628, %v678
      %v699 = vadd.f32 %v629, %v692
      %s700 = scalar_lea.vmem %s2, 24
      %v701 = vld [vmem:[%s700] sm:$0xf]
      %v702 = vld [vmem:[%s700 + $0x4] sm:$0xf]
      %v705 = vunpack.c.l.b16 %v701
      %v706 = vunpack.c.l.b16 %v702
      %v707 = vpack.c.b16 %v706, %v705
      %708 = vrot.lane.b32.xlu0 %v367, 110
      %v709 = vpop.permute.xlu0 %708
      %710 = vrot.lane.b32.xlu0 %v368, 110
      %v711 = vpop.permute.xlu0 %710
      %712 = vrot.lane.b32.xlu0 %v369, 110
      %v713 = vpop.permute.xlu0 %712
      %vm714 = vcmask 900096
      %v715 = vsel %vm714, %v709, %v711
      %v716 = vsel %vm714, %v711, %v713
      %v721 = vsel %vm306, %v707, 0
      %723 = vmatpush.bf16.msra.mxu0 0
      %724 = vmatpush.bf16.msra.mxu0 0
      %725 = vmatpush.bf16.msra.mxu0 0
      %726 = vmatpush.bf16.msra.mxu0 0
      %727 = vmatpush.bf16.msra.mxu0 0
      %728 = vmatpush.bf16.msra.mxu0 0
      %729 = vmatpush.bf16.msra.mxu0 0
      %730 = vmatpush.bf16.msra.mxu0 %v715
      %731 = vmatmul.bf16.gmra.mxu0 %v721
      %v732 = vpop.f32.mrf.mxu0
      %v733 = vadd.f32 0.0, %v732
      %v734 = vpop.f32.mrf.mxu0
      %v735 = vadd.f32 0.0, %v734
      %736 = vdwg.mxu0
      %737 = vmatpush.bf16.msra.mxu0 0
      %738 = vmatpush.bf16.msra.mxu0 0
      %739 = vmatpush.bf16.msra.mxu0 0
      %740 = vmatpush.bf16.msra.mxu0 0
      %741 = vmatpush.bf16.msra.mxu0 0
      %742 = vmatpush.bf16.msra.mxu0 0
      %743 = vmatpush.bf16.msra.mxu0 0
      %744 = vmatpush.bf16.msra.mxu0 %v716
      %745 = vmatmul.bf16.gmra.mxu0 %v721
      %v746 = vpop.f32.mrf.mxu0
      %v747 = vadd.f32 0.0, %v746
      %v748 = vpop.f32.mrf.mxu0
      %v749 = vadd.f32 0.0, %v748
      %750 = vdwg.mxu0
      %751 = vmatpush.bf16.msra.mxu0 0
      %752 = vmatpush.bf16.msra.mxu0 0
      %753 = vmatpush.bf16.msra.mxu0 0
      %754 = vmatpush.bf16.msra.mxu0 0
      %755 = vmatpush.bf16.msra.mxu0 0
      %756 = vmatpush.bf16.msra.mxu0 0
      %757 = vmatpush.bf16.msra.mxu0 0
      %758 = vmatpush.bf16.msra.mxu0 %v713
      %759 = vmatmul.bf16.gmra.mxu0 %v721
      %v760 = vpop.f32.mrf.mxu0
      %v761 = vadd.f32 0.0, %v760
      %v762 = vpop.f32.mrf.mxu0
      %v763 = vadd.f32 0.0, %v762
      %764 = vdwg.mxu0
      %v765 = vadd.f32 %v694, %v733
      %v766 = vadd.f32 %v695, %v747
      %v767 = vadd.f32 %v696, %v761
      %v768 = vadd.f32 %v697, %v735
      %v769 = vadd.f32 %v698, %v749
      %v770 = vadd.f32 %v699, %v763
      %s771 = scalar_lea.vmem %s3, 24
      %v772 = vld [vmem:[%s771] sm:$0xf]
      %v773 = vld [vmem:[%s771 + $0x4] sm:$0xf]
      %v776 = vunpack.c.l.b16 %v772
      %v777 = vunpack.c.l.b16 %v773
      %v778 = vpack.c.b16 %v777, %v776
      %779 = vrot.lane.b32.xlu0 %v300, 110
      %v780 = vpop.permute.xlu0 %779
      %781 = vrot.lane.b32.xlu0 %v301, 110
      %v782 = vpop.permute.xlu0 %781
      %783 = vrot.lane.b32.xlu0 %v302, 110
      %v784 = vpop.permute.xlu0 %783
      %v785 = vsel %vm714, %v780, %v782
      %v786 = vsel %vm714, %v782, %v784
      %v791 = vsel %vm306, %v778, 0
      %793 = vmatpush.bf16.msra.mxu0 0
      %794 = vmatpush.bf16.msra.mxu0 0
      %795 = vmatpush.bf16.msra.mxu0 0
      %796 = vmatpush.bf16.msra.mxu0 0
      %797 = vmatpush.bf16.msra.mxu0 0
      %798 = vmatpush.bf16.msra.mxu0 0
      %799 = vmatpush.bf16.msra.mxu0 0
      %800 = vmatpush.bf16.msra.mxu0 %v785
      %801 = vmatmul.bf16.gmra.mxu0 %v791
      %v802 = vpop.f32.mrf.mxu0
      %v803 = vadd.f32 0.0, %v802
      %v804 = vpop.f32.mrf.mxu0
      %v805 = vadd.f32 0.0, %v804
      %806 = vdwg.mxu0
      %807 = vmatpush.bf16.msra.mxu0 0
      %808 = vmatpush.bf16.msra.mxu0 0
      %809 = vmatpush.bf16.msra.mxu0 0
      %810 = vmatpush.bf16.msra.mxu0 0
      %811 = vmatpush.bf16.msra.mxu0 0
      %812 = vmatpush.bf16.msra.mxu0 0
      %813 = vmatpush.bf16.msra.mxu0 0
      %814 = vmatpush.bf16.msra.mxu0 %v786
      %815 = vmatmul.bf16.gmra.mxu0 %v791
      %v816 = vpop.f32.mrf.mxu0
      %v817 = vadd.f32 0.0, %v816
      %v818 = vpop.f32.mrf.mxu0
      %v819 = vadd.f32 0.0, %v818
      %820 = vdwg.mxu0
      %821 = vmatpush.bf16.msra.mxu0 0
      %822 = vmatpush.bf16.msra.mxu0 0
      %823 = vmatpush.bf16.msra.mxu0 0
      %824 = vmatpush.bf16.msra.mxu0 0
      %825 = vmatpush.bf16.msra.mxu0 0
      %826 = vmatpush.bf16.msra.mxu0 0
      %827 = vmatpush.bf16.msra.mxu0 0
      %828 = vmatpush.bf16.msra.mxu0 %v784
      %829 = vmatmul.bf16.gmra.mxu0 %v791
      %v830 = vpop.f32.mrf.mxu0
      %v831 = vadd.f32 0.0, %v830
      %v832 = vpop.f32.mrf.mxu0
      %v833 = vadd.f32 0.0, %v832
      %834 = vdwg.mxu0
      %v835 = vadd.f32 %v765, %v803
      %v836 = vadd.f32 %v766, %v817
      %v837 = vadd.f32 %v767, %v831
      %v838 = vadd.f32 %v768, %v805
      %v839 = vadd.f32 %v769, %v819
      %v840 = vadd.f32 %v770, %v833
      %s841 = scalar_lea.vmem %s2, 32
      %v842 = vld [vmem:[%s841] sm:$0xf]
      %v843 = vld [vmem:[%s841 + $0x4] sm:$0xf]
      %v846 = vunpack.c.l.b16 %v842
      %v847 = vunpack.c.l.b16 %v843
      %v848 = vpack.c.b16 %v847, %v846
      %849 = vrot.lane.b32.xlu0 %v367, 109
      %v850 = vpop.permute.xlu0 %849
      %851 = vrot.lane.b32.xlu0 %v368, 109
      %v852 = vpop.permute.xlu0 %851
      %853 = vrot.lane.b32.xlu0 %v369, 109
      %v854 = vpop.permute.xlu0 %853
      %vm855 = vcmask 891904
      %v856 = vsel %vm855, %v850, %v852
      %v857 = vsel %vm855, %v852, %v854
      %v862 = vsel %vm306, %v848, 0
      %864 = vmatpush.bf16.msra.mxu0 0
      %865 = vmatpush.bf16.msra.mxu0 0
      %866 = vmatpush.bf16.msra.mxu0 0
      %867 = vmatpush.bf16.msra.mxu0 0
      %868 = vmatpush.bf16.msra.mxu0 0
      %869 = vmatpush.bf16.msra.mxu0 0
      %870 = vmatpush.bf16.msra.mxu0 0
      %871 = vmatpush.bf16.msra.mxu0 %v856
      %872 = vmatmul.bf16.gmra.mxu0 %v862
      %v873 = vpop.f32.mrf.mxu0
      %v874 = vadd.f32 0.0, %v873
      %v875 = vpop.f32.mrf.mxu0
      %v876 = vadd.f32 0.0, %v875
      %877 = vdwg.mxu0
      %878 = vmatpush.bf16.msra.mxu0 0
      %879 = vmatpush.bf16.msra.mxu0 0
      %880 = vmatpush.bf16.msra.mxu0 0
      %881 = vmatpush.bf16.msra.mxu0 0
      %882 = vmatpush.bf16.msra.mxu0 0
      %883 = vmatpush.bf16.msra.mxu0 0
      %884 = vmatpush.bf16.msra.mxu0 0
      %885 = vmatpush.bf16.msra.mxu0 %v857
      %886 = vmatmul.bf16.gmra.mxu0 %v862
      %v887 = vpop.f32.mrf.mxu0
      %v888 = vadd.f32 0.0, %v887
      %v889 = vpop.f32.mrf.mxu0
      %v890 = vadd.f32 0.0, %v889
      %891 = vdwg.mxu0
      %892 = vmatpush.bf16.msra.mxu0 0
      %893 = vmatpush.bf16.msra.mxu0 0
      %894 = vmatpush.bf16.msra.mxu0 0
      %895 = vmatpush.bf16.msra.mxu0 0
      %896 = vmatpush.bf16.msra.mxu0 0
      %897 = vmatpush.bf16.msra.mxu0 0
      %898 = vmatpush.bf16.msra.mxu0 0
      %899 = vmatpush.bf16.msra.mxu0 %v854
      %900 = vmatmul.bf16.gmra.mxu0 %v862
      %v901 = vpop.f32.mrf.mxu0
      %v902 = vadd.f32 0.0, %v901
      %v903 = vpop.f32.mrf.mxu0
      %v904 = vadd.f32 0.0, %v903
      %905 = vdwg.mxu0
      %v906 = vadd.f32 %v835, %v874
      %v907 = vadd.f32 %v836, %v888
      %v908 = vadd.f32 %v837, %v902
      %v909 = vadd.f32 %v838, %v876
      %v910 = vadd.f32 %v839, %v890
      %v911 = vadd.f32 %v840, %v904
      %s912 = scalar_lea.vmem %s3, 32
      %v913 = vld [vmem:[%s912] sm:$0xf]
      %v914 = vld [vmem:[%s912 + $0x4] sm:$0xf]
      %v917 = vunpack.c.l.b16 %v913
      %v918 = vunpack.c.l.b16 %v914
      %v919 = vpack.c.b16 %v918, %v917
      %920 = vrot.lane.b32.xlu0 %v300, 109
      %v921 = vpop.permute.xlu0 %920
      %922 = vrot.lane.b32.xlu0 %v301, 109
      %v923 = vpop.permute.xlu0 %922
      %924 = vrot.lane.b32.xlu0 %v302, 109
      %v925 = vpop.permute.xlu0 %924
      %v926 = vsel %vm855, %v921, %v923
      %v927 = vsel %vm855, %v923, %v925
      %v932 = vsel %vm306, %v919, 0
      %934 = vmatpush.bf16.msra.mxu0 0
      %935 = vmatpush.bf16.msra.mxu0 0
      %936 = vmatpush.bf16.msra.mxu0 0
      %937 = vmatpush.bf16.msra.mxu0 0
      %938 = vmatpush.bf16.msra.mxu0 0
      %939 = vmatpush.bf16.msra.mxu0 0
      %940 = vmatpush.bf16.msra.mxu0 0
      %941 = vmatpush.bf16.msra.mxu0 %v926
      %942 = vmatmul.bf16.gmra.mxu0 %v932
      %v943 = vpop.f32.mrf.mxu0
      %v944 = vadd.f32 0.0, %v943
      %v945 = vpop.f32.mrf.mxu0
      %v946 = vadd.f32 0.0, %v945
      %947 = vdwg.mxu0
      %948 = vmatpush.bf16.msra.mxu0 0
      %949 = vmatpush.bf16.msra.mxu0 0
      %950 = vmatpush.bf16.msra.mxu0 0
      %951 = vmatpush.bf16.msra.mxu0 0
      %952 = vmatpush.bf16.msra.mxu0 0
      %953 = vmatpush.bf16.msra.mxu0 0
      %954 = vmatpush.bf16.msra.mxu0 0
      %955 = vmatpush.bf16.msra.mxu0 %v927
      %956 = vmatmul.bf16.gmra.mxu0 %v932
      %v957 = vpop.f32.mrf.mxu0
      %v958 = vadd.f32 0.0, %v957
      %v959 = vpop.f32.mrf.mxu0
      %v960 = vadd.f32 0.0, %v959
      %961 = vdwg.mxu0
      %962 = vmatpush.bf16.msra.mxu0 0
      %963 = vmatpush.bf16.msra.mxu0 0
      %964 = vmatpush.bf16.msra.mxu0 0
      %965 = vmatpush.bf16.msra.mxu0 0
      %966 = vmatpush.bf16.msra.mxu0 0
      %967 = vmatpush.bf16.msra.mxu0 0
      %968 = vmatpush.bf16.msra.mxu0 0
      %969 = vmatpush.bf16.msra.mxu0 %v925
      %970 = vmatmul.bf16.gmra.mxu0 %v932
      %v971 = vpop.f32.mrf.mxu0
      %v972 = vadd.f32 0.0, %v971
      %v973 = vpop.f32.mrf.mxu0
      %v974 = vadd.f32 0.0, %v973
      %975 = vdwg.mxu0
      %v976 = vadd.f32 %v906, %v944
      %v977 = vadd.f32 %v907, %v958
      %v978 = vadd.f32 %v908, %v972
      %v979 = vadd.f32 %v909, %v946
      %v980 = vadd.f32 %v910, %v960
      %v981 = vadd.f32 %v911, %v974
      %s982 = scalar_lea.vmem %s2, 40
      %v983 = vld [vmem:[%s982] sm:$0xf]
      %v984 = vld [vmem:[%s982 + $0x4] sm:$0xf]
      %v987 = vunpack.c.l.b16 %v983
      %v988 = vunpack.c.l.b16 %v984
      %v989 = vpack.c.b16 %v988, %v987
      %990 = vrot.lane.b32.xlu0 %v367, 108
      %v991 = vpop.permute.xlu0 %990
      %992 = vrot.lane.b32.xlu0 %v368, 108
      %v993 = vpop.permute.xlu0 %992
      %994 = vrot.lane.b32.xlu0 %v369, 108
      %v995 = vpop.permute.xlu0 %994
      %vm996 = vcmask 883712
      %v997 = vsel %vm996, %v991, %v993
      %v998 = vsel %vm996, %v993, %v995
      %v1003 = vsel %vm306, %v989, 0
      %1005 = vmatpush.bf16.msra.mxu0 0
      %1006 = vmatpush.bf16.msra.mxu0 0
      %1007 = vmatpush.bf16.msra.mxu0 0
      %1008 = vmatpush.bf16.msra.mxu0 0
      %1009 = vmatpush.bf16.msra.mxu0 0
      %1010 = vmatpush.bf16.msra.mxu0 0
      %1011 = vmatpush.bf16.msra.mxu0 0
      %1012 = vmatpush.bf16.msra.mxu0 %v997
      %1013 = vmatmul.bf16.gmra.mxu0 %v1003
      %v1014 = vpop.f32.mrf.mxu0
      %v1015 = vadd.f32 0.0, %v1014
      %v1016 = vpop.f32.mrf.mxu0
      %v1017 = vadd.f32 0.0, %v1016
      %1018 = vdwg.mxu0
      %1019 = vmatpush.bf16.msra.mxu0 0
      %1020 = vmatpush.bf16.msra.mxu0 0
      %1021 = vmatpush.bf16.msra.mxu0 0
      %1022 = vmatpush.bf16.msra.mxu0 0
      %1023 = vmatpush.bf16.msra.mxu0 0
      %1024 = vmatpush.bf16.msra.mxu0 0
      %1025 = vmatpush.bf16.msra.mxu0 0
      %1026 = vmatpush.bf16.msra.mxu0 %v998
      %1027 = vmatmul.bf16.gmra.mxu0 %v1003
      %v1028 = vpop.f32.mrf.mxu0
      %v1029 = vadd.f32 0.0, %v1028
      %v1030 = vpop.f32.mrf.mxu0
      %v1031 = vadd.f32 0.0, %v1030
      %1032 = vdwg.mxu0
      %1033 = vmatpush.bf16.msra.mxu0 0
      %1034 = vmatpush.bf16.msra.mxu0 0
      %1035 = vmatpush.bf16.msra.mxu0 0
      %1036 = vmatpush.bf16.msra.mxu0 0
      %1037 = vmatpush.bf16.msra.mxu0 0
      %1038 = vmatpush.bf16.msra.mxu0 0
      %1039 = vmatpush.bf16.msra.mxu0 0
      %1040 = vmatpush.bf16.msra.mxu0 %v995
      %1041 = vmatmul.bf16.gmra.mxu0 %v1003
      %v1042 = vpop.f32.mrf.mxu0
      %v1043 = vadd.f32 0.0, %v1042
      %v1044 = vpop.f32.mrf.mxu0
      %v1045 = vadd.f32 0.0, %v1044
      %1046 = vdwg.mxu0
      %v1047 = vadd.f32 %v976, %v1015
      %v1048 = vadd.f32 %v977, %v1029
      %v1049 = vadd.f32 %v978, %v1043
      %v1050 = vadd.f32 %v979, %v1017
      %v1051 = vadd.f32 %v980, %v1031
      %v1052 = vadd.f32 %v981, %v1045
      %s1053 = scalar_lea.vmem %s3, 40
      %v1054 = vld [vmem:[%s1053] sm:$0xf]
      %v1055 = vld [vmem:[%s1053 + $0x4] sm:$0xf]
      %v1058 = vunpack.c.l.b16 %v1054
      %v1059 = vunpack.c.l.b16 %v1055
      %v1060 = vpack.c.b16 %v1059, %v1058
      %1061 = vrot.lane.b32.xlu0 %v300, 108
      %v1062 = vpop.permute.xlu0 %1061
      %1063 = vrot.lane.b32.xlu0 %v301, 108
      %v1064 = vpop.permute.xlu0 %1063
      %1065 = vrot.lane.b32.xlu0 %v302, 108
      %v1066 = vpop.permute.xlu0 %1065
      %v1067 = vsel %vm996, %v1062, %v1064
      %v1068 = vsel %vm996, %v1064, %v1066
      %v1073 = vsel %vm306, %v1060, 0
      %1075 = vmatpush.bf16.msra.mxu0 0
      %1076 = vmatpush.bf16.msra.mxu0 0
      %1077 = vmatpush.bf16.msra.mxu0 0
      %1078 = vmatpush.bf16.msra.mxu0 0
      %1079 = vmatpush.bf16.msra.mxu0 0
      %1080 = vmatpush.bf16.msra.mxu0 0
      %1081 = vmatpush.bf16.msra.mxu0 0
      %1082 = vmatpush.bf16.msra.mxu0 %v1067
      %1083 = vmatmul.bf16.gmra.mxu0 %v1073
      %v1084 = vpop.f32.mrf.mxu0
      %v1085 = vadd.f32 0.0, %v1084
      %v1086 = vpop.f32.mrf.mxu0
      %v1087 = vadd.f32 0.0, %v1086
      %1088 = vdwg.mxu0
      %1089 = vmatpush.bf16.msra.mxu0 0
      %1090 = vmatpush.bf16.msra.mxu0 0
      %1091 = vmatpush.bf16.msra.mxu0 0
      %1092 = vmatpush.bf16.msra.mxu0 0
      %1093 = vmatpush.bf16.msra.mxu0 0
      %1094 = vmatpush.bf16.msra.mxu0 0
      %1095 = vmatpush.bf16.msra.mxu0 0
      %1096 = vmatpush.bf16.msra.mxu0 %v1068
      %1097 = vmatmul.bf16.gmra.mxu0 %v1073
      %v1098 = vpop.f32.mrf.mxu0
      %v1099 = vadd.f32 0.0, %v1098
      %v1100 = vpop.f32.mrf.mxu0
      %v1101 = vadd.f32 0.0, %v1100
      %1102 = vdwg.mxu0
      %1103 = vmatpush.bf16.msra.mxu0 0
      %1104 = vmatpush.bf16.msra.mxu0 0
      %1105 = vmatpush.bf16.msra.mxu0 0
      %1106 = vmatpush.bf16.msra.mxu0 0
      %1107 = vmatpush.bf16.msra.mxu0 0
      %1108 = vmatpush.bf16.msra.mxu0 0
      %1109 = vmatpush.bf16.msra.mxu0 0
      %1110 = vmatpush.bf16.msra.mxu0 %v1066
      %1111 = vmatmul.bf16.gmra.mxu0 %v1073
      %v1112 = vpop.f32.mrf.mxu0
      %v1113 = vadd.f32 0.0, %v1112
      %v1114 = vpop.f32.mrf.mxu0
      %v1115 = vadd.f32 0.0, %v1114
      %1116 = vdwg.mxu0
      %v1117 = vadd.f32 %v1047, %v1085
      %v1118 = vadd.f32 %v1048, %v1099
      %v1119 = vadd.f32 %v1049, %v1113
      %v1120 = vadd.f32 %v1050, %v1087
      %v1121 = vadd.f32 %v1051, %v1101
      %v1122 = vadd.f32 %v1052, %v1115
      %s1123 = scalar_lea.vmem %s2, 48
      %v1124 = vld [vmem:[%s1123] sm:$0xf]
      %v1125 = vld [vmem:[%s1123 + $0x4] sm:$0xf]
      %v1126 = vld [vmem:[%s261] sm:$0xff]
      %v1127 = vld [vmem:[%s261 + $0x8] sm:$0xff]
      %v1128 = vld [vmem:[%s261 + $0x10] sm:$0xff]
      %v1129 = vld [vmem:[%s261 + $0x18] sm:$0xff]
      %v1132 = vunpack.c.l.b16 %v1124
      %v1133 = vunpack.c.l.b16 %v1125
      %v1134 = vpack.c.b16 %v1133, %v1132
      %v1139 = vunpack.c.l.b16 %v1126
      %v1140 = vunpack.c.h.b16 %v1126
      %v1141 = vunpack.c.l.b16 %v1127
      %v1142 = vunpack.c.h.b16 %v1127
      %v1143 = vunpack.c.l.b16 %v1128
      %v1144 = vunpack.c.h.b16 %v1128
      %v1145 = vunpack.c.l.b16 %v1129
      %v1146 = vunpack.c.h.b16 %v1129
      %v1147 = vpack.c.b16 %v1143, %v1139
      %v1148 = vpack.c.b16 %v1144, %v1140
      %v1149 = vpack.c.b16 %v1145, %v1141
      %v1150 = vpack.c.b16 %v1146, %v1142
      %1151 = vrot.lane.b32.xlu0 %v1147, 92
      %v1152 = vpop.permute.xlu0 %1151
      %1153 = vrot.lane.b32.xlu0 %v1148, 92
      %v1154 = vpop.permute.xlu0 %1153
      %1155 = vrot.lane.b32.xlu0 %v1149, 92
      %v1156 = vpop.permute.xlu0 %1155
      %1157 = vrot.lane.b32.xlu0 %v1150, 92
      %v1158 = vpop.permute.xlu0 %1157
      %vm1159 = vcmask 752640
      %v1160 = vsel %vm1159, %v1152, %v1154
      %v1161 = vsel %vm1159, %v1154, %v1156
      %v1162 = vsel %vm1159, %v1156, %v1158
      %v1167 = vsel %vm306, %v1134, 0
      %1169 = vmatpush.bf16.msra.mxu0 0
      %1170 = vmatpush.bf16.msra.mxu0 0
      %1171 = vmatpush.bf16.msra.mxu0 0
      %1172 = vmatpush.bf16.msra.mxu0 0
      %1173 = vmatpush.bf16.msra.mxu0 0
      %1174 = vmatpush.bf16.msra.mxu0 0
      %1175 = vmatpush.bf16.msra.mxu0 0
      %1176 = vmatpush.bf16.msra.mxu0 %v1160
      %1177 = vmatmul.bf16.gmra.mxu0 %v1167
      %v1178 = vpop.f32.mrf.mxu0
      %v1179 = vadd.f32 0.0, %v1178
      %v1180 = vpop.f32.mrf.mxu0
      %v1181 = vadd.f32 0.0, %v1180
      %1182 = vdwg.mxu0
      %1183 = vmatpush.bf16.msra.mxu0 0
      %1184 = vmatpush.bf16.msra.mxu0 0
      %1185 = vmatpush.bf16.msra.mxu0 0
      %1186 = vmatpush.bf16.msra.mxu0 0
      %1187 = vmatpush.bf16.msra.mxu0 0
      %1188 = vmatpush.bf16.msra.mxu0 0
      %1189 = vmatpush.bf16.msra.mxu0 0
      %1190 = vmatpush.bf16.msra.mxu0 %v1161
      %1191 = vmatmul.bf16.gmra.mxu0 %v1167
      %v1192 = vpop.f32.mrf.mxu0
      %v1193 = vadd.f32 0.0, %v1192
      %v1194 = vpop.f32.mrf.mxu0
      %v1195 = vadd.f32 0.0, %v1194
      %1196 = vdwg.mxu0
      %1197 = vmatpush.bf16.msra.mxu0 0
      %1198 = vmatpush.bf16.msra.mxu0 0
      %1199 = vmatpush.bf16.msra.mxu0 0
      %1200 = vmatpush.bf16.msra.mxu0 0
      %1201 = vmatpush.bf16.msra.mxu0 0
      %1202 = vmatpush.bf16.msra.mxu0 0
      %1203 = vmatpush.bf16.msra.mxu0 0
      %1204 = vmatpush.bf16.msra.mxu0 %v1162
      %1205 = vmatmul.bf16.gmra.mxu0 %v1167
      %v1206 = vpop.f32.mrf.mxu0
      %v1207 = vadd.f32 0.0, %v1206
      %v1208 = vpop.f32.mrf.mxu0
      %v1209 = vadd.f32 0.0, %v1208
      %1210 = vdwg.mxu0
      %v1211 = vadd.f32 %v1117, %v1179
      %v1212 = vadd.f32 %v1118, %v1193
      %v1213 = vadd.f32 %v1119, %v1207
      %v1214 = vadd.f32 %v1120, %v1181
      %v1215 = vadd.f32 %v1121, %v1195
      %v1216 = vadd.f32 %v1122, %v1209
      %s1217 = scalar_lea.vmem %s3, 48
      %v1218 = vld [vmem:[%s1217] sm:$0xf]
      %v1219 = vld [vmem:[%s1217 + $0x4] sm:$0xf]
      %v1220 = vld [vmem:[%s266] sm:$0xff]
      %v1221 = vld [vmem:[%s266 + $0x8] sm:$0xff]
      %v1222 = vld [vmem:[%s266 + $0x10] sm:$0xff]
      %v1223 = vld [vmem:[%s266 + $0x18] sm:$0xff]
      %v1226 = vunpack.c.l.b16 %v1218
      %v1227 = vunpack.c.l.b16 %v1219
      %v1228 = vpack.c.b16 %v1227, %v1226
      %v1233 = vunpack.c.l.b16 %v1220
      %v1234 = vunpack.c.h.b16 %v1220
      %v1235 = vunpack.c.l.b16 %v1221
      %v1236 = vunpack.c.h.b16 %v1221
      %v1237 = vunpack.c.l.b16 %v1222
      %v1238 = vunpack.c.h.b16 %v1222
      %v1239 = vunpack.c.l.b16 %v1223
      %v1240 = vunpack.c.h.b16 %v1223
      %v1241 = vpack.c.b16 %v1237, %v1233
      %v1242 = vpack.c.b16 %v1238, %v1234
      %v1243 = vpack.c.b16 %v1239, %v1235
      %v1244 = vpack.c.b16 %v1240, %v1236
      %1245 = vrot.lane.b32.xlu0 %v1241, 92
      %v1246 = vpop.permute.xlu0 %1245
      %1247 = vrot.lane.b32.xlu0 %v1242, 92
      %v1248 = vpop.permute.xlu0 %1247
      %1249 = vrot.lane.b32.xlu0 %v1243, 92
      %v1250 = vpop.permute.xlu0 %1249
      %1251 = vrot.lane.b32.xlu0 %v1244, 92
      %v1252 = vpop.permute.xlu0 %1251
      %v1253 = vsel %vm1159, %v1246, %v1248
      %v1254 = vsel %vm1159, %v1248, %v1250
      %v1255 = vsel %vm1159, %v1250, %v1252
      %v1260 = vsel %vm306, %v1228, 0
      %1262 = vmatpush.bf16.msra.mxu0 0
      %1263 = vmatpush.bf16.msra.mxu0 0
      %1264 = vmatpush.bf16.msra.mxu0 0
      %1265 = vmatpush.bf16.msra.mxu0 0
      %1266 = vmatpush.bf16.msra.mxu0 0
      %1267 = vmatpush.bf16.msra.mxu0 0
      %1268 = vmatpush.bf16.msra.mxu0 0
      %1269 = vmatpush.bf16.msra.mxu0 %v1253
      %1270 = vmatmul.bf16.gmra.mxu0 %v1260
      %v1271 = vpop.f32.mrf.mxu0
      %v1272 = vadd.f32 0.0, %v1271
      %v1273 = vpop.f32.mrf.mxu0
      %v1274 = vadd.f32 0.0, %v1273
      %1275 = vdwg.mxu0
      %1276 = vmatpush.bf16.msra.mxu0 0
      %1277 = vmatpush.bf16.msra.mxu0 0
      %1278 = vmatpush.bf16.msra.mxu0 0
      %1279 = vmatpush.bf16.msra.mxu0 0
      %1280 = vmatpush.bf16.msra.mxu0 0
      %1281 = vmatpush.bf16.msra.mxu0 0
      %1282 = vmatpush.bf16.msra.mxu0 0
      %1283 = vmatpush.bf16.msra.mxu0 %v1254
      %1284 = vmatmul.bf16.gmra.mxu0 %v1260
      %v1285 = vpop.f32.mrf.mxu0
      %v1286 = vadd.f32 0.0, %v1285
      %v1287 = vpop.f32.mrf.mxu0
      %v1288 = vadd.f32 0.0, %v1287
      %1289 = vdwg.mxu0
      %1290 = vmatpush.bf16.msra.mxu0 0
      %1291 = vmatpush.bf16.msra.mxu0 0
      %1292 = vmatpush.bf16.msra.mxu0 0
      %1293 = vmatpush.bf16.msra.mxu0 0
      %1294 = vmatpush.bf16.msra.mxu0 0
      %1295 = vmatpush.bf16.msra.mxu0 0
      %1296 = vmatpush.bf16.msra.mxu0 0
      %1297 = vmatpush.bf16.msra.mxu0 %v1255
      %1298 = vmatmul.bf16.gmra.mxu0 %v1260
      %v1299 = vpop.f32.mrf.mxu0
      %v1300 = vadd.f32 0.0, %v1299
      %v1301 = vpop.f32.mrf.mxu0
      %v1302 = vadd.f32 0.0, %v1301
      %1303 = vdwg.mxu0
      %v1304 = vadd.f32 %v1211, %v1272
      %v1305 = vadd.f32 %v1212, %v1286
      %v1306 = vadd.f32 %v1213, %v1300
      %v1307 = vadd.f32 %v1214, %v1274
      %v1308 = vadd.f32 %v1215, %v1288
      %v1309 = vadd.f32 %v1216, %v1302
      %s1310 = scalar_lea.vmem %s2, 56
      %v1311 = vld [vmem:[%s1310] sm:$0xf]
      %v1312 = vld [vmem:[%s1310 + $0x4] sm:$0xf]
      %v1315 = vunpack.c.l.b16 %v1311
      %v1316 = vunpack.c.l.b16 %v1312
      %v1317 = vpack.c.b16 %v1316, %v1315
      %1318 = vrot.lane.b32.xlu0 %v1147, 91
      %v1319 = vpop.permute.xlu0 %1318
      %1320 = vrot.lane.b32.xlu0 %v1148, 91
      %v1321 = vpop.permute.xlu0 %1320
      %1322 = vrot.lane.b32.xlu0 %v1149, 91
      %v1323 = vpop.permute.xlu0 %1322
      %1324 = vrot.lane.b32.xlu0 %v1150, 91
      %v1325 = vpop.permute.xlu0 %1324
      %vm1326 = vcmask 744448
      %v1327 = vsel %vm1326, %v1319, %v1321
      %v1328 = vsel %vm1326, %v1321, %v1323
      %v1329 = vsel %vm1326, %v1323, %v1325
      %v1334 = vsel %vm306, %v1317, 0
      %1336 = vmatpush.bf16.msra.mxu0 0
      %1337 = vmatpush.bf16.msra.mxu0 0
      %1338 = vmatpush.bf16.msra.mxu0 0
      %1339 = vmatpush.bf16.msra.mxu0 0
      %1340 = vmatpush.bf16.msra.mxu0 0
      %1341 = vmatpush.bf16.msra.mxu0 0
      %1342 = vmatpush.bf16.msra.mxu0 0
      %1343 = vmatpush.bf16.msra.mxu0 %v1327
      %1344 = vmatmul.bf16.gmra.mxu0 %v1334
      %v1345 = vpop.f32.mrf.mxu0
      %v1346 = vadd.f32 0.0, %v1345
      %v1347 = vpop.f32.mrf.mxu0
      %v1348 = vadd.f32 0.0, %v1347
      %1349 = vdwg.mxu0
      %1350 = vmatpush.bf16.msra.mxu0 0
      %1351 = vmatpush.bf16.msra.mxu0 0
      %1352 = vmatpush.bf16.msra.mxu0 0
      %1353 = vmatpush.bf16.msra.mxu0 0
      %1354 = vmatpush.bf16.msra.mxu0 0
      %1355 = vmatpush.bf16.msra.mxu0 0
      %1356 = vmatpush.bf16.msra.mxu0 0
      %1357 = vmatpush.bf16.msra.mxu0 %v1328
      %1358 = vmatmul.bf16.gmra.mxu0 %v1334
      %v1359 = vpop.f32.mrf.mxu0
      %v1360 = vadd.f32 0.0, %v1359
      %v1361 = vpop.f32.mrf.mxu0
      %v1362 = vadd.f32 0.0, %v1361
      %1363 = vdwg.mxu0
      %1364 = vmatpush.bf16.msra.mxu0 0
      %1365 = vmatpush.bf16.msra.mxu0 0
      %1366 = vmatpush.bf16.msra.mxu0 0
      %1367 = vmatpush.bf16.msra.mxu0 0
      %1368 = vmatpush.bf16.msra.mxu0 0
      %1369 = vmatpush.bf16.msra.mxu0 0
      %1370 = vmatpush.bf16.msra.mxu0 0
      %1371 = vmatpush.bf16.msra.mxu0 %v1329
      %1372 = vmatmul.bf16.gmra.mxu0 %v1334
      %v1373 = vpop.f32.mrf.mxu0
      %v1374 = vadd.f32 0.0, %v1373
      %v1375 = vpop.f32.mrf.mxu0
      %v1376 = vadd.f32 0.0, %v1375
      %1377 = vdwg.mxu0
      %v1378 = vadd.f32 %v1304, %v1346
      %v1379 = vadd.f32 %v1305, %v1360
      %v1380 = vadd.f32 %v1306, %v1374
      %v1381 = vadd.f32 %v1307, %v1348
      %v1382 = vadd.f32 %v1308, %v1362
      %v1383 = vadd.f32 %v1309, %v1376
      %s1384 = scalar_lea.vmem %s3, 56
      %v1385 = vld [vmem:[%s1384] sm:$0xf]
      %v1386 = vld [vmem:[%s1384 + $0x4] sm:$0xf]
      %v1389 = vunpack.c.l.b16 %v1385
      %v1390 = vunpack.c.l.b16 %v1386
      %v1391 = vpack.c.b16 %v1390, %v1389
      %1392 = vrot.lane.b32.xlu0 %v1241, 91
      %v1393 = vpop.permute.xlu0 %1392
      %1394 = vrot.lane.b32.xlu0 %v1242, 91
      %v1395 = vpop.permute.xlu0 %1394
      %1396 = vrot.lane.b32.xlu0 %v1243, 91
      %v1397 = vpop.permute.xlu0 %1396
      %1398 = vrot.lane.b32.xlu0 %v1244, 91
      %v1399 = vpop.permute.xlu0 %1398
      %v1400 = vsel %vm1326, %v1393, %v1395
      %v1401 = vsel %vm1326, %v1395, %v1397
      %v1402 = vsel %vm1326, %v1397, %v1399
      %v1407 = vsel %vm306, %v1391, 0
      %1409 = vmatpush.bf16.msra.mxu0 0
      %1410 = vmatpush.bf16.msra.mxu0 0
      %1411 = vmatpush.bf16.msra.mxu0 0
      %1412 = vmatpush.bf16.msra.mxu0 0
      %1413 = vmatpush.bf16.msra.mxu0 0
      %1414 = vmatpush.bf16.msra.mxu0 0
      %1415 = vmatpush.bf16.msra.mxu0 0
      %1416 = vmatpush.bf16.msra.mxu0 %v1400
      %1417 = vmatmul.bf16.gmra.mxu0 %v1407
      %v1418 = vpop.f32.mrf.mxu0
      %v1419 = vadd.f32 0.0, %v1418
      %v1420 = vpop.f32.mrf.mxu0
      %v1421 = vadd.f32 0.0, %v1420
      %1422 = vdwg.mxu0
      %1423 = vmatpush.bf16.msra.mxu0 0
      %1424 = vmatpush.bf16.msra.mxu0 0
      %1425 = vmatpush.bf16.msra.mxu0 0
      %1426 = vmatpush.bf16.msra.mxu0 0
      %1427 = vmatpush.bf16.msra.mxu0 0
      %1428 = vmatpush.bf16.msra.mxu0 0
      %1429 = vmatpush.bf16.msra.mxu0 0
      %1430 = vmatpush.bf16.msra.mxu0 %v1401
      %1431 = vmatmul.bf16.gmra.mxu0 %v1407
      %v1432 = vpop.f32.mrf.mxu0
      %v1433 = vadd.f32 0.0, %v1432
      %v1434 = vpop.f32.mrf.mxu0
      %v1435 = vadd.f32 0.0, %v1434
      %1436 = vdwg.mxu0
      %1437 = vmatpush.bf16.msra.mxu0 0
      %1438 = vmatpush.bf16.msra.mxu0 0
      %1439 = vmatpush.bf16.msra.mxu0 0
      %1440 = vmatpush.bf16.msra.mxu0 0
      %1441 = vmatpush.bf16.msra.mxu0 0
      %1442 = vmatpush.bf16.msra.mxu0 0
      %1443 = vmatpush.bf16.msra.mxu0 0
      %1444 = vmatpush.bf16.msra.mxu0 %v1402
      %1445 = vmatmul.bf16.gmra.mxu0 %v1407
      %v1446 = vpop.f32.mrf.mxu0
      %v1447 = vadd.f32 0.0, %v1446
      %v1448 = vpop.f32.mrf.mxu0
      %v1449 = vadd.f32 0.0, %v1448
      %1450 = vdwg.mxu0
      %v1451 = vadd.f32 %v1378, %v1419
      %v1452 = vadd.f32 %v1379, %v1433
      %v1453 = vadd.f32 %v1380, %v1447
      %v1454 = vadd.f32 %v1381, %v1421
      %v1455 = vadd.f32 %v1382, %v1435
      %v1456 = vadd.f32 %v1383, %v1449
      %s1457 = scalar_lea.vmem %s2, 64
      %v1458 = vld [vmem:[%s1457] sm:$0xf]
      %v1459 = vld [vmem:[%s1457 + $0x4] sm:$0xf]
      %v1462 = vunpack.c.l.b16 %v1458
      %v1463 = vunpack.c.l.b16 %v1459
      %v1464 = vpack.c.b16 %v1463, %v1462
      %1465 = vrot.lane.b32.xlu0 %v1147, 90
      %v1466 = vpop.permute.xlu0 %1465
      %1467 = vrot.lane.b32.xlu0 %v1148, 90
      %v1468 = vpop.permute.xlu0 %1467
      %1469 = vrot.lane.b32.xlu0 %v1149, 90
      %v1470 = vpop.permute.xlu0 %1469
      %1471 = vrot.lane.b32.xlu0 %v1150, 90
      %v1472 = vpop.permute.xlu0 %1471
      %vm1473 = vcmask 736256
      %v1474 = vsel %vm1473, %v1466, %v1468
      %v1475 = vsel %vm1473, %v1468, %v1470
      %v1476 = vsel %vm1473, %v1470, %v1472
      %v1481 = vsel %vm306, %v1464, 0
      %1483 = vmatpush.bf16.msra.mxu0 0
      %1484 = vmatpush.bf16.msra.mxu0 0
      %1485 = vmatpush.bf16.msra.mxu0 0
      %1486 = vmatpush.bf16.msra.mxu0 0
      %1487 = vmatpush.bf16.msra.mxu0 0
      %1488 = vmatpush.bf16.msra.mxu0 0
      %1489 = vmatpush.bf16.msra.mxu0 0
      %1490 = vmatpush.bf16.msra.mxu0 %v1474
      %1491 = vmatmul.bf16.gmra.mxu0 %v1481
      %v1492 = vpop.f32.mrf.mxu0
      %v1493 = vadd.f32 0.0, %v1492
      %v1494 = vpop.f32.mrf.mxu0
      %v1495 = vadd.f32 0.0, %v1494
      %1496 = vdwg.mxu0
      %1497 = vmatpush.bf16.msra.mxu0 0
      %1498 = vmatpush.bf16.msra.mxu0 0
      %1499 = vmatpush.bf16.msra.mxu0 0
      %1500 = vmatpush.bf16.msra.mxu0 0
      %1501 = vmatpush.bf16.msra.mxu0 0
      %1502 = vmatpush.bf16.msra.mxu0 0
      %1503 = vmatpush.bf16.msra.mxu0 0
      %1504 = vmatpush.bf16.msra.mxu0 %v1475
      %1505 = vmatmul.bf16.gmra.mxu0 %v1481
      %v1506 = vpop.f32.mrf.mxu0
      %v1507 = vadd.f32 0.0, %v1506
      %v1508 = vpop.f32.mrf.mxu0
      %v1509 = vadd.f32 0.0, %v1508
      %1510 = vdwg.mxu0
      %1511 = vmatpush.bf16.msra.mxu0 0
      %1512 = vmatpush.bf16.msra.mxu0 0
      %1513 = vmatpush.bf16.msra.mxu0 0
      %1514 = vmatpush.bf16.msra.mxu0 0
      %1515 = vmatpush.bf16.msra.mxu0 0
      %1516 = vmatpush.bf16.msra.mxu0 0
      %1517 = vmatpush.bf16.msra.mxu0 0
      %1518 = vmatpush.bf16.msra.mxu0 %v1476
      %1519 = vmatmul.bf16.gmra.mxu0 %v1481
      %v1520 = vpop.f32.mrf.mxu0
      %v1521 = vadd.f32 0.0, %v1520
      %v1522 = vpop.f32.mrf.mxu0
      %v1523 = vadd.f32 0.0, %v1522
      %1524 = vdwg.mxu0
      %v1525 = vadd.f32 %v1451, %v1493
      %v1526 = vadd.f32 %v1452, %v1507
      %v1527 = vadd.f32 %v1453, %v1521
      %v1528 = vadd.f32 %v1454, %v1495
      %v1529 = vadd.f32 %v1455, %v1509
      %v1530 = vadd.f32 %v1456, %v1523
      %s1531 = scalar_lea.vmem %s3, 64
      %v1532 = vld [vmem:[%s1531] sm:$0xf]
      %v1533 = vld [vmem:[%s1531 + $0x4] sm:$0xf]
      %v1536 = vunpack.c.l.b16 %v1532
      %v1537 = vunpack.c.l.b16 %v1533
      %v1538 = vpack.c.b16 %v1537, %v1536
      %1539 = vrot.lane.b32.xlu0 %v1241, 90
      %v1540 = vpop.permute.xlu0 %1539
      %1541 = vrot.lane.b32.xlu0 %v1242, 90
      %v1542 = vpop.permute.xlu0 %1541
      %1543 = vrot.lane.b32.xlu0 %v1243, 90
      %v1544 = vpop.permute.xlu0 %1543
      %1545 = vrot.lane.b32.xlu0 %v1244, 90
      %v1546 = vpop.permute.xlu0 %1545
      %v1547 = vsel %vm1473, %v1540, %v1542
      %v1548 = vsel %vm1473, %v1542, %v1544
      %v1549 = vsel %vm1473, %v1544, %v1546
      %v1554 = vsel %vm306, %v1538, 0
      %1556 = vmatpush.bf16.msra.mxu0 0
      %1557 = vmatpush.bf16.msra.mxu0 0
      %1558 = vmatpush.bf16.msra.mxu0 0
      %1559 = vmatpush.bf16.msra.mxu0 0
      %1560 = vmatpush.bf16.msra.mxu0 0
      %1561 = vmatpush.bf16.msra.mxu0 0
      %1562 = vmatpush.bf16.msra.mxu0 0
      %1563 = vmatpush.bf16.msra.mxu0 %v1547
      %1564 = vmatmul.bf16.gmra.mxu0 %v1554
      %v1565 = vpop.f32.mrf.mxu0
      %v1566 = vadd.f32 0.0, %v1565
      %v1567 = vpop.f32.mrf.mxu0
      %v1568 = vadd.f32 0.0, %v1567
      %1569 = vdwg.mxu0
      %1570 = vmatpush.bf16.msra.mxu0 0
      %1571 = vmatpush.bf16.msra.mxu0 0
      %1572 = vmatpush.bf16.msra.mxu0 0
      %1573 = vmatpush.bf16.msra.mxu0 0
      %1574 = vmatpush.bf16.msra.mxu0 0
      %1575 = vmatpush.bf16.msra.mxu0 0
      %1576 = vmatpush.bf16.msra.mxu0 0
      %1577 = vmatpush.bf16.msra.mxu0 %v1548
      %1578 = vmatmul.bf16.gmra.mxu0 %v1554
      %v1579 = vpop.f32.mrf.mxu0
      %v1580 = vadd.f32 0.0, %v1579
      %v1581 = vpop.f32.mrf.mxu0
      %v1582 = vadd.f32 0.0, %v1581
      %1583 = vdwg.mxu0
      %1584 = vmatpush.bf16.msra.mxu0 0
      %1585 = vmatpush.bf16.msra.mxu0 0
      %1586 = vmatpush.bf16.msra.mxu0 0
      %1587 = vmatpush.bf16.msra.mxu0 0
      %1588 = vmatpush.bf16.msra.mxu0 0
      %1589 = vmatpush.bf16.msra.mxu0 0
      %1590 = vmatpush.bf16.msra.mxu0 0
      %1591 = vmatpush.bf16.msra.mxu0 %v1549
      %1592 = vmatmul.bf16.gmra.mxu0 %v1554
      %v1593 = vpop.f32.mrf.mxu0
      %v1594 = vadd.f32 0.0, %v1593
      %v1595 = vpop.f32.mrf.mxu0
      %v1596 = vadd.f32 0.0, %v1595
      %1597 = vdwg.mxu0
      %v1598 = vadd.f32 %v1525, %v1566
      %v1599 = vadd.f32 %v1526, %v1580
      %v1600 = vadd.f32 %v1527, %v1594
      %v1601 = vadd.f32 %v1528, %v1568
      %v1602 = vadd.f32 %v1529, %v1582
      %v1603 = vadd.f32 %v1530, %v1596
      %v1604 = vld [vmem:[%s4] sm:$0xff]
      %v1605 = vld [vmem:[%s4 + $0x8] sm:$0xff]
      %1607 = vset.pattern.permute.xlu0 0
      %1608 = vperm.xlu0 %1607, %v1604
      %v1609 = vpop.permute.xlu0 %1608
      %1612 = vset.pattern.permute.xlu0 0
      %1613 = vperm.xlu0 %1612, %v1605
      %v1614 = vpop.permute.xlu0 %1613
      %v1616 = vadd.f32 %v1598, %v1609
      %v1617 = vadd.f32 %v1599, %v1609
      %v1618 = vadd.f32 %v1600, %v1609
      %v1619 = vadd.f32 %v1601, %v1614
      %v1620 = vadd.f32 %v1602, %v1614
      %v1621 = vadd.f32 %v1603, %v1614
      %v1622 = vmax.f32 %v1616, 0.0
      %v1623 = vmax.f32 %v1617, 0.0
      %v1624 = vmax.f32 %v1618, 0.0
      %v1625 = vmax.f32 %v1619, 0.0
      %v1626 = vmax.f32 %v1620, 0.0
      %v1627 = vmax.f32 %v1621, 0.0
      %v1628 = vld [vmem:[%s5] sm:$0x7]
      %v1630 = vperm.slane %v1628, 0
      %v1631 = vperm.slane %v1628, 1
      %v1632 = vperm.slane %v1628, 2
      %v1636 = vmul.f32 %v1622, %v1630
      %v1637 = vmul.f32 %v1623, %v1631
      %v1638 = vmul.f32 %v1624, %v1632
      %v1639 = vmul.f32 %v1625, %v1630
      %v1640 = vmul.f32 %v1626, %v1631
      %v1641 = vmul.f32 %v1627, %v1632
      %v1642 = vpack.c.bf16 %v1637, %v1636
      %v1643 = vpack.c.bf16 %v1638, %v1638
      %v1644 = vpack.c.bf16 %v1640, %v1639
      %v1645 = vpack.c.bf16 %v1641, %v1641
      %1646 = vst [vmem:[%s271] sm:$0xff] %v1642
      %vm1647 = vcmask 863232
      %1648 = vst.msk [vmem:[%s271 + $0x8] sm:$0xf] %vm1647, %v1643
      %1649 = vst [vmem:[%s271 + $0xc] sm:$0xff] %v1644
      %1650 = vst.msk [vmem:[%s271 + $0x14] sm:$0xf] %vm1647, %v1645
      %p1651 = scmp.lt.s32.totalorder %s17, 1
      %s1652 = scalar_select %p1651, %s17, 1
      %s1653 = smul.addr %s1652, 6
      %s1654 = smul.addr %s1653, 4
      %s1655 = scalar_lea.vmem %s6, %s1654
      // Predicated region
      $region45: #{up_block_forward.4} parent=43 // pred_check
        %p1656 = pneg %p171
      $region46: #{up_block_forward.4} parent=43 // pred_check_branch
        %1658 = sbr.rel (%p1656) target = $region48
      $region47: #{up_block_forward.4} parent=43 // pred_region
        _
      $region48: #{up_block_forward.4} parent=43 // pred_fallthru
        _
    $region44: #{up_block_forward.4} parent=5 // pred_fallthru
      _
    %p1659 = scmp.le.s32.totalorder 2, %s12
    // Predicated region
    $region49: #{up_block_forward.4} parent=5 // pred_check
      %p1660 = pneg %p1659
    $region50: #{up_block_forward.4} parent=5 // pred_check_branch
      %1662 = sbr.rel (%p1660) target = $region52
    $region51: #{up_block_forward.4} parent=5 // pred_region
      %s1663 = ssub.s32 %s12, 2
      // Predicated region
      $region53: #{up_block_forward.4} parent=51 // pred_check
        %p1664 = pneg %p177
      $region54: #{up_block_forward.4} parent=51 // pred_check_branch
        %1666 = sbr.rel (%p1664) target = $region56
      $region55: #{up_block_forward.4} parent=51 // pred_region
        %p1667 = scmp.lt.s32.totalorder %s18, 1
        %s1668 = scalar_select %p1667, %s18, 1
        %s1669 = smul.addr %s1668, 6
        %s1670 = smul.addr %s1669, 4
        %s1671 = scalar_lea.vmem %s6, %s1670
      $region56: #{up_block_forward.4} parent=51 // pred_fallthru
        _
    $region52: #{up_block_forward.4} parent=5 // pred_fallthru
      _
  $region6: #{up_block_forward.4} parent=0 // loop_footer
    %s16 = sadd.s32 1, %s12
  $region7: #{up_block_forward.4} parent=0 // loop_footer_branch
    %11 = sbr.rel target = $region3
  $region8: #{up_block_forward.4} parent=0 // loop_exit
    _

</llo_original>
